<compile_context>
chip_gen: v6e
topology: v6e:2x2x1
jax: 0.10.0
libtpu: 0.0.40
codegen_flags: <defaults>
</compile_context>

<pallas_src>
import math

import jax
import jax.numpy as jnp
from jax.experimental import pallas as pl
from jax.experimental.pallas import tpu as pltpu


# --------------------------------------------------------------------------- #
# Kernel helpers
# --------------------------------------------------------------------------- #
def _layer_norm(h, gamma, beta, eps=1e-5):
    mean = jnp.mean(h, axis=-1, keepdims=True)
    var = jnp.mean(jnp.square(h - mean), axis=-1, keepdims=True)
    return (h - mean) * jax.lax.rsqrt(var + eps) * gamma + beta


def _sinusoidal_pe(length, dim):
    # TODO(synk): matches sin|cos concatenation; verify against the exact fairseq2 layout.
    num_sin = dim // 2
    pos = jnp.arange(length, dtype=jnp.float32)[:, None]
    inv = jnp.exp(-math.log(10000.0) * jnp.arange(num_sin, dtype=jnp.float32) / num_sin)
    ang = pos * inv[None, :]
    return jnp.concatenate([jnp.sin(ang), jnp.cos(ang)], axis=-1)


# --------------------------------------------------------------------------- #
# Fused kernel: 3x VariancePredictor + pitch/energy embeds + HardUpsampling + PE
# --------------------------------------------------------------------------- #
def _make_fused_kernel(B, T, T_out, K, duration_factor, min_duration):
    BT = B * T
    pad = (K - 1) // 2          # NOTE: reproduces PyTorch 'same' conv only for odd K

    def kernel(x_ref, film_ref, pe_ref, w1_ref, w2_ref, vecs_ref, pew_ref,
               tap_ref, rrep_ref, cum_ref, dj_ref, scal_ref,
               out_ref, dur_ref):
        x0 = x_ref[...]                                         # (BT, D)
        rrep = rrep_ref[...]                                    # (BT, B) batch one-hot

        def shift_concat(xf):
            # Column block k holds xf at time (t + k - pad); tap_ref[k] already folds
            # the padding mask and the out-of-range zeros, so no padded scratch and no
            # sublane-offset stores are needed.  Roll runs on the XLU slot.
            cols = []
            for k in range(K):
                s = k - pad
                y = xf if s == 0 else pltpu.roll(xf, (-s) % BT, 0)
                cols.append(y * tap_ref[k])                     # (BT, 1) mask broadcast
            return jnp.concatenate(cols, axis=1)                # (BT, K*C)

        def predictor(x, p):
            v = vecs_ref[p]                                     # (7, H): b1 g1 be1 b2 g2 be2 wp
            # conv1 ('same') as ONE matmul of contraction depth K*Din, then ReLU + LN
            h = jnp.dot(shift_concat(x), w1_ref[p],
                        preferred_element_type=jnp.float32) + v[0:1]
            h = _layer_norm(jnp.maximum(h, 0.0), v[1:2], v[2:3])
            # conv2 ('same') as ONE matmul of contraction depth K*H, then ReLU + LN
            h = jnp.dot(shift_concat(h), w2_ref[p],
                        preferred_element_type=jnp.float32) + v[3:4]
            h = _layer_norm(jnp.maximum(h, 0.0), v[4:5], v[5:6])
            # FiLM (gamma/beta precomputed per batch in the wrapper, repeated to rows)
            gamma = jnp.dot(rrep, film_ref[p, 0], preferred_element_type=jnp.float32)
            beta = jnp.dot(rrep, film_ref[p, 1], preferred_element_type=jnp.float32)
            h = h * gamma + beta
            # projection to one scalar per frame; stays in VMEM (never hits HBM)
            return jnp.sum(h * v[6:7], axis=-1, keepdims=True) + scal_ref[1 + p]

        # ---- duration / pitch / energy predictors + scalar embeds ---------------
        log_dur = predictor(x0, 0)                              # (BT, 1)
        pitch = predictor(x0, 1)
        pew = pew_ref[...]                                      # (4, D)
        x1 = x0 + pitch * pew[0:1] + pew[1:2]                   # += embed_pitch(pitch)
        energy = predictor(x1, 2)
        x2 = x1 + energy * pew[2:3] + pew[3:4]                  # += embed_energy(energy)

        # ---- durations (round, clamp, zero at padding) ---------------------------
        d = (jnp.exp(log_dur) - 1.0) * duration_factor
        d = jnp.maximum(d, float(max(min_duration, 0)))
        d = (d + 0.5).astype(jnp.int32).astype(jnp.float32)     # round (half-up; torch rounds half-even)
        d = d * tap_ref[pad]                                    # center tap == padding mask
        dur_ref[...] = d.astype(jnp.int32)

        # ---- HardUpsampling: cumulative durations -> 0/1 gather matmul -----------
        ones_out = jnp.ones((B * T_out, BT), jnp.float32)
        cum = jnp.dot(ones_out, d * cum_ref[0], preferred_element_type=jnp.float32)
        cumex = jnp.dot(ones_out, d * cum_ref[1], preferred_element_type=jnp.float32)
        dj = dj_ref[...]                                        # j if same batch else -1
        gather = jnp.logical_and(dj >= cumex, dj < cum).astype(jnp.float32)
        ups = jnp.dot(gather, x2, preferred_element_type=jnp.float32)   # (B*T_out, D)

        # ---- positional encoding blend: seqs + alpha * PE -------------------------
        out_ref[...] = ups + scal_ref[0] * pe_ref[...]

    return kernel


# --------------------------------------------------------------------------- #
# Wrapper: parameter packing, constant index helpers, single pallas_call
# --------------------------------------------------------------------------- #
def pretssel_decoder_frontend(seqs, seq_lens, film_cond_emb, params,
                              duration_factor=1.0, min_duration=0,
                              max_out_len=64):
    B, T, D = seqs.shape
    preds = (params["dur"], params["pitch"], params["energy"])
    K, Din, H = preds[0]["w1"].shape
    assert Din == D and K % 2 == 1
    BT = B * T
    T_out = max_out_len
    pad = (K - 1) // 2
    f32 = jnp.float32

    x_flat = seqs.reshape(BT, D).astype(f32)

    # ---- FiLM gamma/beta for all predictors: one (B,Cd)x(Cd,6H) matmul -----------
    w_film = jnp.concatenate(
        [jnp.concatenate([p["wfg"], p["wfb"]], axis=1) for p in preds], axis=1)   # (Cd, 6H)
    b_film = jnp.concatenate(
        [jnp.concatenate([p["bfg"], p["bfb"]], axis=1) for p in preds], axis=1)   # (1, 6H)
    film = (film_cond_emb.astype(f32) @ w_film + b_film).reshape(B, 3, 2, H)
    film = jnp.transpose(film, (1, 2, 0, 3))                                      # (3, 2, B, H)

    # ---- packed parameters --------------------------------------------------------
    w1_all = jnp.stack([p["w1"].reshape(K * D, H) for p in preds])                # (3, K*D, H)
    w2_all = jnp.stack([p["w2"].reshape(K * H, H) for p in preds])                # (3, K*H, H)
    vecs_all = jnp.stack([
        jnp.concatenate([p["b1"], p["g1"], p["be1"], p["b2"], p["g2"], p["be2"],
                         p["wp"].reshape(1, H)], axis=0) for p in preds])          # (3, 7, H)
    pew = jnp.concatenate([params["embed_pitch_w"], params["embed_pitch_b"],
                           params["embed_energy_w"], params["embed_energy_b"]],
                          axis=0).astype(f32)                                      # (4, D)
    scal = jnp.concatenate([params["pos_emb_alpha"].reshape(1)] +
                           [p["bp"].reshape(1) for p in preds]).astype(f32)        # (4,) SMEM

    # ---- constant (shape-only) index helpers; folded by XLA under jit ------------
    t_idx = jnp.arange(T)
    src = t_idx[None, None, :] + (jnp.arange(K) - pad)[None, :, None]              # (1, K, T)
    tapmask = ((src >= 0) & (src < seq_lens[:, None, None])).astype(f32)           # (B, K, T)
    tapmask = jnp.transpose(tapmask, (1, 0, 2)).reshape(K, BT, 1)

    rrep = jnp.repeat(jnp.eye(B, dtype=f32), T, axis=0)                            # (BT, B)

    r = jnp.arange(BT)
    same_src = (r[:, None] // T) == (r[None, :] // T)
    cummask = jnp.stack([
        same_src & ((r[:, None] % T) <= (r[None, :] % T)),                         # inclusive
        same_src & ((r[:, None] % T) < (r[None, :] % T)),                          # exclusive
    ]).astype(f32)                                                                 # (2, BT, BT)

    ro = jnp.arange(B * T_out)
    same_out = (ro[:, None] // T_out) == (r[None, :] // T)
    djmat = jnp.where(same_out, (ro % T_out)[:, None].astype(f32), -1.0)           # (B*T_out, BT)

    pe = jnp.tile(_sinusoidal_pe(T_out, D), (B, 1))                                # (B*T_out, D)

    kernel = _make_fused_kernel(B, T, T_out, K, duration_factor, min_duration)
    vmem = pl.BlockSpec(memory_space=pltpu.MemorySpace.VMEM)
    smem = pl.BlockSpec(memory_space=pltpu.MemorySpace.SMEM)

    out_flat, dur_flat = pl.pallas_call(
        kernel,
        out_shape=(jax.ShapeDtypeStruct((B * T_out, D), f32),
                   jax.ShapeDtypeStruct((BT, 1), jnp.int32)),
        in_specs=[vmem, vmem, vmem, vmem, vmem, vmem, vmem, vmem, vmem, vmem, vmem, smem],
        out_specs=(vmem, vmem),
    )(x_flat, film, pe, w1_all, w2_all, vecs_all, pew,
      tapmask, rrep, cummask, djmat, scal)

    durations = dur_flat.reshape(B, T)
    # Clamp reported lengths to the static cap so (out, out_lens) stay self-consistent.
    out_lens = jnp.minimum(durations.sum(axis=-1), T_out)
    return out_flat.reshape(B, T_out, D), out_lens


# --------------------------------------------------------------------------- #
# Deterministic synthetic parameters
# --------------------------------------------------------------------------- #
def init_vp_params(key, din, hidden, k, cond_dim, proj_bias=0.0):
    ks = jax.random.split(key, 5)
    s = 0.1
    return {
        "w1": jax.random.normal(ks[0], (k, din, hidden), jnp.float32) * s,
        "b1": jnp.zeros((1, hidden), jnp.float32),
        "g1": jnp.ones((1, hidden), jnp.float32),
        "be1": jnp.zeros((1, hidden), jnp.float32),
        "w2": jax.random.normal(ks[1], (k, hidden, hidden), jnp.float32) * s,
        "b2": jnp.zeros((1, hidden), jnp.float32),
        "g2": jnp.ones((1, hidden), jnp.float32),
        "be2": jnp.zeros((1, hidden), jnp.float32),
        "wfg": jax.random.normal(ks[2], (cond_dim, hidden), jnp.float32) * s,
        "bfg": jnp.ones((1, hidden), jnp.float32),
        "wfb": jax.random.normal(ks[3], (cond_dim, hidden), jnp.float32) * s,
        "bfb": jnp.zeros((1, hidden), jnp.float32),
        "wp": jax.random.normal(ks[4], (hidden, 1), jnp.float32) * s,
        "bp": jnp.full((1, 1), proj_bias, jnp.float32),
    }


if __name__ == "__main__":
    B, T, D = 2, 8, 32          # batch, source frames, model dim
    H, K, Cd = 32, 3, 32        # var-pred hidden, conv kernel size, FiLM cond dim
    T_OUT_MAX = 64              # static cap on upsampled length

    key = jax.random.PRNGKey(0)
    k_seq, k_cond, k_dur, k_pitch, k_energy, k_ep, k_ee = jax.random.split(key, 7)

    seqs = jax.random.normal(k_seq, (B, T, D), jnp.float32)
    seq_lens = jnp.array([8, 6], jnp.int32)
    film_cond = jax.random.normal(k_cond, (B, Cd), jnp.float32)

    params = {
        "dur": init_vp_params(k_dur, D, H, K, Cd, proj_bias=1.0),
        "pitch": init_vp_params(k_pitch, D, H, K, Cd),
        "energy": init_vp_params(k_energy, D, H, K, Cd),
        "embed_pitch_w": jax.random.normal(k_ep, (1, D), jnp.float32) * 0.1,
        "embed_pitch_b": jnp.zeros((1, D), jnp.float32),
        "embed_energy_w": jax.random.normal(k_ee, (1, D), jnp.float32) * 0.1,
        "embed_energy_b": jnp.zeros((1, D), jnp.float32),
        "pos_emb_alpha": jnp.ones((1,), jnp.float32),
    }

    fwd = jax.jit(pretssel_decoder_frontend,
                  static_argnames=("duration_factor", "min_duration", "max_out_len"))
    out, out_lens = fwd(seqs, seq_lens, film_cond, params,
                        duration_factor=1.0, min_duration=0, max_out_len=T_OUT_MAX)

    jax.block_until_ready(out)
    jax.block_until_ready(out_lens)
    assert out.shape == (B, T_OUT_MAX, D)
    assert out_lens.shape == (B,)
    print("KERNEL_OK")
</pallas_src>

<mosaic_0001>
module attributes {stable_mosaic.version = 11 : i64} {
  func.func @kernel(%arg0: memref<16x32xf32, #tpu.memory_space<vmem>>, %arg1: memref<3x2x2x32xf32, #tpu.memory_space<vmem>>, %arg2: memref<128x32xf32, #tpu.memory_space<vmem>>, %arg3: memref<3x96x32xf32, #tpu.memory_space<vmem>>, %arg4: memref<3x96x32xf32, #tpu.memory_space<vmem>>, %arg5: memref<3x7x32xf32, #tpu.memory_space<vmem>>, %arg6: memref<4x32xf32, #tpu.memory_space<vmem>>, %arg7: memref<3x16x1xf32, #tpu.memory_space<vmem>>, %arg8: memref<16x2xf32, #tpu.memory_space<vmem>>, %arg9: memref<2x16x16xf32, #tpu.memory_space<vmem>>, %arg10: memref<128x16xf32, #tpu.memory_space<vmem>>, %arg11: memref<4xf32, #tpu.memory_space<smem>>, %arg12: memref<128x32xf32, #tpu.memory_space<vmem>>, %arg13: memref<16x1xi32, #tpu.memory_space<vmem>>) attributes {dimension_semantics = [], scalar_prefetch = 0 : i64, scratch_operands = 0 : i64, tpu.core_type = #tpu.core_type<tc>} {
    %c0 = arith.constant 0 : index
    %c0_0 = arith.constant 0 : index
    %0 = vector.load %arg0[%c0, %c0_0] : memref<16x32xf32, #tpu.memory_space<vmem>>, vector<16x32xf32>
    %c0_1 = arith.constant 0 : index
    %c0_2 = arith.constant 0 : index
    %1 = vector.load %arg8[%c0_1, %c0_2] : memref<16x2xf32, #tpu.memory_space<vmem>>, vector<16x2xf32>
    %c0_3 = arith.constant 0 : index
    %c0_4 = arith.constant 0 : index
    %c0_5 = arith.constant 0 : index
    %2 = vector.load %arg5[%c0_3, %c0_4, %c0_5] : memref<3x7x32xf32, #tpu.memory_space<vmem>>, vector<1x7x32xf32>
    %3 = vector.shape_cast %2 : vector<1x7x32xf32> to vector<7x32xf32>
    %c1_i32 = arith.constant 1 : i32
    %4 = tpu.dynamic_rotate %0 by %c1_i32 dim 0 : vector<16x32xf32>, i32 -> vector<16x32xf32>
    %c0_6 = arith.constant 0 : index
    %c0_7 = arith.constant 0 : index
    %c0_8 = arith.constant 0 : index
    %5 = vector.load %arg7[%c0_6, %c0_7, %c0_8] : memref<3x16x1xf32, #tpu.memory_space<vmem>>, vector<1x16x1xf32>
    %6 = vector.shape_cast %5 : vector<1x16x1xf32> to vector<16x1xf32>
    %7 = vector.broadcast %6 : vector<16x1xf32> to vector<16x32xf32>
    %8 = arith.mulf %4, %7 : vector<16x32xf32>
    %c1 = arith.constant 1 : index
    %c0_9 = arith.constant 0 : index
    %c0_10 = arith.constant 0 : index
    %9 = vector.load %arg7[%c1, %c0_9, %c0_10] : memref<3x16x1xf32, #tpu.memory_space<vmem>>, vector<1x16x1xf32>
    %10 = vector.shape_cast %9 : vector<1x16x1xf32> to vector<16x1xf32>
    %11 = vector.broadcast %10 : vector<16x1xf32> to vector<16x32xf32>
    %12 = arith.mulf %0, %11 : vector<16x32xf32>
    %c15_i32 = arith.constant 15 : i32
    %13 = tpu.dynamic_rotate %0 by %c15_i32 dim 0 : vector<16x32xf32>, i32 -> vector<16x32xf32>
    %c2 = arith.constant 2 : index
    %c0_11 = arith.constant 0 : index
    %c0_12 = arith.constant 0 : index
    %14 = vector.load %arg7[%c2, %c0_11, %c0_12] : memref<3x16x1xf32, #tpu.memory_space<vmem>>, vector<1x16x1xf32>
    %15 = vector.shape_cast %14 : vector<1x16x1xf32> to vector<16x1xf32>
    %16 = vector.broadcast %15 : vector<16x1xf32> to vector<16x32xf32>
    %17 = arith.mulf %13, %16 : vector<16x32xf32>
    %18 = tpu.concatenate %8, %12, %17 in 1 : vector<16x32xf32>, vector<16x32xf32>, vector<16x32xf32> -> vector<16x96xf32>
    %c0_13 = arith.constant 0 : index
    %c0_14 = arith.constant 0 : index
    %c0_15 = arith.constant 0 : index
    %19 = vector.load %arg3[%c0_13, %c0_14, %c0_15] : memref<3x96x32xf32, #tpu.memory_space<vmem>>, vector<1x96x32xf32>
    %20 = vector.shape_cast %19 : vector<1x96x32xf32> to vector<96x32xf32>
    %cst = arith.constant dense<0.000000e+00> : vector<16x32xf32>
    %21 = tpu.matmul %18, %20, %cst {dimension_numbers = #tpu.dot_dimension_numbers<[1], [0], [0], [1], [0, 0, 1, 1], [], []>} : vector<16x96xf32>, vector<96x32xf32>, vector<16x32xf32> -> vector<16x32xf32>
    %22 = vector.extract_strided_slice %3 {offsets = [0, 0], sizes = [1, 32], strides = [1, 1]} : vector<7x32xf32> to vector<1x32xf32>
    %23 = vector.broadcast %22 : vector<1x32xf32> to vector<16x32xf32>
    %24 = arith.addf %21, %23 : vector<16x32xf32>
    %cst_16 = arith.constant 0.000000e+00 : f32
    %25 = vector.broadcast %cst_16 : f32 to vector<16x32xf32>
    %26 = arith.maximumf %24, %25 : vector<16x32xf32>
    %27 = vector.extract_strided_slice %3 {offsets = [1, 0], sizes = [1, 32], strides = [1, 1]} : vector<7x32xf32> to vector<1x32xf32>
    %28 = vector.extract_strided_slice %3 {offsets = [2, 0], sizes = [1, 32], strides = [1, 1]} : vector<7x32xf32> to vector<1x32xf32>
    %cst_17 = arith.constant dense<0.000000e+00> : vector<16xf32>
    %29 = vector.multi_reduction <add>, %26, %cst_17 [1] : vector<16x32xf32> to vector<16xf32>
    %30 = vector.shape_cast %29 : vector<16xf32> to vector<16x1xf32>
    %cst_18 = arith.constant 3.200000e+01 : f32
    %31 = vector.broadcast %cst_18 : f32 to vector<16x1xf32>
    %32 = arith.divf %30, %31 : vector<16x1xf32>
    %33 = vector.broadcast %32 : vector<16x1xf32> to vector<16x32xf32>
    %34 = arith.subf %26, %33 : vector<16x32xf32>
    %35 = arith.mulf %34, %34 : vector<16x32xf32>
    %cst_19 = arith.constant dense<0.000000e+00> : vector<16xf32>
    %36 = vector.multi_reduction <add>, %35, %cst_19 [1] : vector<16x32xf32> to vector<16xf32>
    %37 = vector.shape_cast %36 : vector<16xf32> to vector<16x1xf32>
    %cst_20 = arith.constant 3.200000e+01 : f32
    %38 = vector.broadcast %cst_20 : f32 to vector<16x1xf32>
    %39 = arith.divf %37, %38 : vector<16x1xf32>
    %40 = vector.broadcast %32 : vector<16x1xf32> to vector<16x32xf32>
    %41 = arith.subf %26, %40 : vector<16x32xf32>
    %cst_21 = arith.constant 9.99999974E-6 : f32
    %42 = vector.broadcast %cst_21 : f32 to vector<16x1xf32>
    %43 = arith.addf %39, %42 : vector<16x1xf32>
    %44 = math.rsqrt %43 : vector<16x1xf32>
    %45 = vector.broadcast %44 : vector<16x1xf32> to vector<16x32xf32>
    %46 = arith.mulf %41, %45 : vector<16x32xf32>
    %47 = vector.broadcast %27 : vector<1x32xf32> to vector<16x32xf32>
    %48 = arith.mulf %46, %47 : vector<16x32xf32>
    %49 = vector.broadcast %28 : vector<1x32xf32> to vector<16x32xf32>
    %50 = arith.addf %48, %49 : vector<16x32xf32>
    %c1_i32_22 = arith.constant 1 : i32
    %51 = tpu.dynamic_rotate %50 by %c1_i32_22 dim 0 : vector<16x32xf32>, i32 -> vector<16x32xf32>
    %c0_23 = arith.constant 0 : index
    %c0_24 = arith.constant 0 : index
    %c0_25 = arith.constant 0 : index
    %52 = vector.load %arg7[%c0_23, %c0_24, %c0_25] : memref<3x16x1xf32, #tpu.memory_space<vmem>>, vector<1x16x1xf32>
    %53 = vector.shape_cast %52 : vector<1x16x1xf32> to vector<16x1xf32>
    %54 = vector.broadcast %53 : vector<16x1xf32> to vector<16x32xf32>
    %55 = arith.mulf %51, %54 : vector<16x32xf32>
    %c1_26 = arith.constant 1 : index
    %c0_27 = arith.constant 0 : index
    %c0_28 = arith.constant 0 : index
    %56 = vector.load %arg7[%c1_26, %c0_27, %c0_28] : memref<3x16x1xf32, #tpu.memory_space<vmem>>, vector<1x16x1xf32>
    %57 = vector.shape_cast %56 : vector<1x16x1xf32> to vector<16x1xf32>
    %58 = vector.broadcast %57 : vector<16x1xf32> to vector<16x32xf32>
    %59 = arith.mulf %50, %58 : vector<16x32xf32>
    %c15_i32_29 = arith.constant 15 : i32
    %60 = tpu.dynamic_rotate %50 by %c15_i32_29 dim 0 : vector<16x32xf32>, i32 -> vector<16x32xf32>
    %c2_30 = arith.constant 2 : index
    %c0_31 = arith.constant 0 : index
    %c0_32 = arith.constant 0 : index
    %61 = vector.load %arg7[%c2_30, %c0_31, %c0_32] : memref<3x16x1xf32, #tpu.memory_space<vmem>>, vector<1x16x1xf32>
    %62 = vector.shape_cast %61 : vector<1x16x1xf32> to vector<16x1xf32>
    %63 = vector.broadcast %62 : vector<16x1xf32> to vector<16x32xf32>
    %64 = arith.mulf %60, %63 : vector<16x32xf32>
    %65 = tpu.concatenate %55, %59, %64 in 1 : vector<16x32xf32>, vector<16x32xf32>, vector<16x32xf32> -> vector<16x96xf32>
    %c0_33 = arith.constant 0 : index
    %c0_34 = arith.constant 0 : index
    %c0_35 = arith.constant 0 : index
    %66 = vector.load %arg4[%c0_33, %c0_34, %c0_35] : memref<3x96x32xf32, #tpu.memory_space<vmem>>, vector<1x96x32xf32>
    %67 = vector.shape_cast %66 : vector<1x96x32xf32> to vector<96x32xf32>
    %cst_36 = arith.constant dense<0.000000e+00> : vector<16x32xf32>
    %68 = tpu.matmul %65, %67, %cst_36 {dimension_numbers = #tpu.dot_dimension_numbers<[1], [0], [0], [1], [0, 0, 1, 1], [], []>} : vector<16x96xf32>, vector<96x32xf32>, vector<16x32xf32> -> vector<16x32xf32>
    %69 = vector.extract_strided_slice %3 {offsets = [3, 0], sizes = [1, 32], strides = [1, 1]} : vector<7x32xf32> to vector<1x32xf32>
    %70 = vector.broadcast %69 : vector<1x32xf32> to vector<16x32xf32>
    %71 = arith.addf %68, %70 : vector<16x32xf32>
    %cst_37 = arith.constant 0.000000e+00 : f32
    %72 = vector.broadcast %cst_37 : f32 to vector<16x32xf32>
    %73 = arith.maximumf %71, %72 : vector<16x32xf32>
    %74 = vector.extract_strided_slice %3 {offsets = [4, 0], sizes = [1, 32], strides = [1, 1]} : vector<7x32xf32> to vector<1x32xf32>
    %75 = vector.extract_strided_slice %3 {offsets = [5, 0], sizes = [1, 32], strides = [1, 1]} : vector<7x32xf32> to vector<1x32xf32>
    %cst_38 = arith.constant dense<0.000000e+00> : vector<16xf32>
    %76 = vector.multi_reduction <add>, %73, %cst_38 [1] : vector<16x32xf32> to vector<16xf32>
    %77 = vector.shape_cast %76 : vector<16xf32> to vector<16x1xf32>
    %cst_39 = arith.constant 3.200000e+01 : f32
    %78 = vector.broadcast %cst_39 : f32 to vector<16x1xf32>
    %79 = arith.divf %77, %78 : vector<16x1xf32>
    %80 = vector.broadcast %79 : vector<16x1xf32> to vector<16x32xf32>
    %81 = arith.subf %73, %80 : vector<16x32xf32>
    %82 = arith.mulf %81, %81 : vector<16x32xf32>
    %cst_40 = arith.constant dense<0.000000e+00> : vector<16xf32>
    %83 = vector.multi_reduction <add>, %82, %cst_40 [1] : vector<16x32xf32> to vector<16xf32>
    %84 = vector.shape_cast %83 : vector<16xf32> to vector<16x1xf32>
    %cst_41 = arith.constant 3.200000e+01 : f32
    %85 = vector.broadcast %cst_41 : f32 to vector<16x1xf32>
    %86 = arith.divf %84, %85 : vector<16x1xf32>
    %87 = vector.broadcast %79 : vector<16x1xf32> to vector<16x32xf32>
    %88 = arith.subf %73, %87 : vector<16x32xf32>
    %cst_42 = arith.constant 9.99999974E-6 : f32
    %89 = vector.broadcast %cst_42 : f32 to vector<16x1xf32>
    %90 = arith.addf %86, %89 : vector<16x1xf32>
    %91 = math.rsqrt %90 : vector<16x1xf32>
    %92 = vector.broadcast %91 : vector<16x1xf32> to vector<16x32xf32>
    %93 = arith.mulf %88, %92 : vector<16x32xf32>
    %94 = vector.broadcast %74 : vector<1x32xf32> to vector<16x32xf32>
    %95 = arith.mulf %93, %94 : vector<16x32xf32>
    %96 = vector.broadcast %75 : vector<1x32xf32> to vector<16x32xf32>
    %97 = arith.addf %95, %96 : vector<16x32xf32>
    %c0_43 = arith.constant 0 : index
    %c0_44 = arith.constant 0 : index
    %c0_45 = arith.constant 0 : index
    %c0_46 = arith.constant 0 : index
    %98 = vector.load %arg1[%c0_43, %c0_44, %c0_45, %c0_46] : memref<3x2x2x32xf32, #tpu.memory_space<vmem>>, vector<1x1x2x32xf32>
    %99 = vector.shape_cast %98 : vector<1x1x2x32xf32> to vector<2x32xf32>
    %cst_47 = arith.constant dense<0.000000e+00> : vector<16x32xf32>
    %100 = tpu.matmul %1, %99, %cst_47 {dimension_numbers = #tpu.dot_dimension_numbers<[1], [0], [0], [1], [0, 0, 1, 1], [], []>} : vector<16x2xf32>, vector<2x32xf32>, vector<16x32xf32> -> vector<16x32xf32>
    %c0_48 = arith.constant 0 : index
    %c1_49 = arith.constant 1 : index
    %c0_50 = arith.constant 0 : index
    %c0_51 = arith.constant 0 : index
    %101 = vector.load %arg1[%c0_48, %c1_49, %c0_50, %c0_51] : memref<3x2x2x32xf32, #tpu.memory_space<vmem>>, vector<1x1x2x32xf32>
    %102 = vector.shape_cast %101 : vector<1x1x2x32xf32> to vector<2x32xf32>
    %cst_52 = arith.constant dense<0.000000e+00> : vector<16x32xf32>
    %103 = tpu.matmul %1, %102, %cst_52 {dimension_numbers = #tpu.dot_dimension_numbers<[1], [0], [0], [1], [0, 0, 1, 1], [], []>} : vector<16x2xf32>, vector<2x32xf32>, vector<16x32xf32> -> vector<16x32xf32>
    %104 = arith.mulf %97, %100 : vector<16x32xf32>
    %105 = arith.addf %104, %103 : vector<16x32xf32>
    %106 = vector.extract_strided_slice %3 {offsets = [6, 0], sizes = [1, 32], strides = [1, 1]} : vector<7x32xf32> to vector<1x32xf32>
    %107 = vector.broadcast %106 : vector<1x32xf32> to vector<16x32xf32>
    %108 = arith.mulf %105, %107 : vector<16x32xf32>
    %cst_53 = arith.constant dense<0.000000e+00> : vector<16xf32>
    %109 = vector.multi_reduction <add>, %108, %cst_53 [1] : vector<16x32xf32> to vector<16xf32>
    %110 = vector.shape_cast %109 : vector<16xf32> to vector<16x1xf32>
    %c1_54 = arith.constant 1 : index
    %111 = memref.load %arg11[%c1_54] : memref<4xf32, #tpu.memory_space<smem>>
    %112 = vector.broadcast %111 : f32 to vector<16x1xf32>
    %113 = arith.addf %110, %112 : vector<16x1xf32>
    %c1_55 = arith.constant 1 : index
    %c0_56 = arith.constant 0 : index
    %c0_57 = arith.constant 0 : index
    %114 = vector.load %arg5[%c1_55, %c0_56, %c0_57] : memref<3x7x32xf32, #tpu.memory_space<vmem>>, vector<1x7x32xf32>
    %115 = vector.shape_cast %114 : vector<1x7x32xf32> to vector<7x32xf32>
    %c1_i32_58 = arith.constant 1 : i32
    %116 = tpu.dynamic_rotate %0 by %c1_i32_58 dim 0 : vector<16x32xf32>, i32 -> vector<16x32xf32>
    %c0_59 = arith.constant 0 : index
    %c0_60 = arith.constant 0 : index
    %c0_61 = arith.constant 0 : index
    %117 = vector.load %arg7[%c0_59, %c0_60, %c0_61] : memref<3x16x1xf32, #tpu.memory_space<vmem>>, vector<1x16x1xf32>
    %118 = vector.shape_cast %117 : vector<1x16x1xf32> to vector<16x1xf32>
    %119 = vector.broadcast %118 : vector<16x1xf32> to vector<16x32xf32>
    %120 = arith.mulf %116, %119 : vector<16x32xf32>
    %c1_62 = arith.constant 1 : index
    %c0_63 = arith.constant 0 : index
    %c0_64 = arith.constant 0 : index
    %121 = vector.load %arg7[%c1_62, %c0_63, %c0_64] : memref<3x16x1xf32, #tpu.memory_space<vmem>>, vector<1x16x1xf32>
    %122 = vector.shape_cast %121 : vector<1x16x1xf32> to vector<16x1xf32>
    %123 = vector.broadcast %122 : vector<16x1xf32> to vector<16x32xf32>
    %124 = arith.mulf %0, %123 : vector<16x32xf32>
    %c15_i32_65 = arith.constant 15 : i32
    %125 = tpu.dynamic_rotate %0 by %c15_i32_65 dim 0 : vector<16x32xf32>, i32 -> vector<16x32xf32>
    %c2_66 = arith.constant 2 : index
    %c0_67 = arith.constant 0 : index
    %c0_68 = arith.constant 0 : index
    %126 = vector.load %arg7[%c2_66, %c0_67, %c0_68] : memref<3x16x1xf32, #tpu.memory_space<vmem>>, vector<1x16x1xf32>
    %127 = vector.shape_cast %126 : vector<1x16x1xf32> to vector<16x1xf32>
    %128 = vector.broadcast %127 : vector<16x1xf32> to vector<16x32xf32>
    %129 = arith.mulf %125, %128 : vector<16x32xf32>
    %130 = tpu.concatenate %120, %124, %129 in 1 : vector<16x32xf32>, vector<16x32xf32>, vector<16x32xf32> -> vector<16x96xf32>
    %c1_69 = arith.constant 1 : index
    %c0_70 = arith.constant 0 : index
    %c0_71 = arith.constant 0 : index
    %131 = vector.load %arg3[%c1_69, %c0_70, %c0_71] : memref<3x96x32xf32, #tpu.memory_space<vmem>>, vector<1x96x32xf32>
    %132 = vector.shape_cast %131 : vector<1x96x32xf32> to vector<96x32xf32>
    %cst_72 = arith.constant dense<0.000000e+00> : vector<16x32xf32>
    %133 = tpu.matmul %130, %132, %cst_72 {dimension_numbers = #tpu.dot_dimension_numbers<[1], [0], [0], [1], [0, 0, 1, 1], [], []>} : vector<16x96xf32>, vector<96x32xf32>, vector<16x32xf32> -> vector<16x32xf32>
    %134 = vector.extract_strided_slice %115 {offsets = [0, 0], sizes = [1, 32], strides = [1, 1]} : vector<7x32xf32> to vector<1x32xf32>
    %135 = vector.broadcast %134 : vector<1x32xf32> to vector<16x32xf32>
    %136 = arith.addf %133, %135 : vector<16x32xf32>
    %cst_73 = arith.constant 0.000000e+00 : f32
    %137 = vector.broadcast %cst_73 : f32 to vector<16x32xf32>
    %138 = arith.maximumf %136, %137 : vector<16x32xf32>
    %139 = vector.extract_strided_slice %115 {offsets = [1, 0], sizes = [1, 32], strides = [1, 1]} : vector<7x32xf32> to vector<1x32xf32>
    %140 = vector.extract_strided_slice %115 {offsets = [2, 0], sizes = [1, 32], strides = [1, 1]} : vector<7x32xf32> to vector<1x32xf32>
    %cst_74 = arith.constant dense<0.000000e+00> : vector<16xf32>
    %141 = vector.multi_reduction <add>, %138, %cst_74 [1] : vector<16x32xf32> to vector<16xf32>
    %142 = vector.shape_cast %141 : vector<16xf32> to vector<16x1xf32>
    %cst_75 = arith.constant 3.200000e+01 : f32
    %143 = vector.broadcast %cst_75 : f32 to vector<16x1xf32>
    %144 = arith.divf %142, %143 : vector<16x1xf32>
    %145 = vector.broadcast %144 : vector<16x1xf32> to vector<16x32xf32>
    %146 = arith.subf %138, %145 : vector<16x32xf32>
    %147 = arith.mulf %146, %146 : vector<16x32xf32>
    %cst_76 = arith.constant dense<0.000000e+00> : vector<16xf32>
    %148 = vector.multi_reduction <add>, %147, %cst_76 [1] : vector<16x32xf32> to vector<16xf32>
    %149 = vector.shape_cast %148 : vector<16xf32> to vector<16x1xf32>
    %cst_77 = arith.constant 3.200000e+01 : f32
    %150 = vector.broadcast %cst_77 : f32 to vector<16x1xf32>
    %151 = arith.divf %149, %150 : vector<16x1xf32>
    %152 = vector.broadcast %144 : vector<16x1xf32> to vector<16x32xf32>
    %153 = arith.subf %138, %152 : vector<16x32xf32>
    %cst_78 = arith.constant 9.99999974E-6 : f32
    %154 = vector.broadcast %cst_78 : f32 to vector<16x1xf32>
    %155 = arith.addf %151, %154 : vector<16x1xf32>
    %156 = math.rsqrt %155 : vector<16x1xf32>
    %157 = vector.broadcast %156 : vector<16x1xf32> to vector<16x32xf32>
    %158 = arith.mulf %153, %157 : vector<16x32xf32>
    %159 = vector.broadcast %139 : vector<1x32xf32> to vector<16x32xf32>
    %160 = arith.mulf %158, %159 : vector<16x32xf32>
    %161 = vector.broadcast %140 : vector<1x32xf32> to vector<16x32xf32>
    %162 = arith.addf %160, %161 : vector<16x32xf32>
    %c1_i32_79 = arith.constant 1 : i32
    %163 = tpu.dynamic_rotate %162 by %c1_i32_79 dim 0 : vector<16x32xf32>, i32 -> vector<16x32xf32>
    %c0_80 = arith.constant 0 : index
    %c0_81 = arith.constant 0 : index
    %c0_82 = arith.constant 0 : index
    %164 = vector.load %arg7[%c0_80, %c0_81, %c0_82] : memref<3x16x1xf32, #tpu.memory_space<vmem>>, vector<1x16x1xf32>
    %165 = vector.shape_cast %164 : vector<1x16x1xf32> to vector<16x1xf32>
    %166 = vector.broadcast %165 : vector<16x1xf32> to vector<16x32xf32>
    %167 = arith.mulf %163, %166 : vector<16x32xf32>
    %c1_83 = arith.constant 1 : index
    %c0_84 = arith.constant 0 : index
    %c0_85 = arith.constant 0 : index
    %168 = vector.load %arg7[%c1_83, %c0_84, %c0_85] : memref<3x16x1xf32, #tpu.memory_space<vmem>>, vector<1x16x1xf32>
    %169 = vector.shape_cast %168 : vector<1x16x1xf32> to vector<16x1xf32>
    %170 = vector.broadcast %169 : vector<16x1xf32> to vector<16x32xf32>
    %171 = arith.mulf %162, %170 : vector<16x32xf32>
    %c15_i32_86 = arith.constant 15 : i32
    %172 = tpu.dynamic_rotate %162 by %c15_i32_86 dim 0 : vector<16x32xf32>, i32 -> vector<16x32xf32>
    %c2_87 = arith.constant 2 : index
    %c0_88 = arith.constant 0 : index
    %c0_89 = arith.constant 0 : index
    %173 = vector.load %arg7[%c2_87, %c0_88, %c0_89] : memref<3x16x1xf32, #tpu.memory_space<vmem>>, vector<1x16x1xf32>
    %174 = vector.shape_cast %173 : vector<1x16x1xf32> to vector<16x1xf32>
    %175 = vector.broadcast %174 : vector<16x1xf32> to vector<16x32xf32>
    %176 = arith.mulf %172, %175 : vector<16x32xf32>
    %177 = tpu.concatenate %167, %171, %176 in 1 : vector<16x32xf32>, vector<16x32xf32>, vector<16x32xf32> -> vector<16x96xf32>
    %c1_90 = arith.constant 1 : index
    %c0_91 = arith.constant 0 : index
    %c0_92 = arith.constant 0 : index
    %178 = vector.load %arg4[%c1_90, %c0_91, %c0_92] : memref<3x96x32xf32, #tpu.memory_space<vmem>>, vector<1x96x32xf32>
    %179 = vector.shape_cast %178 : vector<1x96x32xf32> to vector<96x32xf32>
    %cst_93 = arith.constant dense<0.000000e+00> : vector<16x32xf32>
    %180 = tpu.matmul %177, %179, %cst_93 {dimension_numbers = #tpu.dot_dimension_numbers<[1], [0], [0], [1], [0, 0, 1, 1], [], []>} : vector<16x96xf32>, vector<96x32xf32>, vector<16x32xf32> -> vector<16x32xf32>
    %181 = vector.extract_strided_slice %115 {offsets = [3, 0], sizes = [1, 32], strides = [1, 1]} : vector<7x32xf32> to vector<1x32xf32>
    %182 = vector.broadcast %181 : vector<1x32xf32> to vector<16x32xf32>
    %183 = arith.addf %180, %182 : vector<16x32xf32>
    %cst_94 = arith.constant 0.000000e+00 : f32
    %184 = vector.broadcast %cst_94 : f32 to vector<16x32xf32>
    %185 = arith.maximumf %183, %184 : vector<16x32xf32>
    %186 = vector.extract_strided_slice %115 {offsets = [4, 0], sizes = [1, 32], strides = [1, 1]} : vector<7x32xf32> to vector<1x32xf32>
    %187 = vector.extract_strided_slice %115 {offsets = [5, 0], sizes = [1, 32], strides = [1, 1]} : vector<7x32xf32> to vector<1x32xf32>
    %cst_95 = arith.constant dense<0.000000e+00> : vector<16xf32>
    %188 = vector.multi_reduction <add>, %185, %cst_95 [1] : vector<16x32xf32> to vector<16xf32>
    %189 = vector.shape_cast %188 : vector<16xf32> to vector<16x1xf32>
    %cst_96 = arith.constant 3.200000e+01 : f32
    %190 = vector.broadcast %cst_96 : f32 to vector<16x1xf32>
    %191 = arith.divf %189, %190 : vector<16x1xf32>
    %192 = vector.broadcast %191 : vector<16x1xf32> to vector<16x32xf32>
    %193 = arith.subf %185, %192 : vector<16x32xf32>
    %194 = arith.mulf %193, %193 : vector<16x32xf32>
    %cst_97 = arith.constant dense<0.000000e+00> : vector<16xf32>
    %195 = vector.multi_reduction <add>, %194, %cst_97 [1] : vector<16x32xf32> to vector<16xf32>
    %196 = vector.shape_cast %195 : vector<16xf32> to vector<16x1xf32>
    %cst_98 = arith.constant 3.200000e+01 : f32
    %197 = vector.broadcast %cst_98 : f32 to vector<16x1xf32>
    %198 = arith.divf %196, %197 : vector<16x1xf32>
    %199 = vector.broadcast %191 : vector<16x1xf32> to vector<16x32xf32>
    %200 = arith.subf %185, %199 : vector<16x32xf32>
    %cst_99 = arith.constant 9.99999974E-6 : f32
    %201 = vector.broadcast %cst_99 : f32 to vector<16x1xf32>
    %202 = arith.addf %198, %201 : vector<16x1xf32>
    %203 = math.rsqrt %202 : vector<16x1xf32>
    %204 = vector.broadcast %203 : vector<16x1xf32> to vector<16x32xf32>
    %205 = arith.mulf %200, %204 : vector<16x32xf32>
    %206 = vector.broadcast %186 : vector<1x32xf32> to vector<16x32xf32>
    %207 = arith.mulf %205, %206 : vector<16x32xf32>
    %208 = vector.broadcast %187 : vector<1x32xf32> to vector<16x32xf32>
    %209 = arith.addf %207, %208 : vector<16x32xf32>
    %c1_100 = arith.constant 1 : index
    %c0_101 = arith.constant 0 : index
    %c0_102 = arith.constant 0 : index
    %c0_103 = arith.constant 0 : index
    %210 = vector.load %arg1[%c1_100, %c0_101, %c0_102, %c0_103] : memref<3x2x2x32xf32, #tpu.memory_space<vmem>>, vector<1x1x2x32xf32>
    %211 = vector.shape_cast %210 : vector<1x1x2x32xf32> to vector<2x32xf32>
    %cst_104 = arith.constant dense<0.000000e+00> : vector<16x32xf32>
    %212 = tpu.matmul %1, %211, %cst_104 {dimension_numbers = #tpu.dot_dimension_numbers<[1], [0], [0], [1], [0, 0, 1, 1], [], []>} : vector<16x2xf32>, vector<2x32xf32>, vector<16x32xf32> -> vector<16x32xf32>
    %c1_105 = arith.constant 1 : index
    %c1_106 = arith.constant 1 : index
    %c0_107 = arith.constant 0 : index
    %c0_108 = arith.constant 0 : index
    %213 = vector.load %arg1[%c1_105, %c1_106, %c0_107, %c0_108] : memref<3x2x2x32xf32, #tpu.memory_space<vmem>>, vector<1x1x2x32xf32>
    %214 = vector.shape_cast %213 : vector<1x1x2x32xf32> to vector<2x32xf32>
    %cst_109 = arith.constant dense<0.000000e+00> : vector<16x32xf32>
    %215 = tpu.matmul %1, %214, %cst_109 {dimension_numbers = #tpu.dot_dimension_numbers<[1], [0], [0], [1], [0, 0, 1, 1], [], []>} : vector<16x2xf32>, vector<2x32xf32>, vector<16x32xf32> -> vector<16x32xf32>
    %216 = arith.mulf %209, %212 : vector<16x32xf32>
    %217 = arith.addf %216, %215 : vector<16x32xf32>
    %218 = vector.extract_strided_slice %115 {offsets = [6, 0], sizes = [1, 32], strides = [1, 1]} : vector<7x32xf32> to vector<1x32xf32>
    %219 = vector.broadcast %218 : vector<1x32xf32> to vector<16x32xf32>
    %220 = arith.mulf %217, %219 : vector<16x32xf32>
    %cst_110 = arith.constant dense<0.000000e+00> : vector<16xf32>
    %221 = vector.multi_reduction <add>, %220, %cst_110 [1] : vector<16x32xf32> to vector<16xf32>
    %222 = vector.shape_cast %221 : vector<16xf32> to vector<16x1xf32>
    %c2_111 = arith.constant 2 : index
    %223 = memref.load %arg11[%c2_111] : memref<4xf32, #tpu.memory_space<smem>>
    %224 = vector.broadcast %223 : f32 to vector<16x1xf32>
    %225 = arith.addf %222, %224 : vector<16x1xf32>
    %c0_112 = arith.constant 0 : index
    %c0_113 = arith.constant 0 : index
    %226 = vector.load %arg6[%c0_112, %c0_113] : memref<4x32xf32, #tpu.memory_space<vmem>>, vector<4x32xf32>
    %227 = vector.extract_strided_slice %226 {offsets = [0, 0], sizes = [1, 32], strides = [1, 1]} : vector<4x32xf32> to vector<1x32xf32>
    %228 = vector.broadcast %225 : vector<16x1xf32> to vector<16x32xf32>
    %229 = vector.broadcast %227 : vector<1x32xf32> to vector<16x32xf32>
    %230 = arith.mulf %228, %229 : vector<16x32xf32>
    %231 = arith.addf %0, %230 : vector<16x32xf32>
    %232 = vector.extract_strided_slice %226 {offsets = [1, 0], sizes = [1, 32], strides = [1, 1]} : vector<4x32xf32> to vector<1x32xf32>
    %233 = vector.broadcast %232 : vector<1x32xf32> to vector<16x32xf32>
    %234 = arith.addf %231, %233 : vector<16x32xf32>
    %c2_114 = arith.constant 2 : index
    %c0_115 = arith.constant 0 : index
    %c0_116 = arith.constant 0 : index
    %235 = vector.load %arg5[%c2_114, %c0_115, %c0_116] : memref<3x7x32xf32, #tpu.memory_space<vmem>>, vector<1x7x32xf32>
    %236 = vector.shape_cast %235 : vector<1x7x32xf32> to vector<7x32xf32>
    %c1_i32_117 = arith.constant 1 : i32
    %237 = tpu.dynamic_rotate %234 by %c1_i32_117 dim 0 : vector<16x32xf32>, i32 -> vector<16x32xf32>
    %c0_118 = arith.constant 0 : index
    %c0_119 = arith.constant 0 : index
    %c0_120 = arith.constant 0 : index
    %238 = vector.load %arg7[%c0_118, %c0_119, %c0_120] : memref<3x16x1xf32, #tpu.memory_space<vmem>>, vector<1x16x1xf32>
    %239 = vector.shape_cast %238 : vector<1x16x1xf32> to vector<16x1xf32>
    %240 = vector.broadcast %239 : vector<16x1xf32> to vector<16x32xf32>
    %241 = arith.mulf %237, %240 : vector<16x32xf32>
    %c1_121 = arith.constant 1 : index
    %c0_122 = arith.constant 0 : index
    %c0_123 = arith.constant 0 : index
    %242 = vector.load %arg7[%c1_121, %c0_122, %c0_123] : memref<3x16x1xf32, #tpu.memory_space<vmem>>, vector<1x16x1xf32>
    %243 = vector.shape_cast %242 : vector<1x16x1xf32> to vector<16x1xf32>
    %244 = vector.broadcast %243 : vector<16x1xf32> to vector<16x32xf32>
    %245 = arith.mulf %234, %244 : vector<16x32xf32>
    %c15_i32_124 = arith.constant 15 : i32
    %246 = tpu.dynamic_rotate %234 by %c15_i32_124 dim 0 : vector<16x32xf32>, i32 -> vector<16x32xf32>
    %c2_125 = arith.constant 2 : index
    %c0_126 = arith.constant 0 : index
    %c0_127 = arith.constant 0 : index
    %247 = vector.load %arg7[%c2_125, %c0_126, %c0_127] : memref<3x16x1xf32, #tpu.memory_space<vmem>>, vector<1x16x1xf32>
    %248 = vector.shape_cast %247 : vector<1x16x1xf32> to vector<16x1xf32>
    %249 = vector.broadcast %248 : vector<16x1xf32> to vector<16x32xf32>
    %250 = arith.mulf %246, %249 : vector<16x32xf32>
    %251 = tpu.concatenate %241, %245, %250 in 1 : vector<16x32xf32>, vector<16x32xf32>, vector<16x32xf32> -> vector<16x96xf32>
    %c2_128 = arith.constant 2 : index
    %c0_129 = arith.constant 0 : index
    %c0_130 = arith.constant 0 : index
    %252 = vector.load %arg3[%c2_128, %c0_129, %c0_130] : memref<3x96x32xf32, #tpu.memory_space<vmem>>, vector<1x96x32xf32>
    %253 = vector.shape_cast %252 : vector<1x96x32xf32> to vector<96x32xf32>
    %cst_131 = arith.constant dense<0.000000e+00> : vector<16x32xf32>
    %254 = tpu.matmul %251, %253, %cst_131 {dimension_numbers = #tpu.dot_dimension_numbers<[1], [0], [0], [1], [0, 0, 1, 1], [], []>} : vector<16x96xf32>, vector<96x32xf32>, vector<16x32xf32> -> vector<16x32xf32>
    %255 = vector.extract_strided_slice %236 {offsets = [0, 0], sizes = [1, 32], strides = [1, 1]} : vector<7x32xf32> to vector<1x32xf32>
    %256 = vector.broadcast %255 : vector<1x32xf32> to vector<16x32xf32>
    %257 = arith.addf %254, %256 : vector<16x32xf32>
    %cst_132 = arith.constant 0.000000e+00 : f32
    %258 = vector.broadcast %cst_132 : f32 to vector<16x32xf32>
    %259 = arith.maximumf %257, %258 : vector<16x32xf32>
    %260 = vector.extract_strided_slice %236 {offsets = [1, 0], sizes = [1, 32], strides = [1, 1]} : vector<7x32xf32> to vector<1x32xf32>
    %261 = vector.extract_strided_slice %236 {offsets = [2, 0], sizes = [1, 32], strides = [1, 1]} : vector<7x32xf32> to vector<1x32xf32>
    %cst_133 = arith.constant dense<0.000000e+00> : vector<16xf32>
    %262 = vector.multi_reduction <add>, %259, %cst_133 [1] : vector<16x32xf32> to vector<16xf32>
    %263 = vector.shape_cast %262 : vector<16xf32> to vector<16x1xf32>
    %cst_134 = arith.constant 3.200000e+01 : f32
    %264 = vector.broadcast %cst_134 : f32 to vector<16x1xf32>
    %265 = arith.divf %263, %264 : vector<16x1xf32>
    %266 = vector.broadcast %265 : vector<16x1xf32> to vector<16x32xf32>
    %267 = arith.subf %259, %266 : vector<16x32xf32>
    %268 = arith.mulf %267, %267 : vector<16x32xf32>
    %cst_135 = arith.constant dense<0.000000e+00> : vector<16xf32>
    %269 = vector.multi_reduction <add>, %268, %cst_135 [1] : vector<16x32xf32> to vector<16xf32>
    %270 = vector.shape_cast %269 : vector<16xf32> to vector<16x1xf32>
    %cst_136 = arith.constant 3.200000e+01 : f32
    %271 = vector.broadcast %cst_136 : f32 to vector<16x1xf32>
    %272 = arith.divf %270, %271 : vector<16x1xf32>
    %273 = vector.broadcast %265 : vector<16x1xf32> to vector<16x32xf32>
    %274 = arith.subf %259, %273 : vector<16x32xf32>
    %cst_137 = arith.constant 9.99999974E-6 : f32
    %275 = vector.broadcast %cst_137 : f32 to vector<16x1xf32>
    %276 = arith.addf %272, %275 : vector<16x1xf32>
    %277 = math.rsqrt %276 : vector<16x1xf32>
    %278 = vector.broadcast %277 : vector<16x1xf32> to vector<16x32xf32>
    %279 = arith.mulf %274, %278 : vector<16x32xf32>
    %280 = vector.broadcast %260 : vector<1x32xf32> to vector<16x32xf32>
    %281 = arith.mulf %279, %280 : vector<16x32xf32>
    %282 = vector.broadcast %261 : vector<1x32xf32> to vector<16x32xf32>
    %283 = arith.addf %281, %282 : vector<16x32xf32>
    %c1_i32_138 = arith.constant 1 : i32
    %284 = tpu.dynamic_rotate %283 by %c1_i32_138 dim 0 : vector<16x32xf32>, i32 -> vector<16x32xf32>
    %c0_139 = arith.constant 0 : index
    %c0_140 = arith.constant 0 : index
    %c0_141 = arith.constant 0 : index
    %285 = vector.load %arg7[%c0_139, %c0_140, %c0_141] : memref<3x16x1xf32, #tpu.memory_space<vmem>>, vector<1x16x1xf32>
    %286 = vector.shape_cast %285 : vector<1x16x1xf32> to vector<16x1xf32>
    %287 = vector.broadcast %286 : vector<16x1xf32> to vector<16x32xf32>
    %288 = arith.mulf %284, %287 : vector<16x32xf32>
    %c1_142 = arith.constant 1 : index
    %c0_143 = arith.constant 0 : index
    %c0_144 = arith.constant 0 : index
    %289 = vector.load %arg7[%c1_142, %c0_143, %c0_144] : memref<3x16x1xf32, #tpu.memory_space<vmem>>, vector<1x16x1xf32>
    %290 = vector.shape_cast %289 : vector<1x16x1xf32> to vector<16x1xf32>
    %291 = vector.broadcast %290 : vector<16x1xf32> to vector<16x32xf32>
    %292 = arith.mulf %283, %291 : vector<16x32xf32>
    %c15_i32_145 = arith.constant 15 : i32
    %293 = tpu.dynamic_rotate %283 by %c15_i32_145 dim 0 : vector<16x32xf32>, i32 -> vector<16x32xf32>
    %c2_146 = arith.constant 2 : index
    %c0_147 = arith.constant 0 : index
    %c0_148 = arith.constant 0 : index
    %294 = vector.load %arg7[%c2_146, %c0_147, %c0_148] : memref<3x16x1xf32, #tpu.memory_space<vmem>>, vector<1x16x1xf32>
    %295 = vector.shape_cast %294 : vector<1x16x1xf32> to vector<16x1xf32>
    %296 = vector.broadcast %295 : vector<16x1xf32> to vector<16x32xf32>
    %297 = arith.mulf %293, %296 : vector<16x32xf32>
    %298 = tpu.concatenate %288, %292, %297 in 1 : vector<16x32xf32>, vector<16x32xf32>, vector<16x32xf32> -> vector<16x96xf32>
    %c2_149 = arith.constant 2 : index
    %c0_150 = arith.constant 0 : index
    %c0_151 = arith.constant 0 : index
    %299 = vector.load %arg4[%c2_149, %c0_150, %c0_151] : memref<3x96x32xf32, #tpu.memory_space<vmem>>, vector<1x96x32xf32>
    %300 = vector.shape_cast %299 : vector<1x96x32xf32> to vector<96x32xf32>
    %cst_152 = arith.constant dense<0.000000e+00> : vector<16x32xf32>
    %301 = tpu.matmul %298, %300, %cst_152 {dimension_numbers = #tpu.dot_dimension_numbers<[1], [0], [0], [1], [0, 0, 1, 1], [], []>} : vector<16x96xf32>, vector<96x32xf32>, vector<16x32xf32> -> vector<16x32xf32>
    %302 = vector.extract_strided_slice %236 {offsets = [3, 0], sizes = [1, 32], strides = [1, 1]} : vector<7x32xf32> to vector<1x32xf32>
    %303 = vector.broadcast %302 : vector<1x32xf32> to vector<16x32xf32>
    %304 = arith.addf %301, %303 : vector<16x32xf32>
    %cst_153 = arith.constant 0.000000e+00 : f32
    %305 = vector.broadcast %cst_153 : f32 to vector<16x32xf32>
    %306 = arith.maximumf %304, %305 : vector<16x32xf32>
    %307 = vector.extract_strided_slice %236 {offsets = [4, 0], sizes = [1, 32], strides = [1, 1]} : vector<7x32xf32> to vector<1x32xf32>
    %308 = vector.extract_strided_slice %236 {offsets = [5, 0], sizes = [1, 32], strides = [1, 1]} : vector<7x32xf32> to vector<1x32xf32>
    %cst_154 = arith.constant dense<0.000000e+00> : vector<16xf32>
    %309 = vector.multi_reduction <add>, %306, %cst_154 [1] : vector<16x32xf32> to vector<16xf32>
    %310 = vector.shape_cast %309 : vector<16xf32> to vector<16x1xf32>
    %cst_155 = arith.constant 3.200000e+01 : f32
    %311 = vector.broadcast %cst_155 : f32 to vector<16x1xf32>
    %312 = arith.divf %310, %311 : vector<16x1xf32>
    %313 = vector.broadcast %312 : vector<16x1xf32> to vector<16x32xf32>
    %314 = arith.subf %306, %313 : vector<16x32xf32>
    %315 = arith.mulf %314, %314 : vector<16x32xf32>
    %cst_156 = arith.constant dense<0.000000e+00> : vector<16xf32>
    %316 = vector.multi_reduction <add>, %315, %cst_156 [1] : vector<16x32xf32> to vector<16xf32>
    %317 = vector.shape_cast %316 : vector<16xf32> to vector<16x1xf32>
    %cst_157 = arith.constant 3.200000e+01 : f32
    %318 = vector.broadcast %cst_157 : f32 to vector<16x1xf32>
    %319 = arith.divf %317, %318 : vector<16x1xf32>
    %320 = vector.broadcast %312 : vector<16x1xf32> to vector<16x32xf32>
    %321 = arith.subf %306, %320 : vector<16x32xf32>
    %cst_158 = arith.constant 9.99999974E-6 : f32
    %322 = vector.broadcast %cst_158 : f32 to vector<16x1xf32>
    %323 = arith.addf %319, %322 : vector<16x1xf32>
    %324 = math.rsqrt %323 : vector<16x1xf32>
    %325 = vector.broadcast %324 : vector<16x1xf32> to vector<16x32xf32>
    %326 = arith.mulf %321, %325 : vector<16x32xf32>
    %327 = vector.broadcast %307 : vector<1x32xf32> to vector<16x32xf32>
    %328 = arith.mulf %326, %327 : vector<16x32xf32>
    %329 = vector.broadcast %308 : vector<1x32xf32> to vector<16x32xf32>
    %330 = arith.addf %328, %329 : vector<16x32xf32>
    %c2_159 = arith.constant 2 : index
    %c0_160 = arith.constant 0 : index
    %c0_161 = arith.constant 0 : index
    %c0_162 = arith.constant 0 : index
    %331 = vector.load %arg1[%c2_159, %c0_160, %c0_161, %c0_162] : memref<3x2x2x32xf32, #tpu.memory_space<vmem>>, vector<1x1x2x32xf32>
    %332 = vector.shape_cast %331 : vector<1x1x2x32xf32> to vector<2x32xf32>
    %cst_163 = arith.constant dense<0.000000e+00> : vector<16x32xf32>
    %333 = tpu.matmul %1, %332, %cst_163 {dimension_numbers = #tpu.dot_dimension_numbers<[1], [0], [0], [1], [0, 0, 1, 1], [], []>} : vector<16x2xf32>, vector<2x32xf32>, vector<16x32xf32> -> vector<16x32xf32>
    %c2_164 = arith.constant 2 : index
    %c1_165 = arith.constant 1 : index
    %c0_166 = arith.constant 0 : index
    %c0_167 = arith.constant 0 : index
    %334 = vector.load %arg1[%c2_164, %c1_165, %c0_166, %c0_167] : memref<3x2x2x32xf32, #tpu.memory_space<vmem>>, vector<1x1x2x32xf32>
    %335 = vector.shape_cast %334 : vector<1x1x2x32xf32> to vector<2x32xf32>
    %cst_168 = arith.constant dense<0.000000e+00> : vector<16x32xf32>
    %336 = tpu.matmul %1, %335, %cst_168 {dimension_numbers = #tpu.dot_dimension_numbers<[1], [0], [0], [1], [0, 0, 1, 1], [], []>} : vector<16x2xf32>, vector<2x32xf32>, vector<16x32xf32> -> vector<16x32xf32>
    %337 = arith.mulf %330, %333 : vector<16x32xf32>
    %338 = arith.addf %337, %336 : vector<16x32xf32>
    %339 = vector.extract_strided_slice %236 {offsets = [6, 0], sizes = [1, 32], strides = [1, 1]} : vector<7x32xf32> to vector<1x32xf32>
    %340 = vector.broadcast %339 : vector<1x32xf32> to vector<16x32xf32>
    %341 = arith.mulf %338, %340 : vector<16x32xf32>
    %cst_169 = arith.constant dense<0.000000e+00> : vector<16xf32>
    %342 = vector.multi_reduction <add>, %341, %cst_169 [1] : vector<16x32xf32> to vector<16xf32>
    %343 = vector.shape_cast %342 : vector<16xf32> to vector<16x1xf32>
    %c3 = arith.constant 3 : index
    %344 = memref.load %arg11[%c3] : memref<4xf32, #tpu.memory_space<smem>>
    %345 = vector.broadcast %344 : f32 to vector<16x1xf32>
    %346 = arith.addf %343, %345 : vector<16x1xf32>
    %347 = vector.extract_strided_slice %226 {offsets = [2, 0], sizes = [1, 32], strides = [1, 1]} : vector<4x32xf32> to vector<1x32xf32>
    %348 = vector.broadcast %346 : vector<16x1xf32> to vector<16x32xf32>
    %349 = vector.broadcast %347 : vector<1x32xf32> to vector<16x32xf32>
    %350 = arith.mulf %348, %349 : vector<16x32xf32>
    %351 = arith.addf %234, %350 : vector<16x32xf32>
    %352 = vector.extract_strided_slice %226 {offsets = [3, 0], sizes = [1, 32], strides = [1, 1]} : vector<4x32xf32> to vector<1x32xf32>
    %353 = vector.broadcast %352 : vector<1x32xf32> to vector<16x32xf32>
    %354 = arith.addf %351, %353 : vector<16x32xf32>
    %355 = math.exp %113 : vector<16x1xf32>
    %cst_170 = arith.constant 1.000000e+00 : f32
    %356 = vector.broadcast %cst_170 : f32 to vector<16x1xf32>
    %357 = arith.subf %355, %356 : vector<16x1xf32>
    %cst_171 = arith.constant 1.000000e+00 : f32
    %358 = vector.broadcast %cst_171 : f32 to vector<16x1xf32>
    %359 = arith.mulf %357, %358 : vector<16x1xf32>
    %cst_172 = arith.constant 0.000000e+00 : f32
    %360 = vector.broadcast %cst_172 : f32 to vector<16x1xf32>
    %361 = arith.maximumf %359, %360 : vector<16x1xf32>
    %cst_173 = arith.constant 5.000000e-01 : f32
    %362 = vector.broadcast %cst_173 : f32 to vector<16x1xf32>
    %363 = arith.addf %361, %362 : vector<16x1xf32>
    %364 = arith.fptosi %363 : vector<16x1xf32> to vector<16x1xi32>
    %365 = arith.sitofp %364 : vector<16x1xi32> to vector<16x1xf32>
    %c1_174 = arith.constant 1 : index
    %c0_175 = arith.constant 0 : index
    %c0_176 = arith.constant 0 : index
    %366 = vector.load %arg7[%c1_174, %c0_175, %c0_176] : memref<3x16x1xf32, #tpu.memory_space<vmem>>, vector<1x16x1xf32>
    %367 = vector.shape_cast %366 : vector<1x16x1xf32> to vector<16x1xf32>
    %368 = arith.mulf %365, %367 : vector<16x1xf32>
    %369 = arith.fptosi %368 : vector<16x1xf32> to vector<16x1xi32>
    %c0_177 = arith.constant 0 : index
    %c0_178 = arith.constant 0 : index
    %370 = vector.load %arg13[%c0_177, %c0_178] : memref<16x1xi32, #tpu.memory_space<vmem>>, vector<16x1xi32>
    tpu.vector_store %arg13[%c0_177, %c0_178], %369 {strides = array<i32>} : memref<16x1xi32, #tpu.memory_space<vmem>>, vector<16x1xi32>,
    %cst_179 = arith.constant 1.000000e+00 : f32
    %371 = vector.broadcast %cst_179 : f32 to vector<128x16xf32>
    %c0_180 = arith.constant 0 : index
    %c0_181 = arith.constant 0 : index
    %c0_182 = arith.constant 0 : index
    %372 = vector.load %arg9[%c0_180, %c0_181, %c0_182] : memref<2x16x16xf32, #tpu.memory_space<vmem>>, vector<1x16x16xf32>
    %373 = vector.shape_cast %372 : vector<1x16x16xf32> to vector<16x16xf32>
    %374 = vector.broadcast %368 : vector<16x1xf32> to vector<16x16xf32>
    %375 = arith.mulf %374, %373 : vector<16x16xf32>
    %cst_183 = arith.constant dense<0.000000e+00> : vector<128x16xf32>
    %376 = tpu.matmul %371, %375, %cst_183 {dimension_numbers = #tpu.dot_dimension_numbers<[1], [0], [0], [1], [0, 0, 1, 1], [], []>} : vector<128x16xf32>, vector<16x16xf32>, vector<128x16xf32> -> vector<128x16xf32>
    %c1_184 = arith.constant 1 : index
    %c0_185 = arith.constant 0 : index
    %c0_186 = arith.constant 0 : index
    %377 = vector.load %arg9[%c1_184, %c0_185, %c0_186] : memref<2x16x16xf32, #tpu.memory_space<vmem>>, vector<1x16x16xf32>
    %378 = vector.shape_cast %377 : vector<1x16x16xf32> to vector<16x16xf32>
    %379 = vector.broadcast %368 : vector<16x1xf32> to vector<16x16xf32>
    %380 = arith.mulf %379, %378 : vector<16x16xf32>
    %cst_187 = arith.constant dense<0.000000e+00> : vector<128x16xf32>
    %381 = tpu.matmul %371, %380, %cst_187 {dimension_numbers = #tpu.dot_dimension_numbers<[1], [0], [0], [1], [0, 0, 1, 1], [], []>} : vector<128x16xf32>, vector<16x16xf32>, vector<128x16xf32> -> vector<128x16xf32>
    %c0_188 = arith.constant 0 : index
    %c0_189 = arith.constant 0 : index
    %382 = vector.load %arg10[%c0_188, %c0_189] : memref<128x16xf32, #tpu.memory_space<vmem>>, vector<128x16xf32>
    %383 = arith.cmpf oge, %382, %381 : vector<128x16xf32>
    %384 = arith.cmpf olt, %382, %376 : vector<128x16xf32>
    %385 = arith.andi %383, %384 : vector<128x16xi1>
    %386 = arith.extui %385 : vector<128x16xi1> to vector<128x16xi32>
    %387 = arith.sitofp %386 : vector<128x16xi32> to vector<128x16xf32>
    %cst_190 = arith.constant dense<0.000000e+00> : vector<128x32xf32>
    %388 = tpu.matmul %387, %354, %cst_190 {dimension_numbers = #tpu.dot_dimension_numbers<[1], [0], [0], [1], [0, 0, 1, 1], [], []>} : vector<128x16xf32>, vector<16x32xf32>, vector<128x32xf32> -> vector<128x32xf32>
    %c0_191 = arith.constant 0 : index
    %389 = memref.load %arg11[%c0_191] : memref<4xf32, #tpu.memory_space<smem>>
    %c0_192 = arith.constant 0 : index
    %c0_193 = arith.constant 0 : index
    %390 = vector.load %arg2[%c0_192, %c0_193] : memref<128x32xf32, #tpu.memory_space<vmem>>, vector<128x32xf32>
    %391 = vector.broadcast %389 : f32 to vector<128x32xf32>
    %392 = arith.mulf %391, %390 : vector<128x32xf32>
    %393 = arith.addf %388, %392 : vector<128x32xf32>
    %c0_194 = arith.constant 0 : index
    %c0_195 = arith.constant 0 : index
    %394 = vector.load %arg12[%c0_194, %c0_195] : memref<128x32xf32, #tpu.memory_space<vmem>>, vector<128x32xf32>
    tpu.vector_store %arg12[%c0_194, %c0_195], %393 {strides = array<i32>} : memref<128x32xf32, #tpu.memory_space<vmem>>, vector<128x32xf32>,
    return
  }
}

</mosaic_0001>

<llo_original>
// kernel: pretssel_decoder_frontend.1
$region0: #{pretssel_decoder_frontend.1}
  #allocation0 [shape = 'u32[]', space=smem, size = 0x4, offset = 0x4, fixed_abs, tag = 'smem constant byte address 0x4 - core index']
  #allocation1 [shape = 'u32[144,128]{1,0:T(1,128)}', space=vmem, size = 0x12000, scoped, tag = 'internal scratch']
  %s0 = inlined_call_operand.vmem [shape: f32[16,32], index: 0, kind: input, shape index: {}]
  %s1 = inlined_call_operand.vmem [shape: f32[3,2,2,32], index: 1, kind: input, shape index: {}]
  %s2 = inlined_call_operand.vmem [shape: f32[128,32], index: 2, kind: input, shape index: {}]
  %s3 = inlined_call_operand.vmem [shape: f32[3,96,32], index: 3, kind: input, shape index: {}]
  %s4 = inlined_call_operand.vmem [shape: f32[3,96,32], index: 4, kind: input, shape index: {}]
  %s5 = inlined_call_operand.vmem [shape: f32[3,7,32], index: 5, kind: input, shape index: {}]
  %s6 = inlined_call_operand.vmem [shape: f32[4,32], index: 6, kind: input, shape index: {}]
  %s7 = inlined_call_operand.vmem [shape: f32[3,16,1], index: 7, kind: input, shape index: {}]
  %s8 = inlined_call_operand.vmem [shape: f32[16,2], index: 8, kind: input, shape index: {}]
  %s9 = inlined_call_operand.vmem [shape: f32[2,16,16], index: 9, kind: input, shape index: {}]
  %s10 = inlined_call_operand.vmem [shape: f32[128,16], index: 10, kind: input, shape index: {}]
  %s11 = inlined_call_operand.vmem [shape: f32[4], index: 11, kind: input, shape index: {}]
  %s12 = inlined_call_operand.vmem [shape: f32[128,32], index: 12, kind: output, shape index: {0}]
  %s13 = inlined_call_operand.vmem [shape: s32[16,1], index: 13, kind: output, shape index: {1}]
  %14 = xla_tuple %s12, %s13
  %s15 = sld [smem:[#allocation0]]
  $region70: #{pretssel_decoder_frontend.1} parent=0
    _
  %s17 = ssub.s32 1, %s15
  %s18 = scalar_select 0, %s17, %s15
  $region1: #{pretssel_decoder_frontend.1} parent=0
    #allocation2 [shape = 'u8[512]{0}', space=smem, size = 0x200, scoped, tag = 'input window, operand 11, single buffered']
    #allocation3 [shape = 's32[1]{0}', space=sflag, size = 0x4, scoped, tag = 'scoped memory for pretssel_decoder_frontend.1']
    %19 = vsyncpa [#allocation3], 0
    // Predicated region
    $region2: #{pretssel_decoder_frontend.1} parent=1 // pred_check
      _
    $region3: #{pretssel_decoder_frontend.1} parent=1 // pred_check_branch
      %21 = sbr.rel (0) target = $region5
    $region4: #{pretssel_decoder_frontend.1} parent=1 // pred_region
      _
    $region5: #{pretssel_decoder_frontend.1} parent=1 // pred_fallthru
      _
    // Predicated region
    $region6: #{pretssel_decoder_frontend.1} parent=1 // pred_check
      _
    $region7: #{pretssel_decoder_frontend.1} parent=1 // pred_check_branch
      %23 = sbr.rel (0) target = $region9
    $region8: #{pretssel_decoder_frontend.1} parent=1 // pred_region
      _
    $region9: #{pretssel_decoder_frontend.1} parent=1 // pred_fallthru
      _
    // Predicated region
    $region10: #{pretssel_decoder_frontend.1} parent=1 // pred_check
      _
    $region11: #{pretssel_decoder_frontend.1} parent=1 // pred_check_branch
      %25 = sbr.rel (0) target = $region13
    $region12: #{pretssel_decoder_frontend.1} parent=1 // pred_region
      _
    $region13: #{pretssel_decoder_frontend.1} parent=1 // pred_fallthru
      _
    // Predicated region
    $region14: #{pretssel_decoder_frontend.1} parent=1 // pred_check
      _
    $region15: #{pretssel_decoder_frontend.1} parent=1 // pred_check_branch
      %27 = sbr.rel (0) target = $region17
    $region16: #{pretssel_decoder_frontend.1} parent=1 // pred_region
      _
    $region17: #{pretssel_decoder_frontend.1} parent=1 // pred_fallthru
      _
    // Predicated region
    $region18: #{pretssel_decoder_frontend.1} parent=1 // pred_check
      _
    $region19: #{pretssel_decoder_frontend.1} parent=1 // pred_check_branch
      %29 = sbr.rel (0) target = $region21
    $region20: #{pretssel_decoder_frontend.1} parent=1 // pred_region
      _
    $region21: #{pretssel_decoder_frontend.1} parent=1 // pred_fallthru
      _
    // Predicated region
    $region22: #{pretssel_decoder_frontend.1} parent=1 // pred_check
      _
    $region23: #{pretssel_decoder_frontend.1} parent=1 // pred_check_branch
      %31 = sbr.rel (0) target = $region25
    $region24: #{pretssel_decoder_frontend.1} parent=1 // pred_region
      _
    $region25: #{pretssel_decoder_frontend.1} parent=1 // pred_fallthru
      _
    // Predicated region
    $region26: #{pretssel_decoder_frontend.1} parent=1 // pred_check
      _
    $region27: #{pretssel_decoder_frontend.1} parent=1 // pred_check_branch
      %33 = sbr.rel (0) target = $region29
    $region28: #{pretssel_decoder_frontend.1} parent=1 // pred_region
      _
    $region29: #{pretssel_decoder_frontend.1} parent=1 // pred_fallthru
      _
    // Predicated region
    $region30: #{pretssel_decoder_frontend.1} parent=1 // pred_check
      _
    $region31: #{pretssel_decoder_frontend.1} parent=1 // pred_check_branch
      %35 = sbr.rel (0) target = $region33
    $region32: #{pretssel_decoder_frontend.1} parent=1 // pred_region
      _
    $region33: #{pretssel_decoder_frontend.1} parent=1 // pred_fallthru
      _
    // Predicated region
    $region34: #{pretssel_decoder_frontend.1} parent=1 // pred_check
      _
    $region35: #{pretssel_decoder_frontend.1} parent=1 // pred_check_branch
      %37 = sbr.rel (0) target = $region37
    $region36: #{pretssel_decoder_frontend.1} parent=1 // pred_region
      _
    $region37: #{pretssel_decoder_frontend.1} parent=1 // pred_fallthru
      _
    // Predicated region
    $region38: #{pretssel_decoder_frontend.1} parent=1 // pred_check
      _
    $region39: #{pretssel_decoder_frontend.1} parent=1 // pred_check_branch
      %39 = sbr.rel (0) target = $region41
    $region40: #{pretssel_decoder_frontend.1} parent=1 // pred_region
      _
    $region41: #{pretssel_decoder_frontend.1} parent=1 // pred_fallthru
      _
    // Predicated region
    $region42: #{pretssel_decoder_frontend.1} parent=1 // pred_check
      _
    $region43: #{pretssel_decoder_frontend.1} parent=1 // pred_check_branch
      %41 = sbr.rel (0) target = $region45
    $region44: #{pretssel_decoder_frontend.1} parent=1 // pred_region
      _
    $region45: #{pretssel_decoder_frontend.1} parent=1 // pred_fallthru
      _
    // Predicated region
    $region46: #{pretssel_decoder_frontend.1} parent=1 // pred_check
      _
    $region47: #{pretssel_decoder_frontend.1} parent=1 // pred_check_branch
      %43 = sbr.rel (0) target = $region49
    $region48: #{pretssel_decoder_frontend.1} parent=1 // pred_region
      %s45 = ssub.s32 16, 16
      %46 = vsyncadd [#allocation3], %s45
      %s48 = sshll.u32 %s11, 4
      %s49 = int_to_ptr.vmem [resolvable:$true] %s48
      %51 = dma.vmem_to_smem %s49, 16, [#allocation2], [#allocation3]
    $region49: #{pretssel_decoder_frontend.1} parent=1 // pred_fallthru
      _
    // Predicated region
    $region50: #{pretssel_decoder_frontend.1} parent=1 // pred_check
      _
    $region51: #{pretssel_decoder_frontend.1} parent=1 // pred_check_branch
      %53 = sbr.rel (0) target = $region53
    $region52: #{pretssel_decoder_frontend.1} parent=1 // pred_region
      %54 = dma.done [#allocation3], 16
    $region53: #{pretssel_decoder_frontend.1} parent=1 // pred_fallthru
      _
    %55 = sfence
    %v56 = vld [vmem:[%s0] sm:$0xff]
    %v57 = vld [vmem:[%s0 + $0x8] sm:$0xff]
    %v58 = vld [vmem:[%s8] sm:$0xff]
    %v59 = vld [vmem:[%s8 + $0x8] sm:$0xff]
    %v60 = vld [vmem:[%s5] sm:$0x7f]
    %v61 = vrot.slane %v56, 7
    %v62 = vrot.slane %v57, 7
    %v63 = vlaneseq
    %v64 = vshrl.u32 %v63, 7
    %vm65 = vcmp.lt.s32.totalorder %v64, 1
    %v66 = vsel %vm65, %v61, %v62
    %v67 = vsel %vm65, %v62, %v61
    %v68 = vld [vmem:[%s7] sm:$0xff]
    %v69 = vld [vmem:[%s7 + $0x8] sm:$0xff]
    %71 = vset.pattern.permute.xlu0 0
    %72 = vperm.xlu0 %71, %v68
    %v73 = vpop.permute.xlu0 %72
    %76 = vset.pattern.permute.xlu0 0
    %77 = vperm.xlu0 %76, %v69
    %v78 = vpop.permute.xlu0 %77
    %v80 = vmul.f32 %v67, %v73
    %v81 = vmul.f32 %v66, %v78
    %s82 = scalar_lea.vmem %s7, 16
    %v83 = vld [vmem:[%s82] sm:$0xff]
    %v84 = vld [vmem:[%s82 + $0x8] sm:$0xff]
    %86 = vset.pattern.permute.xlu0 0
    %87 = vperm.xlu0 %86, %v83
    %v88 = vpop.permute.xlu0 %87
    %91 = vset.pattern.permute.xlu0 0
    %92 = vperm.xlu0 %91, %v84
    %v93 = vpop.permute.xlu0 %92
    %v95 = vmul.f32 %v56, %v88
    %v96 = vmul.f32 %v57, %v93
    %v97 = vrot.slane %v56, 1
    %v98 = vrot.slane %v57, 1
    %vm99 = vcmp.lt.s32.totalorder %v64, 7
    %v100 = vsel %vm99, %v97, %v98
    %v101 = vsel %vm99, %v98, %v97
    %s102 = scalar_lea.vmem %s7, 32
    %v103 = vld [vmem:[%s102] sm:$0xff]
    %v104 = vld [vmem:[%s102 + $0x8] sm:$0xff]
    %106 = vset.pattern.permute.xlu0 0
    %107 = vperm.xlu0 %106, %v103
    %v108 = vpop.permute.xlu0 %107
    %111 = vset.pattern.permute.xlu0 0
    %112 = vperm.xlu0 %111, %v104
    %v113 = vpop.permute.xlu0 %112
    %v115 = vmul.f32 %v100, %v108
    %v116 = vmul.f32 %v101, %v113
    %119 = vrot.lane.b32.xlu0 %v95, 32
    %v120 = vpop.permute.xlu0 %119
    %121 = vrot.lane.b32.xlu0 %v96, 32
    %v122 = vpop.permute.xlu0 %121
    %127 = vrot.lane.b32.xlu0 %v115, 64
    %v128 = vpop.permute.xlu0 %127
    %129 = vrot.lane.b32.xlu0 %v116, 64
    %v130 = vpop.permute.xlu0 %129
    %vm133 = vcmask 261120
    %v134 = vsel %vm133, %v80, %v120
    %v135 = vsel %vm133, %v81, %v122
    %vm136 = vcmask 523264
    %v137 = vsel %vm136, %v134, %v128
    %v138 = vsel %vm136, %v135, %v130
    %v139 = vld [vmem:[%s3] sm:$0xff]
    %v140 = vld [vmem:[%s3 + $0x8] sm:$0xff]
    %v141 = vld [vmem:[%s3 + $0x10] sm:$0xff]
    %v142 = vld [vmem:[%s3 + $0x18] sm:$0xff]
    %v143 = vld [vmem:[%s3 + $0x20] sm:$0xff]
    %v144 = vld [vmem:[%s3 + $0x28] sm:$0xff]
    %v145 = vld [vmem:[%s3 + $0x30] sm:$0xff]
    %v146 = vld [vmem:[%s3 + $0x38] sm:$0xff]
    %v147 = vld [vmem:[%s3 + $0x40] sm:$0xff]
    %v148 = vld [vmem:[%s3 + $0x48] sm:$0xff]
    %v149 = vld [vmem:[%s3 + $0x50] sm:$0xff]
    %v150 = vld [vmem:[%s3 + $0x58] sm:$0xff]
    %v151 = vlaneseq
    %v152 = vshrl.u32 %v151, 7
    %v153 = vsub.s32 0, %v152
    %v154 = vrot.slane %v60, %v153
    %vm155 = vcmask 785408
    %v157 = vsel %vm155, %v137, 0
    %v160 = vsel %vm155, %v138, 0
    %162 = vmatprep.subr.mxu0 0.0
    %163 = vmatpush1.msra.mxu0 0.0
    %164 = vmatprep.subr.mxu0 0.0
    %165 = vmatpush1.msra.mxu0 0.0
    %166 = vmatprep.subr.mxu0 0.0
    %167 = vmatpush1.msra.mxu0 0.0
    %168 = vmatprep.subr.mxu0 0.0
    %169 = vmatpush1.msra.mxu0 0.0
    %170 = vmatprep.subr.mxu0 0.0
    %171 = vmatpush1.msra.mxu0 %v150
    %172 = vmatprep.subr.mxu0 0.0
    %173 = vmatpush1.msra.mxu0 %v149
    %174 = vmatprep.subr.mxu0 0.0
    %175 = vmatpush1.msra.mxu0 %v148
    %176 = vmatprep.subr.mxu0 0.0
    %177 = vmatpush1.msra.mxu0 %v147
    %178 = vmatprep.subr.mxu0 0.0
    %179 = vmatpush1.msra.mxu0 %v146
    %180 = vmatprep.subr.mxu0 0.0
    %181 = vmatpush1.msra.mxu0 %v145
    %182 = vmatprep.subr.mxu0 0.0
    %183 = vmatpush1.msra.mxu0 %v144
    %184 = vmatprep.subr.mxu0 0.0
    %185 = vmatpush1.msra.mxu0 %v143
    %186 = vmatprep.subr.mxu0 0.0
    %187 = vmatpush1.msra.mxu0 %v142
    %188 = vmatprep.subr.mxu0 0.0
    %189 = vmatpush1.msra.mxu0 %v141
    %190 = vmatprep.subr.mxu0 0.0
    %191 = vmatpush1.msra.mxu0 %v140
    %192 = vmatprep.subr.mxu0 0.0
    %193 = vmatpush1.msra.mxu0 %v139
    %194 = vmatprep.subr.mxu0 0.0
    %195 = vmatpush2.msra.mxu0 0.0
    %196 = vmatprep.subr.mxu0 0.0
    %197 = vmatpush2.msra.mxu0 0.0
    %198 = vmatprep.subr.mxu0 0.0
    %199 = vmatpush2.msra.mxu0 0.0
    %200 = vmatprep.subr.mxu0 0.0
    %201 = vmatpush2.msra.mxu0 0.0
    %202 = vmatprep.subr.mxu0 0.0
    %203 = vmatpush2.msra.mxu0 0.0
    %204 = vmatprep.subr.mxu0 0.0
    %205 = vmatpush2.msra.mxu0 0.0
    %206 = vmatprep.subr.mxu0 0.0
    %207 = vmatpush2.msra.mxu0 0.0
    %208 = vmatprep.subr.mxu0 0.0
    %209 = vmatpush2.msra.mxu0 0.0
    %210 = vmatprep.subr.mxu0 0.0
    %211 = vmatpush2.msra.mxu0 0.0
    %212 = vmatprep.subr.mxu0 0.0
    %213 = vmatpush2.msra.mxu0 0.0
    %214 = vmatprep.subr.mxu0 0.0
    %215 = vmatpush2.msra.mxu0 0.0
    %216 = vmatprep.subr.mxu0 0.0
    %217 = vmatpush2.msra.mxu0 0.0
    %218 = vmatprep.subr.mxu0 0.0
    %219 = vmatpush2.msra.mxu0 0.0
    %220 = vmatprep.subr.mxu0 0.0
    %221 = vmatpush2.msra.mxu0 0.0
    %222 = vmatprep.subr.mxu0 0.0
    %223 = vmatpush2.msra.mxu0 0.0
    %224 = vmatprep.subr.mxu0 0.0
    %225 = vmatpush2.msra.mxu0 0.0
    %226 = vmatprep.mubr.f32.mxu0 0.0
    %227 = vmatmul.mubr.f32.gmra.mxu0 %v157
    %v228 = vpop.f32.mrf.mxu0
    %v229 = vadd.f32 %v154, %v228
    %v230 = vpop.f32.mrf.mxu0
    %231 = vmatprep.mubr.f32.mxu0 0.0
    %232 = vmatmul.mubr.f32.gmra.mxu0 %v160
    %v233 = vpop.f32.mrf.mxu0
    %v234 = vadd.f32 %v154, %v233
    %v235 = vpop.f32.mrf.mxu0
    %236 = vdwg.mxu0
    %v237 = vmax.f32 %v229, 0.0
    %v238 = vmax.f32 %v234, 0.0
    %v239 = vsel %vm133, %v237, 0.0
    %240 = vadd.xlane.f32.xlu0 %v239
    %v241 = vpop.xlane.xlu0 %240
    %v242 = vsel %vm133, %v238, 0.0
    %243 = vadd.xlane.f32.xlu0 %v242
    %v244 = vpop.xlane.xlu0 %243
    %v245 = vrcp.pop 32.0
    %v246 = vmul.f32 %v241, %v245
    %v247 = vmul.f32 %v244, %v245
    %v248 = vsub.f32 %v237, %v246
    %v249 = vsub.f32 %v238, %v247
    %v250 = vmul.f32 %v248, %v248
    %v251 = vmul.f32 %v249, %v249
    %v252 = vsel %vm133, %v250, 0.0
    %253 = vadd.xlane.f32.xlu0 %v252
    %v254 = vpop.xlane.xlu0 %253
    %v255 = vsel %vm133, %v251, 0.0
    %256 = vadd.xlane.f32.xlu0 %v255
    %v257 = vpop.xlane.xlu0 %256
    %v258 = vmul.f32 %v254, %v245
    %v259 = vmul.f32 %v257, %v245
    %v260 = vadd.f32 %v258, 1e-05
    %v261 = vadd.f32 %v259, 1e-05
    %v262 = vrsqrt.pop %v260
    %v263 = vrsqrt.pop %v261
    %v264 = vmul.f32 %v248, %v262
    %v265 = vmul.f32 %v249, %v263
    %v266 = vlaneseq
    %v267 = vshrl.u32 %v266, 7
    %v268 = vsub.s32 1, %v267
    %v269 = vrot.slane %v60, %v268
    %v270 = vmul.f32 %v264, %v269
    %v271 = vmul.f32 %v265, %v269
    %v272 = vlaneseq
    %v273 = vshrl.u32 %v272, 7
    %v274 = vsub.s32 2, %v273
    %v275 = vrot.slane %v60, %v274
    %v276 = vadd.f32 %v270, %v275
    %v277 = vadd.f32 %v271, %v275
    %v278 = vrot.slane %v276, 7
    %v279 = vrot.slane %v277, 7
    %v280 = vsel %vm65, %v278, %v279
    %v281 = vsel %vm65, %v279, %v278
    %v282 = vmul.f32 %v281, %v73
    %v283 = vmul.f32 %v280, %v78
    %v284 = vmul.f32 %v276, %v88
    %v285 = vmul.f32 %v277, %v93
    %v286 = vrot.slane %v276, 1
    %v287 = vrot.slane %v277, 1
    %v288 = vsel %vm99, %v286, %v287
    %v289 = vsel %vm99, %v287, %v286
    %v290 = vmul.f32 %v288, %v108
    %v291 = vmul.f32 %v289, %v113
    %294 = vrot.lane.b32.xlu0 %v284, 32
    %v295 = vpop.permute.xlu0 %294
    %296 = vrot.lane.b32.xlu0 %v285, 32
    %v297 = vpop.permute.xlu0 %296
    %302 = vrot.lane.b32.xlu0 %v290, 64
    %v303 = vpop.permute.xlu0 %302
    %304 = vrot.lane.b32.xlu0 %v291, 64
    %v305 = vpop.permute.xlu0 %304
    %v308 = vsel %vm133, %v282, %v295
    %v309 = vsel %vm133, %v283, %v297
    %v310 = vsel %vm136, %v308, %v303
    %v311 = vsel %vm136, %v309, %v305
    %v312 = vld [vmem:[%s4] sm:$0xff]
    %v313 = vld [vmem:[%s4 + $0x8] sm:$0xff]
    %v314 = vld [vmem:[%s4 + $0x10] sm:$0xff]
    %v315 = vld [vmem:[%s4 + $0x18] sm:$0xff]
    %v316 = vld [vmem:[%s4 + $0x20] sm:$0xff]
    %v317 = vld [vmem:[%s4 + $0x28] sm:$0xff]
    %v318 = vld [vmem:[%s4 + $0x30] sm:$0xff]
    %v319 = vld [vmem:[%s4 + $0x38] sm:$0xff]
    %v320 = vld [vmem:[%s4 + $0x40] sm:$0xff]
    %v321 = vld [vmem:[%s4 + $0x48] sm:$0xff]
    %v322 = vld [vmem:[%s4 + $0x50] sm:$0xff]
    %v323 = vld [vmem:[%s4 + $0x58] sm:$0xff]
    %v324 = vlaneseq
    %v325 = vshrl.u32 %v324, 7
    %v326 = vsub.s32 3, %v325
    %v327 = vrot.slane %v60, %v326
    %v329 = vsel %vm155, %v310, 0
    %v332 = vsel %vm155, %v311, 0
    %334 = vmatprep.subr.mxu0 0.0
    %335 = vmatpush1.msra.mxu0 0.0
    %336 = vmatprep.subr.mxu0 0.0
    %337 = vmatpush1.msra.mxu0 0.0
    %338 = vmatprep.subr.mxu0 0.0
    %339 = vmatpush1.msra.mxu0 0.0
    %340 = vmatprep.subr.mxu0 0.0
    %341 = vmatpush1.msra.mxu0 0.0
    %342 = vmatprep.subr.mxu0 0.0
    %343 = vmatpush1.msra.mxu0 %v323
    %344 = vmatprep.subr.mxu0 0.0
    %345 = vmatpush1.msra.mxu0 %v322
    %346 = vmatprep.subr.mxu0 0.0
    %347 = vmatpush1.msra.mxu0 %v321
    %348 = vmatprep.subr.mxu0 0.0
    %349 = vmatpush1.msra.mxu0 %v320
    %350 = vmatprep.subr.mxu0 0.0
    %351 = vmatpush1.msra.mxu0 %v319
    %352 = vmatprep.subr.mxu0 0.0
    %353 = vmatpush1.msra.mxu0 %v318
    %354 = vmatprep.subr.mxu0 0.0
    %355 = vmatpush1.msra.mxu0 %v317
    %356 = vmatprep.subr.mxu0 0.0
    %357 = vmatpush1.msra.mxu0 %v316
    %358 = vmatprep.subr.mxu0 0.0
    %359 = vmatpush1.msra.mxu0 %v315
    %360 = vmatprep.subr.mxu0 0.0
    %361 = vmatpush1.msra.mxu0 %v314
    %362 = vmatprep.subr.mxu0 0.0
    %363 = vmatpush1.msra.mxu0 %v313
    %364 = vmatprep.subr.mxu0 0.0
    %365 = vmatpush1.msra.mxu0 %v312
    %366 = vmatprep.subr.mxu0 0.0
    %367 = vmatpush2.msra.mxu0 0.0
    %368 = vmatprep.subr.mxu0 0.0
    %369 = vmatpush2.msra.mxu0 0.0
    %370 = vmatprep.subr.mxu0 0.0
    %371 = vmatpush2.msra.mxu0 0.0
    %372 = vmatprep.subr.mxu0 0.0
    %373 = vmatpush2.msra.mxu0 0.0
    %374 = vmatprep.subr.mxu0 0.0
    %375 = vmatpush2.msra.mxu0 0.0
    %376 = vmatprep.subr.mxu0 0.0
    %377 = vmatpush2.msra.mxu0 0.0
    %378 = vmatprep.subr.mxu0 0.0
    %379 = vmatpush2.msra.mxu0 0.0
    %380 = vmatprep.subr.mxu0 0.0
    %381 = vmatpush2.msra.mxu0 0.0
    %382 = vmatprep.subr.mxu0 0.0
    %383 = vmatpush2.msra.mxu0 0.0
    %384 = vmatprep.subr.mxu0 0.0
    %385 = vmatpush2.msra.mxu0 0.0
    %386 = vmatprep.subr.mxu0 0.0
    %387 = vmatpush2.msra.mxu0 0.0
    %388 = vmatprep.subr.mxu0 0.0
    %389 = vmatpush2.msra.mxu0 0.0
    %390 = vmatprep.subr.mxu0 0.0
    %391 = vmatpush2.msra.mxu0 0.0
    %392 = vmatprep.subr.mxu0 0.0
    %393 = vmatpush2.msra.mxu0 0.0
    %394 = vmatprep.subr.mxu0 0.0
    %395 = vmatpush2.msra.mxu0 0.0
    %396 = vmatprep.subr.mxu0 0.0
    %397 = vmatpush2.msra.mxu0 0.0
    %398 = vmatprep.mubr.f32.mxu0 0.0
    %399 = vmatmul.mubr.f32.gmra.mxu0 %v329
    %v400 = vpop.f32.mrf.mxu0
    %v401 = vadd.f32 %v327, %v400
    %v402 = vpop.f32.mrf.mxu0
    %403 = vmatprep.mubr.f32.mxu0 0.0
    %404 = vmatmul.mubr.f32.gmra.mxu0 %v332
    %v405 = vpop.f32.mrf.mxu0
    %v406 = vadd.f32 %v327, %v405
    %v407 = vpop.f32.mrf.mxu0
    %408 = vdwg.mxu0
    %v409 = vmax.f32 %v401, 0.0
    %v410 = vmax.f32 %v406, 0.0
    %v411 = vsel %vm133, %v409, 0.0
    %412 = vadd.xlane.f32.xlu0 %v411
    %v413 = vpop.xlane.xlu0 %412
    %v414 = vsel %vm133, %v410, 0.0
    %415 = vadd.xlane.f32.xlu0 %v414
    %v416 = vpop.xlane.xlu0 %415
    %v417 = vmul.f32 %v413, %v245
    %v418 = vmul.f32 %v416, %v245
    %v419 = vsub.f32 %v409, %v417
    %v420 = vsub.f32 %v410, %v418
    %v421 = vmul.f32 %v419, %v419
    %v422 = vmul.f32 %v420, %v420
    %v423 = vsel %vm133, %v421, 0.0
    %424 = vadd.xlane.f32.xlu0 %v423
    %v425 = vpop.xlane.xlu0 %424
    %v426 = vsel %vm133, %v422, 0.0
    %427 = vadd.xlane.f32.xlu0 %v426
    %v428 = vpop.xlane.xlu0 %427
    %v429 = vmul.f32 %v425, %v245
    %v430 = vmul.f32 %v428, %v245
    %v431 = vadd.f32 %v429, 1e-05
    %v432 = vadd.f32 %v430, 1e-05
    %v433 = vrsqrt.pop %v431
    %v434 = vrsqrt.pop %v432
    %v435 = vmul.f32 %v419, %v433
    %v436 = vmul.f32 %v420, %v434
    %v437 = vlaneseq
    %v438 = vshrl.u32 %v437, 7
    %v439 = vsub.s32 4, %v438
    %v440 = vrot.slane %v60, %v439
    %v441 = vmul.f32 %v435, %v440
    %v442 = vmul.f32 %v436, %v440
    %v443 = vlaneseq
    %v444 = vshrl.u32 %v443, 7
    %v445 = vsub.s32 5, %v444
    %v446 = vrot.slane %v60, %v445
    %v447 = vadd.f32 %v441, %v446
    %v448 = vadd.f32 %v442, %v446
    %v449 = vld [vmem:[%s1] sm:$0x3]
    %vm450 = vcmask 15360
    %v452 = vsel %vm450, %v58, 0
    %v455 = vsel %vm450, %v59, 0
    %vm457 = vcmask 1041408
    %v459 = vsel %vm457, %v449, 0
    %461 = vmatprep.subr.mxu0 0.0
    %462 = vmatpush1.msra.mxu0 0.0
    %463 = vmatprep.subr.mxu0 0.0
    %464 = vmatpush1.msra.mxu0 0.0
    %465 = vmatprep.subr.mxu0 0.0
    %466 = vmatpush1.msra.mxu0 0.0
    %467 = vmatprep.subr.mxu0 0.0
    %468 = vmatpush1.msra.mxu0 0.0
    %469 = vmatprep.subr.mxu0 0.0
    %470 = vmatpush1.msra.mxu0 0.0
    %471 = vmatprep.subr.mxu0 0.0
    %472 = vmatpush1.msra.mxu0 0.0
    %473 = vmatprep.subr.mxu0 0.0
    %474 = vmatpush1.msra.mxu0 0.0
    %475 = vmatprep.subr.mxu0 0.0
    %476 = vmatpush1.msra.mxu0 0.0
    %477 = vmatprep.subr.mxu0 0.0
    %478 = vmatpush1.msra.mxu0 0.0
    %479 = vmatprep.subr.mxu0 0.0
    %480 = vmatpush1.msra.mxu0 0.0
    %481 = vmatprep.subr.mxu0 0.0
    %482 = vmatpush1.msra.mxu0 0.0
    %483 = vmatprep.subr.mxu0 0.0
    %484 = vmatpush1.msra.mxu0 0.0
    %485 = vmatprep.subr.mxu0 0.0
    %486 = vmatpush1.msra.mxu0 0.0
    %487 = vmatprep.subr.mxu0 0.0
    %488 = vmatpush1.msra.mxu0 0.0
    %489 = vmatprep.subr.mxu0 0.0
    %490 = vmatpush1.msra.mxu0 0.0
    %491 = vmatprep.subr.mxu0 0.0
    %492 = vmatpush1.msra.mxu0 %v459
    %493 = vmatprep.subr.mxu0 0.0
    %494 = vmatpush2.msra.mxu0 0.0
    %495 = vmatprep.subr.mxu0 0.0
    %496 = vmatpush2.msra.mxu0 0.0
    %497 = vmatprep.subr.mxu0 0.0
    %498 = vmatpush2.msra.mxu0 0.0
    %499 = vmatprep.subr.mxu0 0.0
    %500 = vmatpush2.msra.mxu0 0.0
    %501 = vmatprep.subr.mxu0 0.0
    %502 = vmatpush2.msra.mxu0 0.0
    %503 = vmatprep.subr.mxu0 0.0
    %504 = vmatpush2.msra.mxu0 0.0
    %505 = vmatprep.subr.mxu0 0.0
    %506 = vmatpush2.msra.mxu0 0.0
    %507 = vmatprep.subr.mxu0 0.0
    %508 = vmatpush2.msra.mxu0 0.0
    %509 = vmatprep.subr.mxu0 0.0
    %510 = vmatpush2.msra.mxu0 0.0
    %511 = vmatprep.subr.mxu0 0.0
    %512 = vmatpush2.msra.mxu0 0.0
    %513 = vmatprep.subr.mxu0 0.0
    %514 = vmatpush2.msra.mxu0 0.0
    %515 = vmatprep.subr.mxu0 0.0
    %516 = vmatpush2.msra.mxu0 0.0
    %517 = vmatprep.subr.mxu0 0.0
    %518 = vmatpush2.msra.mxu0 0.0
    %519 = vmatprep.subr.mxu0 0.0
    %520 = vmatpush2.msra.mxu0 0.0
    %521 = vmatprep.subr.mxu0 0.0
    %522 = vmatpush2.msra.mxu0 0.0
    %523 = vmatprep.subr.mxu0 0.0
    %524 = vmatpush2.msra.mxu0 0.0
    %525 = vmatprep.mubr.f32.mxu0 0.0
    %526 = vmatmul.mubr.f32.gmra.mxu0 %v452
    %v527 = vpop.f32.mrf.mxu0
    %v528 = vadd.f32 0.0, %v527
    %v529 = vpop.f32.mrf.mxu0
    %530 = vmatprep.mubr.f32.mxu0 0.0
    %531 = vmatmul.mubr.f32.gmra.mxu0 %v455
    %v532 = vpop.f32.mrf.mxu0
    %v533 = vadd.f32 0.0, %v532
    %v534 = vpop.f32.mrf.mxu0
    %535 = vdwg.mxu0
    %s536 = scalar_lea.vmem %s1, 2
    %v537 = vld [vmem:[%s536] sm:$0x3]
    %v539 = vsel %vm457, %v537, 0
    %541 = vmatprep.subr.mxu0 0.0
    %542 = vmatpush1.msra.mxu0 0.0
    %543 = vmatprep.subr.mxu0 0.0
    %544 = vmatpush1.msra.mxu0 0.0
    %545 = vmatprep.subr.mxu0 0.0
    %546 = vmatpush1.msra.mxu0 0.0
    %547 = vmatprep.subr.mxu0 0.0
    %548 = vmatpush1.msra.mxu0 0.0
    %549 = vmatprep.subr.mxu0 0.0
    %550 = vmatpush1.msra.mxu0 0.0
    %551 = vmatprep.subr.mxu0 0.0
    %552 = vmatpush1.msra.mxu0 0.0
    %553 = vmatprep.subr.mxu0 0.0
    %554 = vmatpush1.msra.mxu0 0.0
    %555 = vmatprep.subr.mxu0 0.0
    %556 = vmatpush1.msra.mxu0 0.0
    %557 = vmatprep.subr.mxu0 0.0
    %558 = vmatpush1.msra.mxu0 0.0
    %559 = vmatprep.subr.mxu0 0.0
    %560 = vmatpush1.msra.mxu0 0.0
    %561 = vmatprep.subr.mxu0 0.0
    %562 = vmatpush1.msra.mxu0 0.0
    %563 = vmatprep.subr.mxu0 0.0
    %564 = vmatpush1.msra.mxu0 0.0
    %565 = vmatprep.subr.mxu0 0.0
    %566 = vmatpush1.msra.mxu0 0.0
    %567 = vmatprep.subr.mxu0 0.0
    %568 = vmatpush1.msra.mxu0 0.0
    %569 = vmatprep.subr.mxu0 0.0
    %570 = vmatpush1.msra.mxu0 0.0
    %571 = vmatprep.subr.mxu0 0.0
    %572 = vmatpush1.msra.mxu0 %v539
    %573 = vmatprep.subr.mxu0 0.0
    %574 = vmatpush2.msra.mxu0 0.0
    %575 = vmatprep.subr.mxu0 0.0
    %576 = vmatpush2.msra.mxu0 0.0
    %577 = vmatprep.subr.mxu0 0.0
    %578 = vmatpush2.msra.mxu0 0.0
    %579 = vmatprep.subr.mxu0 0.0
    %580 = vmatpush2.msra.mxu0 0.0
    %581 = vmatprep.subr.mxu0 0.0
    %582 = vmatpush2.msra.mxu0 0.0
    %583 = vmatprep.subr.mxu0 0.0
    %584 = vmatpush2.msra.mxu0 0.0
    %585 = vmatprep.subr.mxu0 0.0
    %586 = vmatpush2.msra.mxu0 0.0
    %587 = vmatprep.subr.mxu0 0.0
    %588 = vmatpush2.msra.mxu0 0.0
    %589 = vmatprep.subr.mxu0 0.0
    %590 = vmatpush2.msra.mxu0 0.0
    %591 = vmatprep.subr.mxu0 0.0
    %592 = vmatpush2.msra.mxu0 0.0
    %593 = vmatprep.subr.mxu0 0.0
    %594 = vmatpush2.msra.mxu0 0.0
    %595 = vmatprep.subr.mxu0 0.0
    %596 = vmatpush2.msra.mxu0 0.0
    %597 = vmatprep.subr.mxu0 0.0
    %598 = vmatpush2.msra.mxu0 0.0
    %599 = vmatprep.subr.mxu0 0.0
    %600 = vmatpush2.msra.mxu0 0.0
    %601 = vmatprep.subr.mxu0 0.0
    %602 = vmatpush2.msra.mxu0 0.0
    %603 = vmatprep.subr.mxu0 0.0
    %604 = vmatpush2.msra.mxu0 0.0
    %605 = vmatprep.mubr.f32.mxu0 0.0
    %606 = vmatmul.mubr.f32.gmra.mxu0 %v452
    %v607 = vpop.f32.mrf.mxu0
    %v608 = vadd.f32 0.0, %v607
    %v609 = vpop.f32.mrf.mxu0
    %610 = vmatprep.mubr.f32.mxu0 0.0
    %611 = vmatmul.mubr.f32.gmra.mxu0 %v455
    %v612 = vpop.f32.mrf.mxu0
    %v613 = vadd.f32 0.0, %v612
    %v614 = vpop.f32.mrf.mxu0
    %615 = vdwg.mxu0
    %v616 = vmul.f32 %v447, %v528
    %v617 = vmul.f32 %v448, %v533
    %v618 = vadd.f32 %v616, %v608
    %v619 = vadd.f32 %v617, %v613
    %v620 = vlaneseq
    %v621 = vshrl.u32 %v620, 7
    %v622 = vsub.s32 6, %v621
    %v623 = vrot.slane %v60, %v622
    %v624 = vmul.f32 %v618, %v623
    %v625 = vmul.f32 %v619, %v623
    %v626 = vsel %vm133, %v624, 0.0
    %627 = vadd.xlane.f32.xlu0 %v626
    %v628 = vpop.xlane.xlu0 %627
    %v629 = vsel %vm133, %v625, 0.0
    %630 = vadd.xlane.f32.xlu0 %v629
    %v631 = vpop.xlane.xlu0 %630
    %s632 = sld [smem:[#allocation2 + $0x1]]
    %v633 = vstv %s632
    %v634 = vadd.f32 %v628, %v633
    %v635 = vadd.f32 %v631, %v633
    %s636 = scalar_lea.vmem %s5, 8
    %v637 = vld [vmem:[%s636] sm:$0x7f]
    %s638 = scalar_lea.vmem %s3, 96
    %v639 = vld [vmem:[%s638] sm:$0xff]
    %v640 = vld [vmem:[%s638 + $0x8] sm:$0xff]
    %v641 = vld [vmem:[%s638 + $0x10] sm:$0xff]
    %v642 = vld [vmem:[%s638 + $0x18] sm:$0xff]
    %v643 = vld [vmem:[%s638 + $0x20] sm:$0xff]
    %v644 = vld [vmem:[%s638 + $0x28] sm:$0xff]
    %v645 = vld [vmem:[%s638 + $0x30] sm:$0xff]
    %v646 = vld [vmem:[%s638 + $0x38] sm:$0xff]
    %v647 = vld [vmem:[%s638 + $0x40] sm:$0xff]
    %v648 = vld [vmem:[%s638 + $0x48] sm:$0xff]
    %v649 = vld [vmem:[%s638 + $0x50] sm:$0xff]
    %v650 = vld [vmem:[%s638 + $0x58] sm:$0xff]
    %v651 = vlaneseq
    %v652 = vshrl.u32 %v651, 7
    %v653 = vsub.s32 0, %v652
    %v654 = vrot.slane %v637, %v653
    %655 = vmatprep.subr.mxu0 0.0
    %656 = vmatpush1.msra.mxu0 0.0
    %657 = vmatprep.subr.mxu0 0.0
    %658 = vmatpush1.msra.mxu0 0.0
    %659 = vmatprep.subr.mxu0 0.0
    %660 = vmatpush1.msra.mxu0 0.0
    %661 = vmatprep.subr.mxu0 0.0
    %662 = vmatpush1.msra.mxu0 0.0
    %663 = vmatprep.subr.mxu0 0.0
    %664 = vmatpush1.msra.mxu0 %v650
    %665 = vmatprep.subr.mxu0 0.0
    %666 = vmatpush1.msra.mxu0 %v649
    %667 = vmatprep.subr.mxu0 0.0
    %668 = vmatpush1.msra.mxu0 %v648
    %669 = vmatprep.subr.mxu0 0.0
    %670 = vmatpush1.msra.mxu0 %v647
    %671 = vmatprep.subr.mxu0 0.0
    %672 = vmatpush1.msra.mxu0 %v646
    %673 = vmatprep.subr.mxu0 0.0
    %674 = vmatpush1.msra.mxu0 %v645
    %675 = vmatprep.subr.mxu0 0.0
    %676 = vmatpush1.msra.mxu0 %v644
    %677 = vmatprep.subr.mxu0 0.0
    %678 = vmatpush1.msra.mxu0 %v643
    %679 = vmatprep.subr.mxu0 0.0
    %680 = vmatpush1.msra.mxu0 %v642
    %681 = vmatprep.subr.mxu0 0.0
    %682 = vmatpush1.msra.mxu0 %v641
    %683 = vmatprep.subr.mxu0 0.0
    %684 = vmatpush1.msra.mxu0 %v640
    %685 = vmatprep.subr.mxu0 0.0
    %686 = vmatpush1.msra.mxu0 %v639
    %687 = vmatprep.subr.mxu0 0.0
    %688 = vmatpush2.msra.mxu0 0.0
    %689 = vmatprep.subr.mxu0 0.0
    %690 = vmatpush2.msra.mxu0 0.0
    %691 = vmatprep.subr.mxu0 0.0
    %692 = vmatpush2.msra.mxu0 0.0
    %693 = vmatprep.subr.mxu0 0.0
    %694 = vmatpush2.msra.mxu0 0.0
    %695 = vmatprep.subr.mxu0 0.0
    %696 = vmatpush2.msra.mxu0 0.0
    %697 = vmatprep.subr.mxu0 0.0
    %698 = vmatpush2.msra.mxu0 0.0
    %699 = vmatprep.subr.mxu0 0.0
    %700 = vmatpush2.msra.mxu0 0.0
    %701 = vmatprep.subr.mxu0 0.0
    %702 = vmatpush2.msra.mxu0 0.0
    %703 = vmatprep.subr.mxu0 0.0
    %704 = vmatpush2.msra.mxu0 0.0
    %705 = vmatprep.subr.mxu0 0.0
    %706 = vmatpush2.msra.mxu0 0.0
    %707 = vmatprep.subr.mxu0 0.0
    %708 = vmatpush2.msra.mxu0 0.0
    %709 = vmatprep.subr.mxu0 0.0
    %710 = vmatpush2.msra.mxu0 0.0
    %711 = vmatprep.subr.mxu0 0.0
    %712 = vmatpush2.msra.mxu0 0.0
    %713 = vmatprep.subr.mxu0 0.0
    %714 = vmatpush2.msra.mxu0 0.0
    %715 = vmatprep.subr.mxu0 0.0
    %716 = vmatpush2.msra.mxu0 0.0
    %717 = vmatprep.subr.mxu0 0.0
    %718 = vmatpush2.msra.mxu0 0.0
    %719 = vmatprep.mubr.f32.mxu0 0.0
    %720 = vmatmul.mubr.f32.gmra.mxu0 %v157
    %v721 = vpop.f32.mrf.mxu0
    %v722 = vadd.f32 %v654, %v721
    %v723 = vpop.f32.mrf.mxu0
    %724 = vmatprep.mubr.f32.mxu0 0.0
    %725 = vmatmul.mubr.f32.gmra.mxu0 %v160
    %v726 = vpop.f32.mrf.mxu0
    %v727 = vadd.f32 %v654, %v726
    %v728 = vpop.f32.mrf.mxu0
    %729 = vdwg.mxu0
    %v730 = vmax.f32 %v722, 0.0
    %v731 = vmax.f32 %v727, 0.0
    %v732 = vsel %vm133, %v730, 0.0
    %733 = vadd.xlane.f32.xlu0 %v732
    %v734 = vpop.xlane.xlu0 %733
    %v735 = vsel %vm133, %v731, 0.0
    %736 = vadd.xlane.f32.xlu0 %v735
    %v737 = vpop.xlane.xlu0 %736
    %v738 = vmul.f32 %v734, %v245
    %v739 = vmul.f32 %v737, %v245
    %v740 = vsub.f32 %v730, %v738
    %v741 = vsub.f32 %v731, %v739
    %v742 = vmul.f32 %v740, %v740
    %v743 = vmul.f32 %v741, %v741
    %v744 = vsel %vm133, %v742, 0.0
    %745 = vadd.xlane.f32.xlu0 %v744
    %v746 = vpop.xlane.xlu0 %745
    %v747 = vsel %vm133, %v743, 0.0
    %748 = vadd.xlane.f32.xlu0 %v747
    %v749 = vpop.xlane.xlu0 %748
    %v750 = vmul.f32 %v746, %v245
    %v751 = vmul.f32 %v749, %v245
    %v752 = vadd.f32 %v750, 1e-05
    %v753 = vadd.f32 %v751, 1e-05
    %v754 = vrsqrt.pop %v752
    %v755 = vrsqrt.pop %v753
    %v756 = vmul.f32 %v740, %v754
    %v757 = vmul.f32 %v741, %v755
    %v758 = vlaneseq
    %v759 = vshrl.u32 %v758, 7
    %v760 = vsub.s32 1, %v759
    %v761 = vrot.slane %v637, %v760
    %v762 = vmul.f32 %v756, %v761
    %v763 = vmul.f32 %v757, %v761
    %v764 = vlaneseq
    %v765 = vshrl.u32 %v764, 7
    %v766 = vsub.s32 2, %v765
    %v767 = vrot.slane %v637, %v766
    %v768 = vadd.f32 %v762, %v767
    %v769 = vadd.f32 %v763, %v767
    %v770 = vrot.slane %v768, 7
    %v771 = vrot.slane %v769, 7
    %v772 = vsel %vm65, %v770, %v771
    %v773 = vsel %vm65, %v771, %v770
    %v774 = vmul.f32 %v773, %v73
    %v775 = vmul.f32 %v772, %v78
    %v776 = vmul.f32 %v768, %v88
    %v777 = vmul.f32 %v769, %v93
    %v778 = vrot.slane %v768, 1
    %v779 = vrot.slane %v769, 1
    %v780 = vsel %vm99, %v778, %v779
    %v781 = vsel %vm99, %v779, %v778
    %v782 = vmul.f32 %v780, %v108
    %v783 = vmul.f32 %v781, %v113
    %786 = vrot.lane.b32.xlu0 %v776, 32
    %v787 = vpop.permute.xlu0 %786
    %788 = vrot.lane.b32.xlu0 %v777, 32
    %v789 = vpop.permute.xlu0 %788
    %794 = vrot.lane.b32.xlu0 %v782, 64
    %v795 = vpop.permute.xlu0 %794
    %796 = vrot.lane.b32.xlu0 %v783, 64
    %v797 = vpop.permute.xlu0 %796
    %v800 = vsel %vm133, %v774, %v787
    %v801 = vsel %vm133, %v775, %v789
    %v802 = vsel %vm136, %v800, %v795
    %v803 = vsel %vm136, %v801, %v797
    %s804 = scalar_lea.vmem %s4, 96
    %v805 = vld [vmem:[%s804] sm:$0xff]
    %v806 = vld [vmem:[%s804 + $0x8] sm:$0xff]
    %v807 = vld [vmem:[%s804 + $0x10] sm:$0xff]
    %v808 = vld [vmem:[%s804 + $0x18] sm:$0xff]
    %v809 = vld [vmem:[%s804 + $0x20] sm:$0xff]
    %v810 = vld [vmem:[%s804 + $0x28] sm:$0xff]
    %v811 = vld [vmem:[%s804 + $0x30] sm:$0xff]
    %v812 = vld [vmem:[%s804 + $0x38] sm:$0xff]
    %v813 = vld [vmem:[%s804 + $0x40] sm:$0xff]
    %v814 = vld [vmem:[%s804 + $0x48] sm:$0xff]
    %v815 = vld [vmem:[%s804 + $0x50] sm:$0xff]
    %v816 = vld [vmem:[%s804 + $0x58] sm:$0xff]
    %v817 = vlaneseq
    %v818 = vshrl.u32 %v817, 7
    %v819 = vsub.s32 3, %v818
    %v820 = vrot.slane %v637, %v819
    %v822 = vsel %vm155, %v802, 0
    %v825 = vsel %vm155, %v803, 0
    %827 = vmatprep.subr.mxu0 0.0
    %828 = vmatpush1.msra.mxu0 0.0
    %829 = vmatprep.subr.mxu0 0.0
    %830 = vmatpush1.msra.mxu0 0.0
    %831 = vmatprep.subr.mxu0 0.0
    %832 = vmatpush1.msra.mxu0 0.0
    %833 = vmatprep.subr.mxu0 0.0
    %834 = vmatpush1.msra.mxu0 0.0
    %835 = vmatprep.subr.mxu0 0.0
    %836 = vmatpush1.msra.mxu0 %v816
    %837 = vmatprep.subr.mxu0 0.0
    %838 = vmatpush1.msra.mxu0 %v815
    %839 = vmatprep.subr.mxu0 0.0
    %840 = vmatpush1.msra.mxu0 %v814
    %841 = vmatprep.subr.mxu0 0.0
    %842 = vmatpush1.msra.mxu0 %v813
    %843 = vmatprep.subr.mxu0 0.0
    %844 = vmatpush1.msra.mxu0 %v812
    %845 = vmatprep.subr.mxu0 0.0
    %846 = vmatpush1.msra.mxu0 %v811
    %847 = vmatprep.subr.mxu0 0.0
    %848 = vmatpush1.msra.mxu0 %v810
    %849 = vmatprep.subr.mxu0 0.0
    %850 = vmatpush1.msra.mxu0 %v809
    %851 = vmatprep.subr.mxu0 0.0
    %852 = vmatpush1.msra.mxu0 %v808
    %853 = vmatprep.subr.mxu0 0.0
    %854 = vmatpush1.msra.mxu0 %v807
    %855 = vmatprep.subr.mxu0 0.0
    %856 = vmatpush1.msra.mxu0 %v806
    %857 = vmatprep.subr.mxu0 0.0
    %858 = vmatpush1.msra.mxu0 %v805
    %859 = vmatprep.subr.mxu0 0.0
    %860 = vmatpush2.msra.mxu0 0.0
    %861 = vmatprep.subr.mxu0 0.0
    %862 = vmatpush2.msra.mxu0 0.0
    %863 = vmatprep.subr.mxu0 0.0
    %864 = vmatpush2.msra.mxu0 0.0
    %865 = vmatprep.subr.mxu0 0.0
    %866 = vmatpush2.msra.mxu0 0.0
    %867 = vmatprep.subr.mxu0 0.0
    %868 = vmatpush2.msra.mxu0 0.0
    %869 = vmatprep.subr.mxu0 0.0
    %870 = vmatpush2.msra.mxu0 0.0
    %871 = vmatprep.subr.mxu0 0.0
    %872 = vmatpush2.msra.mxu0 0.0
    %873 = vmatprep.subr.mxu0 0.0
    %874 = vmatpush2.msra.mxu0 0.0
    %875 = vmatprep.subr.mxu0 0.0
    %876 = vmatpush2.msra.mxu0 0.0
    %877 = vmatprep.subr.mxu0 0.0
    %878 = vmatpush2.msra.mxu0 0.0
    %879 = vmatprep.subr.mxu0 0.0
    %880 = vmatpush2.msra.mxu0 0.0
    %881 = vmatprep.subr.mxu0 0.0
    %882 = vmatpush2.msra.mxu0 0.0
    %883 = vmatprep.subr.mxu0 0.0
    %884 = vmatpush2.msra.mxu0 0.0
    %885 = vmatprep.subr.mxu0 0.0
    %886 = vmatpush2.msra.mxu0 0.0
    %887 = vmatprep.subr.mxu0 0.0
    %888 = vmatpush2.msra.mxu0 0.0
    %889 = vmatprep.subr.mxu0 0.0
    %890 = vmatpush2.msra.mxu0 0.0
    %891 = vmatprep.mubr.f32.mxu0 0.0
    %892 = vmatmul.mubr.f32.gmra.mxu0 %v822
    %v893 = vpop.f32.mrf.mxu0
    %v894 = vadd.f32 %v820, %v893
    %v895 = vpop.f32.mrf.mxu0
    %896 = vmatprep.mubr.f32.mxu0 0.0
    %897 = vmatmul.mubr.f32.gmra.mxu0 %v825
    %v898 = vpop.f32.mrf.mxu0
    %v899 = vadd.f32 %v820, %v898
    %v900 = vpop.f32.mrf.mxu0
    %901 = vdwg.mxu0
    %v902 = vmax.f32 %v894, 0.0
    %v903 = vmax.f32 %v899, 0.0
    %v904 = vsel %vm133, %v902, 0.0
    %905 = vadd.xlane.f32.xlu0 %v904
    %v906 = vpop.xlane.xlu0 %905
    %v907 = vsel %vm133, %v903, 0.0
    %908 = vadd.xlane.f32.xlu0 %v907
    %v909 = vpop.xlane.xlu0 %908
    %v910 = vmul.f32 %v906, %v245
    %v911 = vmul.f32 %v909, %v245
    %v912 = vsub.f32 %v902, %v910
    %v913 = vsub.f32 %v903, %v911
    %v914 = vmul.f32 %v912, %v912
    %v915 = vmul.f32 %v913, %v913
    %v916 = vsel %vm133, %v914, 0.0
    %917 = vadd.xlane.f32.xlu0 %v916
    %v918 = vpop.xlane.xlu0 %917
    %v919 = vsel %vm133, %v915, 0.0
    %920 = vadd.xlane.f32.xlu0 %v919
    %v921 = vpop.xlane.xlu0 %920
    %v922 = vmul.f32 %v918, %v245
    %v923 = vmul.f32 %v921, %v245
    %v924 = vadd.f32 %v922, 1e-05
    %v925 = vadd.f32 %v923, 1e-05
    %v926 = vrsqrt.pop %v924
    %v927 = vrsqrt.pop %v925
    %v928 = vmul.f32 %v912, %v926
    %v929 = vmul.f32 %v913, %v927
    %v930 = vlaneseq
    %v931 = vshrl.u32 %v930, 7
    %v932 = vsub.s32 4, %v931
    %v933 = vrot.slane %v637, %v932
    %v934 = vmul.f32 %v928, %v933
    %v935 = vmul.f32 %v929, %v933
    %v936 = vlaneseq
    %v937 = vshrl.u32 %v936, 7
    %v938 = vsub.s32 5, %v937
    %v939 = vrot.slane %v637, %v938
    %v940 = vadd.f32 %v934, %v939
    %v941 = vadd.f32 %v935, %v939
    %s942 = scalar_lea.vmem %s1, 4
    %v943 = vld [vmem:[%s942] sm:$0x3]
    %v945 = vsel %vm457, %v943, 0
    %947 = vmatprep.subr.mxu0 0.0
    %948 = vmatpush1.msra.mxu0 0.0
    %949 = vmatprep.subr.mxu0 0.0
    %950 = vmatpush1.msra.mxu0 0.0
    %951 = vmatprep.subr.mxu0 0.0
    %952 = vmatpush1.msra.mxu0 0.0
    %953 = vmatprep.subr.mxu0 0.0
    %954 = vmatpush1.msra.mxu0 0.0
    %955 = vmatprep.subr.mxu0 0.0
    %956 = vmatpush1.msra.mxu0 0.0
    %957 = vmatprep.subr.mxu0 0.0
    %958 = vmatpush1.msra.mxu0 0.0
    %959 = vmatprep.subr.mxu0 0.0
    %960 = vmatpush1.msra.mxu0 0.0
    %961 = vmatprep.subr.mxu0 0.0
    %962 = vmatpush1.msra.mxu0 0.0
    %963 = vmatprep.subr.mxu0 0.0
    %964 = vmatpush1.msra.mxu0 0.0
    %965 = vmatprep.subr.mxu0 0.0
    %966 = vmatpush1.msra.mxu0 0.0
    %967 = vmatprep.subr.mxu0 0.0
    %968 = vmatpush1.msra.mxu0 0.0
    %969 = vmatprep.subr.mxu0 0.0
    %970 = vmatpush1.msra.mxu0 0.0
    %971 = vmatprep.subr.mxu0 0.0
    %972 = vmatpush1.msra.mxu0 0.0
    %973 = vmatprep.subr.mxu0 0.0
    %974 = vmatpush1.msra.mxu0 0.0
    %975 = vmatprep.subr.mxu0 0.0
    %976 = vmatpush1.msra.mxu0 0.0
    %977 = vmatprep.subr.mxu0 0.0
    %978 = vmatpush1.msra.mxu0 %v945
    %979 = vmatprep.subr.mxu0 0.0
    %980 = vmatpush2.msra.mxu0 0.0
    %981 = vmatprep.subr.mxu0 0.0
    %982 = vmatpush2.msra.mxu0 0.0
    %983 = vmatprep.subr.mxu0 0.0
    %984 = vmatpush2.msra.mxu0 0.0
    %985 = vmatprep.subr.mxu0 0.0
    %986 = vmatpush2.msra.mxu0 0.0
    %987 = vmatprep.subr.mxu0 0.0
    %988 = vmatpush2.msra.mxu0 0.0
    %989 = vmatprep.subr.mxu0 0.0
    %990 = vmatpush2.msra.mxu0 0.0
    %991 = vmatprep.subr.mxu0 0.0
    %992 = vmatpush2.msra.mxu0 0.0
    %993 = vmatprep.subr.mxu0 0.0
    %994 = vmatpush2.msra.mxu0 0.0
    %995 = vmatprep.subr.mxu0 0.0
    %996 = vmatpush2.msra.mxu0 0.0
    %997 = vmatprep.subr.mxu0 0.0
    %998 = vmatpush2.msra.mxu0 0.0
    %999 = vmatprep.subr.mxu0 0.0
    %1000 = vmatpush2.msra.mxu0 0.0
    %1001 = vmatprep.subr.mxu0 0.0
    %1002 = vmatpush2.msra.mxu0 0.0
    %1003 = vmatprep.subr.mxu0 0.0
    %1004 = vmatpush2.msra.mxu0 0.0
    %1005 = vmatprep.subr.mxu0 0.0
    %1006 = vmatpush2.msra.mxu0 0.0
    %1007 = vmatprep.subr.mxu0 0.0
    %1008 = vmatpush2.msra.mxu0 0.0
    %1009 = vmatprep.subr.mxu0 0.0
    %1010 = vmatpush2.msra.mxu0 0.0
    %1011 = vmatprep.mubr.f32.mxu0 0.0
    %1012 = vmatmul.mubr.f32.gmra.mxu0 %v452
    %v1013 = vpop.f32.mrf.mxu0
    %v1014 = vadd.f32 0.0, %v1013
    %v1015 = vpop.f32.mrf.mxu0
    %1016 = vmatprep.mubr.f32.mxu0 0.0
    %1017 = vmatmul.mubr.f32.gmra.mxu0 %v455
    %v1018 = vpop.f32.mrf.mxu0
    %v1019 = vadd.f32 0.0, %v1018
    %v1020 = vpop.f32.mrf.mxu0
    %1021 = vdwg.mxu0
    %s1022 = scalar_lea.vmem %s1, 6
    %v1023 = vld [vmem:[%s1022] sm:$0x3]
    %v1025 = vsel %vm457, %v1023, 0
    %1027 = vmatprep.subr.mxu0 0.0
    %1028 = vmatpush1.msra.mxu0 0.0
    %1029 = vmatprep.subr.mxu0 0.0
    %1030 = vmatpush1.msra.mxu0 0.0
    %1031 = vmatprep.subr.mxu0 0.0
    %1032 = vmatpush1.msra.mxu0 0.0
    %1033 = vmatprep.subr.mxu0 0.0
    %1034 = vmatpush1.msra.mxu0 0.0
    %1035 = vmatprep.subr.mxu0 0.0
    %1036 = vmatpush1.msra.mxu0 0.0
    %1037 = vmatprep.subr.mxu0 0.0
    %1038 = vmatpush1.msra.mxu0 0.0
    %1039 = vmatprep.subr.mxu0 0.0
    %1040 = vmatpush1.msra.mxu0 0.0
    %1041 = vmatprep.subr.mxu0 0.0
    %1042 = vmatpush1.msra.mxu0 0.0
    %1043 = vmatprep.subr.mxu0 0.0
    %1044 = vmatpush1.msra.mxu0 0.0
    %1045 = vmatprep.subr.mxu0 0.0
    %1046 = vmatpush1.msra.mxu0 0.0
    %1047 = vmatprep.subr.mxu0 0.0
    %1048 = vmatpush1.msra.mxu0 0.0
    %1049 = vmatprep.subr.mxu0 0.0
    %1050 = vmatpush1.msra.mxu0 0.0
    %1051 = vmatprep.subr.mxu0 0.0
    %1052 = vmatpush1.msra.mxu0 0.0
    %1053 = vmatprep.subr.mxu0 0.0
    %1054 = vmatpush1.msra.mxu0 0.0
    %1055 = vmatprep.subr.mxu0 0.0
    %1056 = vmatpush1.msra.mxu0 0.0
    %1057 = vmatprep.subr.mxu0 0.0
    %1058 = vmatpush1.msra.mxu0 %v1025
    %1059 = vmatprep.subr.mxu0 0.0
    %1060 = vmatpush2.msra.mxu0 0.0
    %1061 = vmatprep.subr.mxu0 0.0
    %1062 = vmatpush2.msra.mxu0 0.0
    %1063 = vmatprep.subr.mxu0 0.0
    %1064 = vmatpush2.msra.mxu0 0.0
    %1065 = vmatprep.subr.mxu0 0.0
    %1066 = vmatpush2.msra.mxu0 0.0
    %1067 = vmatprep.subr.mxu0 0.0
    %1068 = vmatpush2.msra.mxu0 0.0
    %1069 = vmatprep.subr.mxu0 0.0
    %1070 = vmatpush2.msra.mxu0 0.0
    %1071 = vmatprep.subr.mxu0 0.0
    %1072 = vmatpush2.msra.mxu0 0.0
    %1073 = vmatprep.subr.mxu0 0.0
    %1074 = vmatpush2.msra.mxu0 0.0
    %1075 = vmatprep.subr.mxu0 0.0
    %1076 = vmatpush2.msra.mxu0 0.0
    %1077 = vmatprep.subr.mxu0 0.0
    %1078 = vmatpush2.msra.mxu0 0.0
    %1079 = vmatprep.subr.mxu0 0.0
    %1080 = vmatpush2.msra.mxu0 0.0
    %1081 = vmatprep.subr.mxu0 0.0
    %1082 = vmatpush2.msra.mxu0 0.0
    %1083 = vmatprep.subr.mxu0 0.0
    %1084 = vmatpush2.msra.mxu0 0.0
    %1085 = vmatprep.subr.mxu0 0.0
    %1086 = vmatpush2.msra.mxu0 0.0
    %1087 = vmatprep.subr.mxu0 0.0
    %1088 = vmatpush2.msra.mxu0 0.0
    %1089 = vmatprep.subr.mxu0 0.0
    %1090 = vmatpush2.msra.mxu0 0.0
    %1091 = vmatprep.mubr.f32.mxu0 0.0
    %1092 = vmatmul.mubr.f32.gmra.mxu0 %v452
    %v1093 = vpop.f32.mrf.mxu0
    %v1094 = vadd.f32 0.0, %v1093
    %v1095 = vpop.f32.mrf.mxu0
    %1096 = vmatprep.mubr.f32.mxu0 0.0
    %1097 = vmatmul.mubr.f32.gmra.mxu0 %v455
    %v1098 = vpop.f32.mrf.mxu0
    %v1099 = vadd.f32 0.0, %v1098
    %v1100 = vpop.f32.mrf.mxu0
    %1101 = vdwg.mxu0
    %v1102 = vmul.f32 %v940, %v1014
    %v1103 = vmul.f32 %v941, %v1019
    %v1104 = vadd.f32 %v1102, %v1094
    %v1105 = vadd.f32 %v1103, %v1099
    %v1106 = vlaneseq
    %v1107 = vshrl.u32 %v1106, 7
    %v1108 = vsub.s32 6, %v1107
    %v1109 = vrot.slane %v637, %v1108
    %v1110 = vmul.f32 %v1104, %v1109
    %v1111 = vmul.f32 %v1105, %v1109
    %v1112 = vsel %vm133, %v1110, 0.0
    %1113 = vadd.xlane.f32.xlu0 %v1112
    %v1114 = vpop.xlane.xlu0 %1113
    %v1115 = vsel %vm133, %v1111, 0.0
    %1116 = vadd.xlane.f32.xlu0 %v1115
    %v1117 = vpop.xlane.xlu0 %1116
    %s1118 = sld [smem:[#allocation2 + $0x2]]
    %v1119 = vstv %s1118
    %v1120 = vadd.f32 %v1114, %v1119
    %v1121 = vadd.f32 %v1117, %v1119
    %v1122 = vld [vmem:[%s6] sm:$0xf]
    %v1123 = vlaneseq
    %v1124 = vshrl.u32 %v1123, 7
    %v1125 = vsub.s32 0, %v1124
    %v1126 = vrot.slane %v1122, %v1125
    %v1127 = vmul.f32 %v1120, %v1126
    %v1128 = vmul.f32 %v1121, %v1126
    %v1129 = vadd.f32 %v56, %v1127
    %v1130 = vadd.f32 %v57, %v1128
    %v1131 = vlaneseq
    %v1132 = vshrl.u32 %v1131, 7
    %v1133 = vsub.s32 1, %v1132
    %v1134 = vrot.slane %v1122, %v1133
    %v1135 = vadd.f32 %v1129, %v1134
    %v1136 = vadd.f32 %v1130, %v1134
    %s1137 = scalar_lea.vmem %s5, 16
    %v1138 = vld [vmem:[%s1137] sm:$0x7f]
    %v1139 = vrot.slane %v1135, 7
    %v1140 = vrot.slane %v1136, 7
    %v1141 = vsel %vm65, %v1139, %v1140
    %v1142 = vsel %vm65, %v1140, %v1139
    %v1143 = vmul.f32 %v1142, %v73
    %v1144 = vmul.f32 %v1141, %v78
    %v1145 = vmul.f32 %v1135, %v88
    %v1146 = vmul.f32 %v1136, %v93
    %v1147 = vrot.slane %v1135, 1
    %v1148 = vrot.slane %v1136, 1
    %v1149 = vsel %vm99, %v1147, %v1148
    %v1150 = vsel %vm99, %v1148, %v1147
    %v1151 = vmul.f32 %v1149, %v108
    %v1152 = vmul.f32 %v1150, %v113
    %1155 = vrot.lane.b32.xlu0 %v1145, 32
    %v1156 = vpop.permute.xlu0 %1155
    %1157 = vrot.lane.b32.xlu0 %v1146, 32
    %v1158 = vpop.permute.xlu0 %1157
    %1163 = vrot.lane.b32.xlu0 %v1151, 64
    %v1164 = vpop.permute.xlu0 %1163
    %1165 = vrot.lane.b32.xlu0 %v1152, 64
    %v1166 = vpop.permute.xlu0 %1165
    %v1169 = vsel %vm133, %v1143, %v1156
    %v1170 = vsel %vm133, %v1144, %v1158
    %v1171 = vsel %vm136, %v1169, %v1164
    %v1172 = vsel %vm136, %v1170, %v1166
    %s1173 = scalar_lea.vmem %s3, 192
    %v1174 = vld [vmem:[%s1173] sm:$0xff]
    %v1175 = vld [vmem:[%s1173 + $0x8] sm:$0xff]
    %v1176 = vld [vmem:[%s1173 + $0x10] sm:$0xff]
    %v1177 = vld [vmem:[%s1173 + $0x18] sm:$0xff]
    %v1178 = vld [vmem:[%s1173 + $0x20] sm:$0xff]
    %v1179 = vld [vmem:[%s1173 + $0x28] sm:$0xff]
    %v1180 = vld [vmem:[%s1173 + $0x30] sm:$0xff]
    %v1181 = vld [vmem:[%s1173 + $0x38] sm:$0xff]
    %v1182 = vld [vmem:[%s1173 + $0x40] sm:$0xff]
    %v1183 = vld [vmem:[%s1173 + $0x48] sm:$0xff]
    %v1184 = vld [vmem:[%s1173 + $0x50] sm:$0xff]
    %v1185 = vld [vmem:[%s1173 + $0x58] sm:$0xff]
    %v1186 = vlaneseq
    %v1187 = vshrl.u32 %v1186, 7
    %v1188 = vsub.s32 0, %v1187
    %v1189 = vrot.slane %v1138, %v1188
    %v1191 = vsel %vm155, %v1171, 0
    %v1194 = vsel %vm155, %v1172, 0
    %1196 = vmatprep.subr.mxu0 0.0
    %1197 = vmatpush1.msra.mxu0 0.0
    %1198 = vmatprep.subr.mxu0 0.0
    %1199 = vmatpush1.msra.mxu0 0.0
    %1200 = vmatprep.subr.mxu0 0.0
    %1201 = vmatpush1.msra.mxu0 0.0
    %1202 = vmatprep.subr.mxu0 0.0
    %1203 = vmatpush1.msra.mxu0 0.0
    %1204 = vmatprep.subr.mxu0 0.0
    %1205 = vmatpush1.msra.mxu0 %v1185
    %1206 = vmatprep.subr.mxu0 0.0
    %1207 = vmatpush1.msra.mxu0 %v1184
    %1208 = vmatprep.subr.mxu0 0.0
    %1209 = vmatpush1.msra.mxu0 %v1183
    %1210 = vmatprep.subr.mxu0 0.0
    %1211 = vmatpush1.msra.mxu0 %v1182
    %1212 = vmatprep.subr.mxu0 0.0
    %1213 = vmatpush1.msra.mxu0 %v1181
    %1214 = vmatprep.subr.mxu0 0.0
    %1215 = vmatpush1.msra.mxu0 %v1180
    %1216 = vmatprep.subr.mxu0 0.0
    %1217 = vmatpush1.msra.mxu0 %v1179
    %1218 = vmatprep.subr.mxu0 0.0
    %1219 = vmatpush1.msra.mxu0 %v1178
    %1220 = vmatprep.subr.mxu0 0.0
    %1221 = vmatpush1.msra.mxu0 %v1177
    %1222 = vmatprep.subr.mxu0 0.0
    %1223 = vmatpush1.msra.mxu0 %v1176
    %1224 = vmatprep.subr.mxu0 0.0
    %1225 = vmatpush1.msra.mxu0 %v1175
    %1226 = vmatprep.subr.mxu0 0.0
    %1227 = vmatpush1.msra.mxu0 %v1174
    %1228 = vmatprep.subr.mxu0 0.0
    %1229 = vmatpush2.msra.mxu0 0.0
    %1230 = vmatprep.subr.mxu0 0.0
    %1231 = vmatpush2.msra.mxu0 0.0
    %1232 = vmatprep.subr.mxu0 0.0
    %1233 = vmatpush2.msra.mxu0 0.0
    %1234 = vmatprep.subr.mxu0 0.0
    %1235 = vmatpush2.msra.mxu0 0.0
    %1236 = vmatprep.subr.mxu0 0.0
    %1237 = vmatpush2.msra.mxu0 0.0
    %1238 = vmatprep.subr.mxu0 0.0
    %1239 = vmatpush2.msra.mxu0 0.0
    %1240 = vmatprep.subr.mxu0 0.0
    %1241 = vmatpush2.msra.mxu0 0.0
    %1242 = vmatprep.subr.mxu0 0.0
    %1243 = vmatpush2.msra.mxu0 0.0
    %1244 = vmatprep.subr.mxu0 0.0
    %1245 = vmatpush2.msra.mxu0 0.0
    %1246 = vmatprep.subr.mxu0 0.0
    %1247 = vmatpush2.msra.mxu0 0.0
    %1248 = vmatprep.subr.mxu0 0.0
    %1249 = vmatpush2.msra.mxu0 0.0
    %1250 = vmatprep.subr.mxu0 0.0
    %1251 = vmatpush2.msra.mxu0 0.0
    %1252 = vmatprep.subr.mxu0 0.0
    %1253 = vmatpush2.msra.mxu0 0.0
    %1254 = vmatprep.subr.mxu0 0.0
    %1255 = vmatpush2.msra.mxu0 0.0
    %1256 = vmatprep.subr.mxu0 0.0
    %1257 = vmatpush2.msra.mxu0 0.0
    %1258 = vmatprep.subr.mxu0 0.0
    %1259 = vmatpush2.msra.mxu0 0.0
    %1260 = vmatprep.mubr.f32.mxu0 0.0
    %1261 = vmatmul.mubr.f32.gmra.mxu0 %v1191
    %v1262 = vpop.f32.mrf.mxu0
    %v1263 = vadd.f32 %v1189, %v1262
    %v1264 = vpop.f32.mrf.mxu0
    %1265 = vmatprep.mubr.f32.mxu0 0.0
    %1266 = vmatmul.mubr.f32.gmra.mxu0 %v1194
    %v1267 = vpop.f32.mrf.mxu0
    %v1268 = vadd.f32 %v1189, %v1267
    %v1269 = vpop.f32.mrf.mxu0
    %1270 = vdwg.mxu0
    %v1271 = vmax.f32 %v1263, 0.0
    %v1272 = vmax.f32 %v1268, 0.0
    %v1273 = vsel %vm133, %v1271, 0.0
    %1274 = vadd.xlane.f32.xlu0 %v1273
    %v1275 = vpop.xlane.xlu0 %1274
    %v1276 = vsel %vm133, %v1272, 0.0
    %1277 = vadd.xlane.f32.xlu0 %v1276
    %v1278 = vpop.xlane.xlu0 %1277
    %v1279 = vmul.f32 %v1275, %v245
    %v1280 = vmul.f32 %v1278, %v245
    %v1281 = vsub.f32 %v1271, %v1279
    %v1282 = vsub.f32 %v1272, %v1280
    %v1283 = vmul.f32 %v1281, %v1281
    %v1284 = vmul.f32 %v1282, %v1282
    %v1285 = vsel %vm133, %v1283, 0.0
    %1286 = vadd.xlane.f32.xlu0 %v1285
    %v1287 = vpop.xlane.xlu0 %1286
    %v1288 = vsel %vm133, %v1284, 0.0
    %1289 = vadd.xlane.f32.xlu0 %v1288
    %v1290 = vpop.xlane.xlu0 %1289
    %v1291 = vmul.f32 %v1287, %v245
    %v1292 = vmul.f32 %v1290, %v245
    %v1293 = vadd.f32 %v1291, 1e-05
    %v1294 = vadd.f32 %v1292, 1e-05
    %v1295 = vrsqrt.pop %v1293
    %v1296 = vrsqrt.pop %v1294
    %v1297 = vmul.f32 %v1281, %v1295
    %v1298 = vmul.f32 %v1282, %v1296
    %v1299 = vlaneseq
    %v1300 = vshrl.u32 %v1299, 7
    %v1301 = vsub.s32 1, %v1300
    %v1302 = vrot.slane %v1138, %v1301
    %v1303 = vmul.f32 %v1297, %v1302
    %v1304 = vmul.f32 %v1298, %v1302
    %v1305 = vlaneseq
    %v1306 = vshrl.u32 %v1305, 7
    %v1307 = vsub.s32 2, %v1306
    %v1308 = vrot.slane %v1138, %v1307
    %v1309 = vadd.f32 %v1303, %v1308
    %v1310 = vadd.f32 %v1304, %v1308
    %v1311 = vrot.slane %v1309, 7
    %v1312 = vrot.slane %v1310, 7
    %v1313 = vsel %vm65, %v1311, %v1312
    %v1314 = vsel %vm65, %v1312, %v1311
    %v1315 = vmul.f32 %v1314, %v73
    %v1316 = vmul.f32 %v1313, %v78
    %v1317 = vmul.f32 %v1309, %v88
    %v1318 = vmul.f32 %v1310, %v93
    %v1319 = vrot.slane %v1309, 1
    %v1320 = vrot.slane %v1310, 1
    %v1321 = vsel %vm99, %v1319, %v1320
    %v1322 = vsel %vm99, %v1320, %v1319
    %v1323 = vmul.f32 %v1321, %v108
    %v1324 = vmul.f32 %v1322, %v113
    %1327 = vrot.lane.b32.xlu0 %v1317, 32
    %v1328 = vpop.permute.xlu0 %1327
    %1329 = vrot.lane.b32.xlu0 %v1318, 32
    %v1330 = vpop.permute.xlu0 %1329
    %1335 = vrot.lane.b32.xlu0 %v1323, 64
    %v1336 = vpop.permute.xlu0 %1335
    %1337 = vrot.lane.b32.xlu0 %v1324, 64
    %v1338 = vpop.permute.xlu0 %1337
    %v1341 = vsel %vm133, %v1315, %v1328
    %v1342 = vsel %vm133, %v1316, %v1330
    %v1343 = vsel %vm136, %v1341, %v1336
    %v1344 = vsel %vm136, %v1342, %v1338
    %s1345 = scalar_lea.vmem %s4, 192
    %v1346 = vld [vmem:[%s1345] sm:$0xff]
    %v1347 = vld [vmem:[%s1345 + $0x8] sm:$0xff]
    %v1348 = vld [vmem:[%s1345 + $0x10] sm:$0xff]
    %v1349 = vld [vmem:[%s1345 + $0x18] sm:$0xff]
    %v1350 = vld [vmem:[%s1345 + $0x20] sm:$0xff]
    %v1351 = vld [vmem:[%s1345 + $0x28] sm:$0xff]
    %v1352 = vld [vmem:[%s1345 + $0x30] sm:$0xff]
    %v1353 = vld [vmem:[%s1345 + $0x38] sm:$0xff]
    %v1354 = vld [vmem:[%s1345 + $0x40] sm:$0xff]
    %v1355 = vld [vmem:[%s1345 + $0x48] sm:$0xff]
    %v1356 = vld [vmem:[%s1345 + $0x50] sm:$0xff]
    %v1357 = vld [vmem:[%s1345 + $0x58] sm:$0xff]
    %v1358 = vlaneseq
    %v1359 = vshrl.u32 %v1358, 7
    %v1360 = vsub.s32 3, %v1359
    %v1361 = vrot.slane %v1138, %v1360
    %v1363 = vsel %vm155, %v1343, 0
    %v1366 = vsel %vm155, %v1344, 0
    %1368 = vmatprep.subr.mxu0 0.0
    %1369 = vmatpush1.msra.mxu0 0.0
    %1370 = vmatprep.subr.mxu0 0.0
    %1371 = vmatpush1.msra.mxu0 0.0
    %1372 = vmatprep.subr.mxu0 0.0
    %1373 = vmatpush1.msra.mxu0 0.0
    %1374 = vmatprep.subr.mxu0 0.0
    %1375 = vmatpush1.msra.mxu0 0.0
    %1376 = vmatprep.subr.mxu0 0.0
    %1377 = vmatpush1.msra.mxu0 %v1357
    %1378 = vmatprep.subr.mxu0 0.0
    %1379 = vmatpush1.msra.mxu0 %v1356
    %1380 = vmatprep.subr.mxu0 0.0
    %1381 = vmatpush1.msra.mxu0 %v1355
    %1382 = vmatprep.subr.mxu0 0.0
    %1383 = vmatpush1.msra.mxu0 %v1354
    %1384 = vmatprep.subr.mxu0 0.0
    %1385 = vmatpush1.msra.mxu0 %v1353
    %1386 = vmatprep.subr.mxu0 0.0
    %1387 = vmatpush1.msra.mxu0 %v1352
    %1388 = vmatprep.subr.mxu0 0.0
    %1389 = vmatpush1.msra.mxu0 %v1351
    %1390 = vmatprep.subr.mxu0 0.0
    %1391 = vmatpush1.msra.mxu0 %v1350
    %1392 = vmatprep.subr.mxu0 0.0
    %1393 = vmatpush1.msra.mxu0 %v1349
    %1394 = vmatprep.subr.mxu0 0.0
    %1395 = vmatpush1.msra.mxu0 %v1348
    %1396 = vmatprep.subr.mxu0 0.0
    %1397 = vmatpush1.msra.mxu0 %v1347
    %1398 = vmatprep.subr.mxu0 0.0
    %1399 = vmatpush1.msra.mxu0 %v1346
    %1400 = vmatprep.subr.mxu0 0.0
    %1401 = vmatpush2.msra.mxu0 0.0
    %1402 = vmatprep.subr.mxu0 0.0
    %1403 = vmatpush2.msra.mxu0 0.0
    %1404 = vmatprep.subr.mxu0 0.0
    %1405 = vmatpush2.msra.mxu0 0.0
    %1406 = vmatprep.subr.mxu0 0.0
    %1407 = vmatpush2.msra.mxu0 0.0
    %1408 = vmatprep.subr.mxu0 0.0
    %1409 = vmatpush2.msra.mxu0 0.0
    %1410 = vmatprep.subr.mxu0 0.0
    %1411 = vmatpush2.msra.mxu0 0.0
    %1412 = vmatprep.subr.mxu0 0.0
    %1413 = vmatpush2.msra.mxu0 0.0
    %1414 = vmatprep.subr.mxu0 0.0
    %1415 = vmatpush2.msra.mxu0 0.0
    %1416 = vmatprep.subr.mxu0 0.0
    %1417 = vmatpush2.msra.mxu0 0.0
    %1418 = vmatprep.subr.mxu0 0.0
    %1419 = vmatpush2.msra.mxu0 0.0
    %1420 = vmatprep.subr.mxu0 0.0
    %1421 = vmatpush2.msra.mxu0 0.0
    %1422 = vmatprep.subr.mxu0 0.0
    %1423 = vmatpush2.msra.mxu0 0.0
    %1424 = vmatprep.subr.mxu0 0.0
    %1425 = vmatpush2.msra.mxu0 0.0
    %1426 = vmatprep.subr.mxu0 0.0
    %1427 = vmatpush2.msra.mxu0 0.0
    %1428 = vmatprep.subr.mxu0 0.0
    %1429 = vmatpush2.msra.mxu0 0.0
    %1430 = vmatprep.subr.mxu0 0.0
    %1431 = vmatpush2.msra.mxu0 0.0
    %1432 = vmatprep.mubr.f32.mxu0 0.0
    %1433 = vmatmul.mubr.f32.gmra.mxu0 %v1363
    %v1434 = vpop.f32.mrf.mxu0
    %v1435 = vadd.f32 %v1361, %v1434
    %v1436 = vpop.f32.mrf.mxu0
    %1437 = vmatprep.mubr.f32.mxu0 0.0
    %1438 = vmatmul.mubr.f32.gmra.mxu0 %v1366
    %v1439 = vpop.f32.mrf.mxu0
    %v1440 = vadd.f32 %v1361, %v1439
    %v1441 = vpop.f32.mrf.mxu0
    %1442 = vdwg.mxu0
    %v1443 = vmax.f32 %v1435, 0.0
    %v1444 = vmax.f32 %v1440, 0.0
    %v1445 = vsel %vm133, %v1443, 0.0
    %1446 = vadd.xlane.f32.xlu0 %v1445
    %v1447 = vpop.xlane.xlu0 %1446
    %v1448 = vsel %vm133, %v1444, 0.0
    %1449 = vadd.xlane.f32.xlu0 %v1448
    %v1450 = vpop.xlane.xlu0 %1449
    %v1451 = vmul.f32 %v1447, %v245
    %v1452 = vmul.f32 %v1450, %v245
    %v1453 = vsub.f32 %v1443, %v1451
    %v1454 = vsub.f32 %v1444, %v1452
    %v1455 = vmul.f32 %v1453, %v1453
    %v1456 = vmul.f32 %v1454, %v1454
    %v1457 = vsel %vm133, %v1455, 0.0
    %1458 = vadd.xlane.f32.xlu0 %v1457
    %v1459 = vpop.xlane.xlu0 %1458
    %v1460 = vsel %vm133, %v1456, 0.0
    %1461 = vadd.xlane.f32.xlu0 %v1460
    %v1462 = vpop.xlane.xlu0 %1461
    %v1463 = vmul.f32 %v1459, %v245
    %v1464 = vmul.f32 %v1462, %v245
    %v1465 = vadd.f32 %v1463, 1e-05
    %v1466 = vadd.f32 %v1464, 1e-05
    %v1467 = vrsqrt.pop %v1465
    %v1468 = vrsqrt.pop %v1466
    %v1469 = vmul.f32 %v1453, %v1467
    %v1470 = vmul.f32 %v1454, %v1468
    %v1471 = vlaneseq
    %v1472 = vshrl.u32 %v1471, 7
    %v1473 = vsub.s32 4, %v1472
    %v1474 = vrot.slane %v1138, %v1473
    %v1475 = vmul.f32 %v1469, %v1474
    %v1476 = vmul.f32 %v1470, %v1474
    %v1477 = vlaneseq
    %v1478 = vshrl.u32 %v1477, 7
    %v1479 = vsub.s32 5, %v1478
    %v1480 = vrot.slane %v1138, %v1479
    %v1481 = vadd.f32 %v1475, %v1480
    %v1482 = vadd.f32 %v1476, %v1480
    %s1483 = scalar_lea.vmem %s1, 8
    %v1484 = vld [vmem:[%s1483] sm:$0x3]
    %v1486 = vsel %vm457, %v1484, 0
    %1488 = vmatprep.subr.mxu0 0.0
    %1489 = vmatpush1.msra.mxu0 0.0
    %1490 = vmatprep.subr.mxu0 0.0
    %1491 = vmatpush1.msra.mxu0 0.0
    %1492 = vmatprep.subr.mxu0 0.0
    %1493 = vmatpush1.msra.mxu0 0.0
    %1494 = vmatprep.subr.mxu0 0.0
    %1495 = vmatpush1.msra.mxu0 0.0
    %1496 = vmatprep.subr.mxu0 0.0
    %1497 = vmatpush1.msra.mxu0 0.0
    %1498 = vmatprep.subr.mxu0 0.0
    %1499 = vmatpush1.msra.mxu0 0.0
    %1500 = vmatprep.subr.mxu0 0.0
    %1501 = vmatpush1.msra.mxu0 0.0
    %1502 = vmatprep.subr.mxu0 0.0
    %1503 = vmatpush1.msra.mxu0 0.0
    %1504 = vmatprep.subr.mxu0 0.0
    %1505 = vmatpush1.msra.mxu0 0.0
    %1506 = vmatprep.subr.mxu0 0.0
    %1507 = vmatpush1.msra.mxu0 0.0
    %1508 = vmatprep.subr.mxu0 0.0
    %1509 = vmatpush1.msra.mxu0 0.0
    %1510 = vmatprep.subr.mxu0 0.0
    %1511 = vmatpush1.msra.mxu0 0.0
    %1512 = vmatprep.subr.mxu0 0.0
    %1513 = vmatpush1.msra.mxu0 0.0
    %1514 = vmatprep.subr.mxu0 0.0
    %1515 = vmatpush1.msra.mxu0 0.0
    %1516 = vmatprep.subr.mxu0 0.0
    %1517 = vmatpush1.msra.mxu0 0.0
    %1518 = vmatprep.subr.mxu0 0.0
    %1519 = vmatpush1.msra.mxu0 %v1486
    %1520 = vmatprep.subr.mxu0 0.0
    %1521 = vmatpush2.msra.mxu0 0.0
    %1522 = vmatprep.subr.mxu0 0.0
    %1523 = vmatpush2.msra.mxu0 0.0
    %1524 = vmatprep.subr.mxu0 0.0
    %1525 = vmatpush2.msra.mxu0 0.0
    %1526 = vmatprep.subr.mxu0 0.0
    %1527 = vmatpush2.msra.mxu0 0.0
    %1528 = vmatprep.subr.mxu0 0.0
    %1529 = vmatpush2.msra.mxu0 0.0
    %1530 = vmatprep.subr.mxu0 0.0
    %1531 = vmatpush2.msra.mxu0 0.0
    %1532 = vmatprep.subr.mxu0 0.0
    %1533 = vmatpush2.msra.mxu0 0.0
    %1534 = vmatprep.subr.mxu0 0.0
    %1535 = vmatpush2.msra.mxu0 0.0
    %1536 = vmatprep.subr.mxu0 0.0
    %1537 = vmatpush2.msra.mxu0 0.0
    %1538 = vmatprep.subr.mxu0 0.0
    %1539 = vmatpush2.msra.mxu0 0.0
    %1540 = vmatprep.subr.mxu0 0.0
    %1541 = vmatpush2.msra.mxu0 0.0
    %1542 = vmatprep.subr.mxu0 0.0
    %1543 = vmatpush2.msra.mxu0 0.0
    %1544 = vmatprep.subr.mxu0 0.0
    %1545 = vmatpush2.msra.mxu0 0.0
    %1546 = vmatprep.subr.mxu0 0.0
    %1547 = vmatpush2.msra.mxu0 0.0
    %1548 = vmatprep.subr.mxu0 0.0
    %1549 = vmatpush2.msra.mxu0 0.0
    %1550 = vmatprep.subr.mxu0 0.0
    %1551 = vmatpush2.msra.mxu0 0.0
    %1552 = vmatprep.mubr.f32.mxu0 0.0
    %1553 = vmatmul.mubr.f32.gmra.mxu0 %v452
    %v1554 = vpop.f32.mrf.mxu0
    %v1555 = vadd.f32 0.0, %v1554
    %v1556 = vpop.f32.mrf.mxu0
    %1557 = vmatprep.mubr.f32.mxu0 0.0
    %1558 = vmatmul.mubr.f32.gmra.mxu0 %v455
    %v1559 = vpop.f32.mrf.mxu0
    %v1560 = vadd.f32 0.0, %v1559
    %v1561 = vpop.f32.mrf.mxu0
    %1562 = vdwg.mxu0
    %s1563 = scalar_lea.vmem %s1, 10
    %v1564 = vld [vmem:[%s1563] sm:$0x3]
    %v1566 = vsel %vm457, %v1564, 0
    %1568 = vmatprep.subr.mxu0 0.0
    %1569 = vmatpush1.msra.mxu0 0.0
    %1570 = vmatprep.subr.mxu0 0.0
    %1571 = vmatpush1.msra.mxu0 0.0
    %1572 = vmatprep.subr.mxu0 0.0
    %1573 = vmatpush1.msra.mxu0 0.0
    %1574 = vmatprep.subr.mxu0 0.0
    %1575 = vmatpush1.msra.mxu0 0.0
    %1576 = vmatprep.subr.mxu0 0.0
    %1577 = vmatpush1.msra.mxu0 0.0
    %1578 = vmatprep.subr.mxu0 0.0
    %1579 = vmatpush1.msra.mxu0 0.0
    %1580 = vmatprep.subr.mxu0 0.0
    %1581 = vmatpush1.msra.mxu0 0.0
    %1582 = vmatprep.subr.mxu0 0.0
    %1583 = vmatpush1.msra.mxu0 0.0
    %1584 = vmatprep.subr.mxu0 0.0
    %1585 = vmatpush1.msra.mxu0 0.0
    %1586 = vmatprep.subr.mxu0 0.0
    %1587 = vmatpush1.msra.mxu0 0.0
    %1588 = vmatprep.subr.mxu0 0.0
    %1589 = vmatpush1.msra.mxu0 0.0
    %1590 = vmatprep.subr.mxu0 0.0
    %1591 = vmatpush1.msra.mxu0 0.0
    %1592 = vmatprep.subr.mxu0 0.0
    %1593 = vmatpush1.msra.mxu0 0.0
    %1594 = vmatprep.subr.mxu0 0.0
    %1595 = vmatpush1.msra.mxu0 0.0
    %1596 = vmatprep.subr.mxu0 0.0
    %1597 = vmatpush1.msra.mxu0 0.0
    %1598 = vmatprep.subr.mxu0 0.0
    %1599 = vmatpush1.msra.mxu0 %v1566
    %1600 = vmatprep.subr.mxu0 0.0
    %1601 = vmatpush2.msra.mxu0 0.0
    %1602 = vmatprep.subr.mxu0 0.0
    %1603 = vmatpush2.msra.mxu0 0.0
    %1604 = vmatprep.subr.mxu0 0.0
    %1605 = vmatpush2.msra.mxu0 0.0
    %1606 = vmatprep.subr.mxu0 0.0
    %1607 = vmatpush2.msra.mxu0 0.0
    %1608 = vmatprep.subr.mxu0 0.0
    %1609 = vmatpush2.msra.mxu0 0.0
    %1610 = vmatprep.subr.mxu0 0.0
    %1611 = vmatpush2.msra.mxu0 0.0
    %1612 = vmatprep.subr.mxu0 0.0
    %1613 = vmatpush2.msra.mxu0 0.0
    %1614 = vmatprep.subr.mxu0 0.0
    %1615 = vmatpush2.msra.mxu0 0.0
    %1616 = vmatprep.subr.mxu0 0.0
    %1617 = vmatpush2.msra.mxu0 0.0
    %1618 = vmatprep.subr.mxu0 0.0
    %1619 = vmatpush2.msra.mxu0 0.0
    %1620 = vmatprep.subr.mxu0 0.0
    %1621 = vmatpush2.msra.mxu0 0.0
    %1622 = vmatprep.subr.mxu0 0.0
    %1623 = vmatpush2.msra.mxu0 0.0
    %1624 = vmatprep.subr.mxu0 0.0
    %1625 = vmatpush2.msra.mxu0 0.0
    %1626 = vmatprep.subr.mxu0 0.0
    %1627 = vmatpush2.msra.mxu0 0.0
    %1628 = vmatprep.subr.mxu0 0.0
    %1629 = vmatpush2.msra.mxu0 0.0
    %1630 = vmatprep.subr.mxu0 0.0
    %1631 = vmatpush2.msra.mxu0 0.0
    %1632 = vmatprep.mubr.f32.mxu0 0.0
    %1633 = vmatmul.mubr.f32.gmra.mxu0 %v452
    %v1634 = vpop.f32.mrf.mxu0
    %v1635 = vadd.f32 0.0, %v1634
    %v1636 = vpop.f32.mrf.mxu0
    %1637 = vmatprep.mubr.f32.mxu0 0.0
    %1638 = vmatmul.mubr.f32.gmra.mxu0 %v455
    %v1639 = vpop.f32.mrf.mxu0
    %v1640 = vadd.f32 0.0, %v1639
    %v1641 = vpop.f32.mrf.mxu0
    %1642 = vdwg.mxu0
    %v1643 = vmul.f32 %v1481, %v1555
    %v1644 = vmul.f32 %v1482, %v1560
    %v1645 = vadd.f32 %v1643, %v1635
    %v1646 = vadd.f32 %v1644, %v1640
    %v1647 = vlaneseq
    %v1648 = vshrl.u32 %v1647, 7
    %v1649 = vsub.s32 6, %v1648
    %v1650 = vrot.slane %v1138, %v1649
    %v1651 = vmul.f32 %v1645, %v1650
    %v1652 = vmul.f32 %v1646, %v1650
    %v1653 = vsel %vm133, %v1651, 0.0
    %1654 = vadd.xlane.f32.xlu0 %v1653
    %v1655 = vpop.xlane.xlu0 %1654
    %v1656 = vsel %vm133, %v1652, 0.0
    %1657 = vadd.xlane.f32.xlu0 %v1656
    %v1658 = vpop.xlane.xlu0 %1657
    %s1659 = sld [smem:[#allocation2 + $0x3]]
    %v1660 = vstv %s1659
    %v1661 = vadd.f32 %v1655, %v1660
    %v1662 = vadd.f32 %v1658, %v1660
    %v1663 = vlaneseq
    %v1664 = vshrl.u32 %v1663, 7
    %v1665 = vsub.s32 2, %v1664
    %v1666 = vrot.slane %v1122, %v1665
    %v1667 = vmul.f32 %v1661, %v1666
    %v1668 = vmul.f32 %v1662, %v1666
    %v1669 = vadd.f32 %v1135, %v1667
    %v1670 = vadd.f32 %v1136, %v1668
    %v1671 = vlaneseq
    %v1672 = vshrl.u32 %v1671, 7
    %v1673 = vsub.s32 3, %v1672
    %v1674 = vrot.slane %v1122, %v1673
    %v1675 = vadd.f32 %v1669, %v1674
    %v1676 = vadd.f32 %v1670, %v1674
    %v1677 = vmul.f32 %v634, 1.442695
    %v1678 = vpow.pop %v1677
    %v1679 = vmul.f32 %v635, 1.442695
    %v1680 = vpow.pop %v1679
    %v1681 = vsub.f32 %v1678, 1.0
    %v1682 = vsub.f32 %v1680, 1.0
    %v1683 = vmax.f32 %v1681, 0.0
    %v1684 = vmax.f32 %v1682, 0.0
    %v1685 = vadd.f32 %v1683, 0.5
    %v1686 = vadd.f32 %v1684, 0.5
    %v1687 = vcvt.f32.s32.to.zero.pseudo %v1685
    %v1688 = vcvt.f32.s32.to.zero.pseudo %v1686
    %v1689 = vcvt.s32.f32 %v1687
    %v1690 = vcvt.s32.f32 %v1688
    %v1691 = vmul.f32 %v1689, %v83
    %v1692 = vmul.f32 %v1690, %v84
    %v1693 = vcvt.f32.s32.to.zero.pseudo %v1691
    %v1694 = vcvt.f32.s32.to.zero.pseudo %v1692
    %vm1695 = vcmask 7168
    %1696 = vst.msk [vmem:[%s13] sm:$0xff] %vm1695, %v1693
    %1697 = vst.msk [vmem:[%s13 + $0x8] sm:$0xff] %vm1695, %v1694
    %v1698 = vld [vmem:[%s9] sm:$0xff]
    %v1699 = vld [vmem:[%s9 + $0x8] sm:$0xff]
    %1701 = vset.pattern.permute.xlu0 0
    %1702 = vperm.xlu0 %1701, %v1691
    %v1703 = vpop.permute.xlu0 %1702
    %1706 = vset.pattern.permute.xlu0 0
    %1707 = vperm.xlu0 %1706, %v1692
    %v1708 = vpop.permute.xlu0 %1707
    %v1710 = vmul.f32 %v1703, %v1698
    %v1711 = vmul.f32 %v1708, %v1699
    %vm1712 = vcmask 130048
    %v1714 = vsel %vm1712, 1.0, 0
    %1716 = vmatprep.subr.mxu0 0.0
    %1717 = vmatpush1.msra.mxu0 0.0
    %1718 = vmatprep.subr.mxu0 0.0
    %1719 = vmatpush1.msra.mxu0 0.0
    %1720 = vmatprep.subr.mxu0 0.0
    %1721 = vmatpush1.msra.mxu0 0.0
    %1722 = vmatprep.subr.mxu0 0.0
    %1723 = vmatpush1.msra.mxu0 0.0
    %1724 = vmatprep.subr.mxu0 0.0
    %1725 = vmatpush1.msra.mxu0 0.0
    %1726 = vmatprep.subr.mxu0 0.0
    %1727 = vmatpush1.msra.mxu0 0.0
    %1728 = vmatprep.subr.mxu0 0.0
    %1729 = vmatpush1.msra.mxu0 0.0
    %1730 = vmatprep.subr.mxu0 0.0
    %1731 = vmatpush1.msra.mxu0 0.0
    %1732 = vmatprep.subr.mxu0 0.0
    %1733 = vmatpush1.msra.mxu0 0.0
    %1734 = vmatprep.subr.mxu0 0.0
    %1735 = vmatpush1.msra.mxu0 0.0
    %1736 = vmatprep.subr.mxu0 0.0
    %1737 = vmatpush1.msra.mxu0 0.0
    %1738 = vmatprep.subr.mxu0 0.0
    %1739 = vmatpush1.msra.mxu0 0.0
    %1740 = vmatprep.subr.mxu0 0.0
    %1741 = vmatpush1.msra.mxu0 0.0
    %1742 = vmatprep.subr.mxu0 0.0
    %1743 = vmatpush1.msra.mxu0 0.0
    %1744 = vmatprep.subr.mxu0 0.0
    %1745 = vmatpush1.msra.mxu0 %v1711
    %1746 = vmatprep.subr.mxu0 0.0
    %1747 = vmatpush1.msra.mxu0 %v1710
    %1748 = vmatprep.subr.mxu0 0.0
    %1749 = vmatpush2.msra.mxu0 0.0
    %1750 = vmatprep.subr.mxu0 0.0
    %1751 = vmatpush2.msra.mxu0 0.0
    %1752 = vmatprep.subr.mxu0 0.0
    %1753 = vmatpush2.msra.mxu0 0.0
    %1754 = vmatprep.subr.mxu0 0.0
    %1755 = vmatpush2.msra.mxu0 0.0
    %1756 = vmatprep.subr.mxu0 0.0
    %1757 = vmatpush2.msra.mxu0 0.0
    %1758 = vmatprep.subr.mxu0 0.0
    %1759 = vmatpush2.msra.mxu0 0.0
    %1760 = vmatprep.subr.mxu0 0.0
    %1761 = vmatpush2.msra.mxu0 0.0
    %1762 = vmatprep.subr.mxu0 0.0
    %1763 = vmatpush2.msra.mxu0 0.0
    %1764 = vmatprep.subr.mxu0 0.0
    %1765 = vmatpush2.msra.mxu0 0.0
    %1766 = vmatprep.subr.mxu0 0.0
    %1767 = vmatpush2.msra.mxu0 0.0
    %1768 = vmatprep.subr.mxu0 0.0
    %1769 = vmatpush2.msra.mxu0 0.0
    %1770 = vmatprep.subr.mxu0 0.0
    %1771 = vmatpush2.msra.mxu0 0.0
    %1772 = vmatprep.subr.mxu0 0.0
    %1773 = vmatpush2.msra.mxu0 0.0
    %1774 = vmatprep.subr.mxu0 0.0
    %1775 = vmatpush2.msra.mxu0 0.0
    %1776 = vmatprep.subr.mxu0 0.0
    %1777 = vmatpush2.msra.mxu0 0.0
    %1778 = vmatprep.subr.mxu0 0.0
    %1779 = vmatpush2.msra.mxu0 0.0
    %1780 = vmatprep.mubr.f32.mxu0 0.0
    %1781 = vmatmul.mubr.f32.gmra.mxu0 %v1714
    %v1782 = vpop.f32.mrf.mxu0
    %v1783 = vadd.f32 0.0, %v1782
    %v1784 = vpop.f32.mrf.mxu0
    %1785 = vmatprep.mubr.f32.mxu0 0.0
    %1786 = vmatmul.mubr.f32.gmra.mxu0 %v1714
    %v1787 = vpop.f32.mrf.mxu0
    %v1788 = vadd.f32 0.0, %v1787
    %v1789 = vpop.f32.mrf.mxu0
    %1790 = vmatprep.mubr.f32.mxu0 0.0
    %1791 = vmatmul.mubr.f32.gmra.mxu0 %v1714
    %v1792 = vpop.f32.mrf.mxu0
    %v1793 = vadd.f32 0.0, %v1792
    %v1794 = vpop.f32.mrf.mxu0
    %1795 = vmatprep.mubr.f32.mxu0 0.0
    %1796 = vmatmul.mubr.f32.gmra.mxu0 %v1714
    %v1797 = vpop.f32.mrf.mxu0
    %v1798 = vadd.f32 0.0, %v1797
    %v1799 = vpop.f32.mrf.mxu0
    %1800 = vmatprep.mubr.f32.mxu0 0.0
    %1801 = vmatmul.mubr.f32.gmra.mxu0 %v1714
    %v1802 = vpop.f32.mrf.mxu0
    %v1803 = vadd.f32 0.0, %v1802
    %v1804 = vpop.f32.mrf.mxu0
    %1805 = vmatprep.mubr.f32.mxu0 0.0
    %1806 = vmatmul.mubr.f32.gmra.mxu0 %v1714
    %v1807 = vpop.f32.mrf.mxu0
    %v1808 = vadd.f32 0.0, %v1807
    %v1809 = vpop.f32.mrf.mxu0
    %1810 = vmatprep.mubr.f32.mxu0 0.0
    %1811 = vmatmul.mubr.f32.gmra.mxu0 %v1714
    %v1812 = vpop.f32.mrf.mxu0
    %v1813 = vadd.f32 0.0, %v1812
    %v1814 = vpop.f32.mrf.mxu0
    %1815 = vmatprep.mubr.f32.mxu0 0.0
    %1816 = vmatmul.mubr.f32.gmra.mxu0 %v1714
    %v1817 = vpop.f32.mrf.mxu0
    %v1818 = vadd.f32 0.0, %v1817
    %v1819 = vpop.f32.mrf.mxu0
    %1820 = vmatprep.mubr.f32.mxu0 0.0
    %1821 = vmatmul.mubr.f32.gmra.mxu0 %v1714
    %v1822 = vpop.f32.mrf.mxu0
    %v1823 = vadd.f32 0.0, %v1822
    %v1824 = vpop.f32.mrf.mxu0
    %1825 = vmatprep.mubr.f32.mxu0 0.0
    %1826 = vmatmul.mubr.f32.gmra.mxu0 %v1714
    %v1827 = vpop.f32.mrf.mxu0
    %v1828 = vadd.f32 0.0, %v1827
    %v1829 = vpop.f32.mrf.mxu0
    %1830 = vmatprep.mubr.f32.mxu0 0.0
    %1831 = vmatmul.mubr.f32.gmra.mxu0 %v1714
    %v1832 = vpop.f32.mrf.mxu0
    %v1833 = vadd.f32 0.0, %v1832
    %v1834 = vpop.f32.mrf.mxu0
    %1835 = vmatprep.mubr.f32.mxu0 0.0
    %1836 = vmatmul.mubr.f32.gmra.mxu0 %v1714
    %v1837 = vpop.f32.mrf.mxu0
    %v1838 = vadd.f32 0.0, %v1837
    %v1839 = vpop.f32.mrf.mxu0
    %1840 = vmatprep.mubr.f32.mxu0 0.0
    %1841 = vmatmul.mubr.f32.gmra.mxu0 %v1714
    %v1842 = vpop.f32.mrf.mxu0
    %v1843 = vadd.f32 0.0, %v1842
    %v1844 = vpop.f32.mrf.mxu0
    %1845 = vmatprep.mubr.f32.mxu0 0.0
    %1846 = vmatmul.mubr.f32.gmra.mxu0 %v1714
    %v1847 = vpop.f32.mrf.mxu0
    %v1848 = vadd.f32 0.0, %v1847
    %v1849 = vpop.f32.mrf.mxu0
    %1850 = vmatprep.mubr.f32.mxu0 0.0
    %1851 = vmatmul.mubr.f32.gmra.mxu0 %v1714
    %v1852 = vpop.f32.mrf.mxu0
    %v1853 = vadd.f32 0.0, %v1852
    %v1854 = vpop.f32.mrf.mxu0
    %1855 = vmatprep.mubr.f32.mxu0 0.0
    %1856 = vmatmul.mubr.f32.gmra.mxu0 %v1714
    %v1857 = vpop.f32.mrf.mxu0
    %v1858 = vadd.f32 0.0, %v1857
    %v1859 = vpop.f32.mrf.mxu0
    %1860 = vdwg.mxu0
    %s1861 = scalar_lea.vmem %s9, 16
    %v1862 = vld [vmem:[%s1861] sm:$0xff]
    %v1863 = vld [vmem:[%s1861 + $0x8] sm:$0xff]
    %v1864 = vmul.f32 %v1703, %v1862
    %v1865 = vmul.f32 %v1708, %v1863
    %1866 = vmatprep.subr.mxu0 0.0
    %1867 = vmatpush1.msra.mxu0 0.0
    %1868 = vmatprep.subr.mxu0 0.0
    %1869 = vmatpush1.msra.mxu0 0.0
    %1870 = vmatprep.subr.mxu0 0.0
    %1871 = vmatpush1.msra.mxu0 0.0
    %1872 = vmatprep.subr.mxu0 0.0
    %1873 = vmatpush1.msra.mxu0 0.0
    %1874 = vmatprep.subr.mxu0 0.0
    %1875 = vmatpush1.msra.mxu0 0.0
    %1876 = vmatprep.subr.mxu0 0.0
    %1877 = vmatpush1.msra.mxu0 0.0
    %1878 = vmatprep.subr.mxu0 0.0
    %1879 = vmatpush1.msra.mxu0 0.0
    %1880 = vmatprep.subr.mxu0 0.0
    %1881 = vmatpush1.msra.mxu0 0.0
    %1882 = vmatprep.subr.mxu0 0.0
    %1883 = vmatpush1.msra.mxu0 0.0
    %1884 = vmatprep.subr.mxu0 0.0
    %1885 = vmatpush1.msra.mxu0 0.0
    %1886 = vmatprep.subr.mxu0 0.0
    %1887 = vmatpush1.msra.mxu0 0.0
    %1888 = vmatprep.subr.mxu0 0.0
    %1889 = vmatpush1.msra.mxu0 0.0
    %1890 = vmatprep.subr.mxu0 0.0
    %1891 = vmatpush1.msra.mxu0 0.0
    %1892 = vmatprep.subr.mxu0 0.0
    %1893 = vmatpush1.msra.mxu0 0.0
    %1894 = vmatprep.subr.mxu0 0.0
    %1895 = vmatpush1.msra.mxu0 %v1865
    %1896 = vmatprep.subr.mxu0 0.0
    %1897 = vmatpush1.msra.mxu0 %v1864
    %1898 = vmatprep.subr.mxu0 0.0
    %1899 = vmatpush2.msra.mxu0 0.0
    %1900 = vmatprep.subr.mxu0 0.0
    %1901 = vmatpush2.msra.mxu0 0.0
    %1902 = vmatprep.subr.mxu0 0.0
    %1903 = vmatpush2.msra.mxu0 0.0
    %1904 = vmatprep.subr.mxu0 0.0
    %1905 = vmatpush2.msra.mxu0 0.0
    %1906 = vmatprep.subr.mxu0 0.0
    %1907 = vmatpush2.msra.mxu0 0.0
    %1908 = vmatprep.subr.mxu0 0.0
    %1909 = vmatpush2.msra.mxu0 0.0
    %1910 = vmatprep.subr.mxu0 0.0
    %1911 = vmatpush2.msra.mxu0 0.0
    %1912 = vmatprep.subr.mxu0 0.0
    %1913 = vmatpush2.msra.mxu0 0.0
    %1914 = vmatprep.subr.mxu0 0.0
    %1915 = vmatpush2.msra.mxu0 0.0
    %1916 = vmatprep.subr.mxu0 0.0
    %1917 = vmatpush2.msra.mxu0 0.0
    %1918 = vmatprep.subr.mxu0 0.0
    %1919 = vmatpush2.msra.mxu0 0.0
    %1920 = vmatprep.subr.mxu0 0.0
    %1921 = vmatpush2.msra.mxu0 0.0
    %1922 = vmatprep.subr.mxu0 0.0
    %1923 = vmatpush2.msra.mxu0 0.0
    %1924 = vmatprep.subr.mxu0 0.0
    %1925 = vmatpush2.msra.mxu0 0.0
    %1926 = vmatprep.subr.mxu0 0.0
    %1927 = vmatpush2.msra.mxu0 0.0
    %1928 = vmatprep.subr.mxu0 0.0
    %1929 = vmatpush2.msra.mxu0 0.0
    %1930 = vmatprep.mubr.f32.mxu0 0.0
    %1931 = vmatmul.mubr.f32.gmra.mxu0 %v1714
    %v1932 = vpop.f32.mrf.mxu0
    %v1933 = vadd.f32 0.0, %v1932
    %v1934 = vpop.f32.mrf.mxu0
    %1935 = vmatprep.mubr.f32.mxu0 0.0
    %1936 = vmatmul.mubr.f32.gmra.mxu0 %v1714
    %v1937 = vpop.f32.mrf.mxu0
    %v1938 = vadd.f32 0.0, %v1937
    %v1939 = vpop.f32.mrf.mxu0
    %1940 = vmatprep.mubr.f32.mxu0 0.0
    %1941 = vmatmul.mubr.f32.gmra.mxu0 %v1714
    %v1942 = vpop.f32.mrf.mxu0
    %v1943 = vadd.f32 0.0, %v1942
    %v1944 = vpop.f32.mrf.mxu0
    %1945 = vmatprep.mubr.f32.mxu0 0.0
    %1946 = vmatmul.mubr.f32.gmra.mxu0 %v1714
    %v1947 = vpop.f32.mrf.mxu0
    %v1948 = vadd.f32 0.0, %v1947
    %v1949 = vpop.f32.mrf.mxu0
    %1950 = vmatprep.mubr.f32.mxu0 0.0
    %1951 = vmatmul.mubr.f32.gmra.mxu0 %v1714
    %v1952 = vpop.f32.mrf.mxu0
    %v1953 = vadd.f32 0.0, %v1952
    %v1954 = vpop.f32.mrf.mxu0
    %1955 = vmatprep.mubr.f32.mxu0 0.0
    %1956 = vmatmul.mubr.f32.gmra.mxu0 %v1714
    %v1957 = vpop.f32.mrf.mxu0
    %v1958 = vadd.f32 0.0, %v1957
    %v1959 = vpop.f32.mrf.mxu0
    %1960 = vmatprep.mubr.f32.mxu0 0.0
    %1961 = vmatmul.mubr.f32.gmra.mxu0 %v1714
    %v1962 = vpop.f32.mrf.mxu0
    %v1963 = vadd.f32 0.0, %v1962
    %v1964 = vpop.f32.mrf.mxu0
    %1965 = vmatprep.mubr.f32.mxu0 0.0
    %1966 = vmatmul.mubr.f32.gmra.mxu0 %v1714
    %v1967 = vpop.f32.mrf.mxu0
    %v1968 = vadd.f32 0.0, %v1967
    %v1969 = vpop.f32.mrf.mxu0
    %1970 = vmatprep.mubr.f32.mxu0 0.0
    %1971 = vmatmul.mubr.f32.gmra.mxu0 %v1714
    %v1972 = vpop.f32.mrf.mxu0
    %v1973 = vadd.f32 0.0, %v1972
    %v1974 = vpop.f32.mrf.mxu0
    %1975 = vmatprep.mubr.f32.mxu0 0.0
    %1976 = vmatmul.mubr.f32.gmra.mxu0 %v1714
    %v1977 = vpop.f32.mrf.mxu0
    %v1978 = vadd.f32 0.0, %v1977
    %v1979 = vpop.f32.mrf.mxu0
    %1980 = vmatprep.mubr.f32.mxu0 0.0
    %1981 = vmatmul.mubr.f32.gmra.mxu0 %v1714
    %v1982 = vpop.f32.mrf.mxu0
    %v1983 = vadd.f32 0.0, %v1982
    %v1984 = vpop.f32.mrf.mxu0
    %1985 = vmatprep.mubr.f32.mxu0 0.0
    %1986 = vmatmul.mubr.f32.gmra.mxu0 %v1714
    %v1987 = vpop.f32.mrf.mxu0
    %v1988 = vadd.f32 0.0, %v1987
    %v1989 = vpop.f32.mrf.mxu0
    %1990 = vmatprep.mubr.f32.mxu0 0.0
    %1991 = vmatmul.mubr.f32.gmra.mxu0 %v1714
    %v1992 = vpop.f32.mrf.mxu0
    %v1993 = vadd.f32 0.0, %v1992
    %v1994 = vpop.f32.mrf.mxu0
    %1995 = vmatprep.mubr.f32.mxu0 0.0
    %1996 = vmatmul.mubr.f32.gmra.mxu0 %v1714
    %v1997 = vpop.f32.mrf.mxu0
    %v1998 = vadd.f32 0.0, %v1997
    %v1999 = vpop.f32.mrf.mxu0
    %2000 = vmatprep.mubr.f32.mxu0 0.0
    %2001 = vmatmul.mubr.f32.gmra.mxu0 %v1714
    %v2002 = vpop.f32.mrf.mxu0
    %v2003 = vadd.f32 0.0, %v2002
    %v2004 = vpop.f32.mrf.mxu0
    %2005 = vmatprep.mubr.f32.mxu0 0.0
    %2006 = vmatmul.mubr.f32.gmra.mxu0 %v1714
    %v2007 = vpop.f32.mrf.mxu0
    %v2008 = vadd.f32 0.0, %v2007
    %v2009 = vpop.f32.mrf.mxu0
    %2010 = vdwg.mxu0
    %v2011 = vld [vmem:[%s10] sm:$0xff]
    %v2012 = vld [vmem:[%s10 + $0x8] sm:$0xff]
    %v2013 = vld [vmem:[%s10 + $0x10] sm:$0xff]
    %v2014 = vld [vmem:[%s10 + $0x18] sm:$0xff]
    %v2015 = vld [vmem:[%s10 + $0x20] sm:$0xff]
    %v2016 = vld [vmem:[%s10 + $0x28] sm:$0xff]
    %v2017 = vld [vmem:[%s10 + $0x30] sm:$0xff]
    %v2018 = vld [vmem:[%s10 + $0x38] sm:$0xff]
    %v2019 = vld [vmem:[%s10 + $0x40] sm:$0xff]
    %v2020 = vld [vmem:[%s10 + $0x48] sm:$0xff]
    %v2021 = vld [vmem:[%s10 + $0x50] sm:$0xff]
    %v2022 = vld [vmem:[%s10 + $0x58] sm:$0xff]
    %v2023 = vld [vmem:[%s10 + $0x60] sm:$0xff]
    %v2024 = vld [vmem:[%s10 + $0x68] sm:$0xff]
    %v2025 = vld [vmem:[%s10 + $0x70] sm:$0xff]
    %v2026 = vld [vmem:[%s10 + $0x78] sm:$0xff]
    %vm2027 = vcmp.ge.f32.partialorder %v2011, %v1933
    %vm2028 = vcmp.ge.f32.partialorder %v2012, %v1938
    %vm2029 = vcmp.ge.f32.partialorder %v2013, %v1943
    %vm2030 = vcmp.ge.f32.partialorder %v2014, %v1948
    %vm2031 = vcmp.ge.f32.partialorder %v2015, %v1953
    %vm2032 = vcmp.ge.f32.partialorder %v2016, %v1958
    %vm2033 = vcmp.ge.f32.partialorder %v2017, %v1963
    %vm2034 = vcmp.ge.f32.partialorder %v2018, %v1968
    %vm2035 = vcmp.ge.f32.partialorder %v2019, %v1973
    %vm2036 = vcmp.ge.f32.partialorder %v2020, %v1978
    %vm2037 = vcmp.ge.f32.partialorder %v2021, %v1983
    %vm2038 = vcmp.ge.f32.partialorder %v2022, %v1988
    %vm2039 = vcmp.ge.f32.partialorder %v2023, %v1993
    %vm2040 = vcmp.ge.f32.partialorder %v2024, %v1998
    %vm2041 = vcmp.ge.f32.partialorder %v2025, %v2003
    %vm2042 = vcmp.ge.f32.partialorder %v2026, %v2008
    %vm2043 = vcmp.lt.f32.partialorder %v2011, %v1783
    %vm2044 = vcmp.lt.f32.partialorder %v2012, %v1788
    %vm2045 = vcmp.lt.f32.partialorder %v2013, %v1793
    %vm2046 = vcmp.lt.f32.partialorder %v2014, %v1798
    %vm2047 = vcmp.lt.f32.partialorder %v2015, %v1803
    %vm2048 = vcmp.lt.f32.partialorder %v2016, %v1808
    %vm2049 = vcmp.lt.f32.partialorder %v2017, %v1813
    %vm2050 = vcmp.lt.f32.partialorder %v2018, %v1818
    %vm2051 = vcmp.lt.f32.partialorder %v2019, %v1823
    %vm2052 = vcmp.lt.f32.partialorder %v2020, %v1828
    %vm2053 = vcmp.lt.f32.partialorder %v2021, %v1833
    %vm2054 = vcmp.lt.f32.partialorder %v2022, %v1838
    %vm2055 = vcmp.lt.f32.partialorder %v2023, %v1843
    %vm2056 = vcmp.lt.f32.partialorder %v2024, %v1848
    %vm2057 = vcmp.lt.f32.partialorder %v2025, %v1853
    %vm2058 = vcmp.lt.f32.partialorder %v2026, %v1858
    %vm2059 = vmand %vm2027, %vm2043
    %vm2060 = vmand %vm2028, %vm2044
    %vm2061 = vmand %vm2029, %vm2045
    %vm2062 = vmand %vm2030, %vm2046
    %vm2063 = vmand %vm2031, %vm2047
    %vm2064 = vmand %vm2032, %vm2048
    %vm2065 = vmand %vm2033, %vm2049
    %vm2066 = vmand %vm2034, %vm2050
    %vm2067 = vmand %vm2035, %vm2051
    %vm2068 = vmand %vm2036, %vm2052
    %vm2069 = vmand %vm2037, %vm2053
    %vm2070 = vmand %vm2038, %vm2054
    %vm2071 = vmand %vm2039, %vm2055
    %vm2072 = vmand %vm2040, %vm2056
    %vm2073 = vmand %vm2041, %vm2057
    %vm2074 = vmand %vm2042, %vm2058
    %v2075 = vsel %vm2059, 1, 0
    %v2076 = vsel %vm2060, 1, 0
    %v2077 = vsel %vm2061, 1, 0
    %v2078 = vsel %vm2062, 1, 0
    %v2079 = vsel %vm2063, 1, 0
    %v2080 = vsel %vm2064, 1, 0
    %v2081 = vsel %vm2065, 1, 0
    %v2082 = vsel %vm2066, 1, 0
    %v2083 = vsel %vm2067, 1, 0
    %v2084 = vsel %vm2068, 1, 0
    %v2085 = vsel %vm2069, 1, 0
    %v2086 = vsel %vm2070, 1, 0
    %v2087 = vsel %vm2071, 1, 0
    %v2088 = vsel %vm2072, 1, 0
    %v2089 = vsel %vm2073, 1, 0
    %v2090 = vsel %vm2074, 1, 0
    %v2091 = vcvt.s32.f32 %v2075
    %v2092 = vcvt.s32.f32 %v2076
    %v2093 = vcvt.s32.f32 %v2077
    %v2094 = vcvt.s32.f32 %v2078
    %v2095 = vcvt.s32.f32 %v2079
    %v2096 = vcvt.s32.f32 %v2080
    %v2097 = vcvt.s32.f32 %v2081
    %v2098 = vcvt.s32.f32 %v2082
    %v2099 = vcvt.s32.f32 %v2083
    %v2100 = vcvt.s32.f32 %v2084
    %v2101 = vcvt.s32.f32 %v2085
    %v2102 = vcvt.s32.f32 %v2086
    %v2103 = vcvt.s32.f32 %v2087
    %v2104 = vcvt.s32.f32 %v2088
    %v2105 = vcvt.s32.f32 %v2089
    %v2106 = vcvt.s32.f32 %v2090
    %s2107 = sld [smem:[#allocation2]]
    %v2108 = vld [vmem:[%s2] sm:$0xff]
    %v2109 = vld [vmem:[%s2 + $0x8] sm:$0xff]
    %v2110 = vld [vmem:[%s2 + $0x10] sm:$0xff]
    %v2111 = vld [vmem:[%s2 + $0x18] sm:$0xff]
    %v2112 = vld [vmem:[%s2 + $0x20] sm:$0xff]
    %v2113 = vld [vmem:[%s2 + $0x28] sm:$0xff]
    %v2114 = vld [vmem:[%s2 + $0x30] sm:$0xff]
    %v2115 = vld [vmem:[%s2 + $0x38] sm:$0xff]
    %v2116 = vld [vmem:[%s2 + $0x40] sm:$0xff]
    %v2117 = vld [vmem:[%s2 + $0x48] sm:$0xff]
    %v2118 = vld [vmem:[%s2 + $0x50] sm:$0xff]
    %v2119 = vld [vmem:[%s2 + $0x58] sm:$0xff]
    %v2120 = vld [vmem:[%s2 + $0x60] sm:$0xff]
    %v2121 = vld [vmem:[%s2 + $0x68] sm:$0xff]
    %v2122 = vld [vmem:[%s2 + $0x70] sm:$0xff]
    %v2123 = vld [vmem:[%s2 + $0x78] sm:$0xff]
    %v2124 = vstv %s2107
    %v2125 = vmul.f32 %v2124, %v2108
    %v2126 = vmul.f32 %v2124, %v2109
    %v2127 = vmul.f32 %v2124, %v2110
    %v2128 = vmul.f32 %v2124, %v2111
    %v2129 = vmul.f32 %v2124, %v2112
    %v2130 = vmul.f32 %v2124, %v2113
    %v2131 = vmul.f32 %v2124, %v2114
    %v2132 = vmul.f32 %v2124, %v2115
    %v2133 = vmul.f32 %v2124, %v2116
    %v2134 = vmul.f32 %v2124, %v2117
    %v2135 = vmul.f32 %v2124, %v2118
    %v2136 = vmul.f32 %v2124, %v2119
    %v2137 = vmul.f32 %v2124, %v2120
    %v2138 = vmul.f32 %v2124, %v2121
    %v2139 = vmul.f32 %v2124, %v2122
    %v2140 = vmul.f32 %v2124, %v2123
    %v2142 = vsel %vm1712, %v2091, 0
    %v2145 = vsel %vm1712, %v2092, 0
    %v2148 = vsel %vm1712, %v2093, 0
    %v2151 = vsel %vm1712, %v2094, 0
    %v2154 = vsel %vm1712, %v2095, 0
    %v2157 = vsel %vm1712, %v2096, 0
    %v2160 = vsel %vm1712, %v2097, 0
    %v2163 = vsel %vm1712, %v2098, 0
    %v2166 = vsel %vm1712, %v2099, 0
    %v2169 = vsel %vm1712, %v2100, 0
    %v2172 = vsel %vm1712, %v2101, 0
    %v2175 = vsel %vm1712, %v2102, 0
    %v2178 = vsel %vm1712, %v2103, 0
    %v2181 = vsel %vm1712, %v2104, 0
    %v2184 = vsel %vm1712, %v2105, 0
    %v2187 = vsel %vm1712, %v2106, 0
    %2189 = vmatprep.subr.mxu0 0.0
    %2190 = vmatpush1.msra.mxu0 0.0
    %2191 = vmatprep.subr.mxu0 0.0
    %2192 = vmatpush1.msra.mxu0 0.0
    %2193 = vmatprep.subr.mxu0 0.0
    %2194 = vmatpush1.msra.mxu0 0.0
    %2195 = vmatprep.subr.mxu0 0.0
    %2196 = vmatpush1.msra.mxu0 0.0
    %2197 = vmatprep.subr.mxu0 0.0
    %2198 = vmatpush1.msra.mxu0 0.0
    %2199 = vmatprep.subr.mxu0 0.0
    %2200 = vmatpush1.msra.mxu0 0.0
    %2201 = vmatprep.subr.mxu0 0.0
    %2202 = vmatpush1.msra.mxu0 0.0
    %2203 = vmatprep.subr.mxu0 0.0
    %2204 = vmatpush1.msra.mxu0 0.0
    %2205 = vmatprep.subr.mxu0 0.0
    %2206 = vmatpush1.msra.mxu0 0.0
    %2207 = vmatprep.subr.mxu0 0.0
    %2208 = vmatpush1.msra.mxu0 0.0
    %2209 = vmatprep.subr.mxu0 0.0
    %2210 = vmatpush1.msra.mxu0 0.0
    %2211 = vmatprep.subr.mxu0 0.0
    %2212 = vmatpush1.msra.mxu0 0.0
    %2213 = vmatprep.subr.mxu0 0.0
    %2214 = vmatpush1.msra.mxu0 0.0
    %2215 = vmatprep.subr.mxu0 0.0
    %2216 = vmatpush1.msra.mxu0 0.0
    %2217 = vmatprep.subr.mxu0 0.0
    %2218 = vmatpush1.msra.mxu0 %v1676
    %2219 = vmatprep.subr.mxu0 0.0
    %2220 = vmatpush1.msra.mxu0 %v1675
    %2221 = vmatprep.subr.mxu0 0.0
    %2222 = vmatpush2.msra.mxu0 0.0
    %2223 = vmatprep.subr.mxu0 0.0
    %2224 = vmatpush2.msra.mxu0 0.0
    %2225 = vmatprep.subr.mxu0 0.0
    %2226 = vmatpush2.msra.mxu0 0.0
    %2227 = vmatprep.subr.mxu0 0.0
    %2228 = vmatpush2.msra.mxu0 0.0
    %2229 = vmatprep.subr.mxu0 0.0
    %2230 = vmatpush2.msra.mxu0 0.0
    %2231 = vmatprep.subr.mxu0 0.0
    %2232 = vmatpush2.msra.mxu0 0.0
    %2233 = vmatprep.subr.mxu0 0.0
    %2234 = vmatpush2.msra.mxu0 0.0
    %2235 = vmatprep.subr.mxu0 0.0
    %2236 = vmatpush2.msra.mxu0 0.0
    %2237 = vmatprep.subr.mxu0 0.0
    %2238 = vmatpush2.msra.mxu0 0.0
    %2239 = vmatprep.subr.mxu0 0.0
    %2240 = vmatpush2.msra.mxu0 0.0
    %2241 = vmatprep.subr.mxu0 0.0
    %2242 = vmatpush2.msra.mxu0 0.0
    %2243 = vmatprep.subr.mxu0 0.0
    %2244 = vmatpush2.msra.mxu0 0.0
    %2245 = vmatprep.subr.mxu0 0.0
    %2246 = vmatpush2.msra.mxu0 0.0
    %2247 = vmatprep.subr.mxu0 0.0
    %2248 = vmatpush2.msra.mxu0 0.0
    %2249 = vmatprep.subr.mxu0 0.0
    %2250 = vmatpush2.msra.mxu0 0.0
    %2251 = vmatprep.subr.mxu0 0.0
    %2252 = vmatpush2.msra.mxu0 0.0
    %2253 = vmatprep.mubr.f32.mxu0 0.0
    %2254 = vmatmul.mubr.f32.gmra.mxu0 %v2142
    %v2255 = vpop.f32.mrf.mxu0
    %v2256 = vadd.f32 %v2125, %v2255
    %v2257 = vpop.f32.mrf.mxu0
    %2258 = vmatprep.mubr.f32.mxu0 0.0
    %2259 = vmatmul.mubr.f32.gmra.mxu0 %v2145
    %v2260 = vpop.f32.mrf.mxu0
    %v2261 = vadd.f32 %v2126, %v2260
    %v2262 = vpop.f32.mrf.mxu0
    %2263 = vmatprep.mubr.f32.mxu0 0.0
    %2264 = vmatmul.mubr.f32.gmra.mxu0 %v2148
    %v2265 = vpop.f32.mrf.mxu0
    %v2266 = vadd.f32 %v2127, %v2265
    %v2267 = vpop.f32.mrf.mxu0
    %2268 = vmatprep.mubr.f32.mxu0 0.0
    %2269 = vmatmul.mubr.f32.gmra.mxu0 %v2151
    %v2270 = vpop.f32.mrf.mxu0
    %v2271 = vadd.f32 %v2128, %v2270
    %v2272 = vpop.f32.mrf.mxu0
    %2273 = vmatprep.mubr.f32.mxu0 0.0
    %2274 = vmatmul.mubr.f32.gmra.mxu0 %v2154
    %v2275 = vpop.f32.mrf.mxu0
    %v2276 = vadd.f32 %v2129, %v2275
    %v2277 = vpop.f32.mrf.mxu0
    %2278 = vmatprep.mubr.f32.mxu0 0.0
    %2279 = vmatmul.mubr.f32.gmra.mxu0 %v2157
    %v2280 = vpop.f32.mrf.mxu0
    %v2281 = vadd.f32 %v2130, %v2280
    %v2282 = vpop.f32.mrf.mxu0
    %2283 = vmatprep.mubr.f32.mxu0 0.0
    %2284 = vmatmul.mubr.f32.gmra.mxu0 %v2160
    %v2285 = vpop.f32.mrf.mxu0
    %v2286 = vadd.f32 %v2131, %v2285
    %v2287 = vpop.f32.mrf.mxu0
    %2288 = vmatprep.mubr.f32.mxu0 0.0
    %2289 = vmatmul.mubr.f32.gmra.mxu0 %v2163
    %v2290 = vpop.f32.mrf.mxu0
    %v2291 = vadd.f32 %v2132, %v2290
    %v2292 = vpop.f32.mrf.mxu0
    %2293 = vmatprep.mubr.f32.mxu0 0.0
    %2294 = vmatmul.mubr.f32.gmra.mxu0 %v2166
    %v2295 = vpop.f32.mrf.mxu0
    %v2296 = vadd.f32 %v2133, %v2295
    %v2297 = vpop.f32.mrf.mxu0
    %2298 = vmatprep.mubr.f32.mxu0 0.0
    %2299 = vmatmul.mubr.f32.gmra.mxu0 %v2169
    %v2300 = vpop.f32.mrf.mxu0
    %v2301 = vadd.f32 %v2134, %v2300
    %v2302 = vpop.f32.mrf.mxu0
    %2303 = vmatprep.mubr.f32.mxu0 0.0
    %2304 = vmatmul.mubr.f32.gmra.mxu0 %v2172
    %v2305 = vpop.f32.mrf.mxu0
    %v2306 = vadd.f32 %v2135, %v2305
    %v2307 = vpop.f32.mrf.mxu0
    %2308 = vmatprep.mubr.f32.mxu0 0.0
    %2309 = vmatmul.mubr.f32.gmra.mxu0 %v2175
    %v2310 = vpop.f32.mrf.mxu0
    %v2311 = vadd.f32 %v2136, %v2310
    %v2312 = vpop.f32.mrf.mxu0
    %2313 = vmatprep.mubr.f32.mxu0 0.0
    %2314 = vmatmul.mubr.f32.gmra.mxu0 %v2178
    %v2315 = vpop.f32.mrf.mxu0
    %v2316 = vadd.f32 %v2137, %v2315
    %v2317 = vpop.f32.mrf.mxu0
    %2318 = vmatprep.mubr.f32.mxu0 0.0
    %2319 = vmatmul.mubr.f32.gmra.mxu0 %v2181
    %v2320 = vpop.f32.mrf.mxu0
    %v2321 = vadd.f32 %v2138, %v2320
    %v2322 = vpop.f32.mrf.mxu0
    %2323 = vmatprep.mubr.f32.mxu0 0.0
    %2324 = vmatmul.mubr.f32.gmra.mxu0 %v2184
    %v2325 = vpop.f32.mrf.mxu0
    %v2326 = vadd.f32 %v2139, %v2325
    %v2327 = vpop.f32.mrf.mxu0
    %2328 = vmatprep.mubr.f32.mxu0 0.0
    %2329 = vmatmul.mubr.f32.gmra.mxu0 %v2187
    %v2330 = vpop.f32.mrf.mxu0
    %v2331 = vadd.f32 %v2140, %v2330
    %v2332 = vpop.f32.mrf.mxu0
    %2333 = vdwg.mxu0
    %2334 = vst.msk [vmem:[%s12] sm:$0xff] %vm133, %v2256
    %2335 = vst.msk [vmem:[%s12 + $0x8] sm:$0xff] %vm133, %v2261
    %2336 = vst.msk [vmem:[%s12 + $0x10] sm:$0xff] %vm133, %v2266
    %2337 = vst.msk [vmem:[%s12 + $0x18] sm:$0xff] %vm133, %v2271
    %2338 = vst.msk [vmem:[%s12 + $0x20] sm:$0xff] %vm133, %v2276
    %2339 = vst.msk [vmem:[%s12 + $0x28] sm:$0xff] %vm133, %v2281
    %2340 = vst.msk [vmem:[%s12 + $0x30] sm:$0xff] %vm133, %v2286
    %2341 = vst.msk [vmem:[%s12 + $0x38] sm:$0xff] %vm133, %v2291
    %2342 = vst.msk [vmem:[%s12 + $0x40] sm:$0xff] %vm133, %v2296
    %2343 = vst.msk [vmem:[%s12 + $0x48] sm:$0xff] %vm133, %v2301
    %2344 = vst.msk [vmem:[%s12 + $0x50] sm:$0xff] %vm133, %v2306
    %2345 = vst.msk [vmem:[%s12 + $0x58] sm:$0xff] %vm133, %v2311
    %2346 = vst.msk [vmem:[%s12 + $0x60] sm:$0xff] %vm133, %v2316
    %2347 = vst.msk [vmem:[%s12 + $0x68] sm:$0xff] %vm133, %v2321
    %2348 = vst.msk [vmem:[%s12 + $0x70] sm:$0xff] %vm133, %v2326
    %2349 = vst.msk [vmem:[%s12 + $0x78] sm:$0xff] %vm133, %v2331
    // Predicated region
    $region54: #{pretssel_decoder_frontend.1} parent=1 // pred_check
      _
    $region55: #{pretssel_decoder_frontend.1} parent=1 // pred_check_branch
      %2351 = sbr.rel (0) target = $region57
    $region56: #{pretssel_decoder_frontend.1} parent=1 // pred_region
      _
    $region57: #{pretssel_decoder_frontend.1} parent=1 // pred_fallthru
      _
    // Predicated region
    $region58: #{pretssel_decoder_frontend.1} parent=1 // pred_check
      _
    $region59: #{pretssel_decoder_frontend.1} parent=1 // pred_check_branch
      %2353 = sbr.rel (0) target = $region61
    $region60: #{pretssel_decoder_frontend.1} parent=1 // pred_region
      _
    $region61: #{pretssel_decoder_frontend.1} parent=1 // pred_fallthru
      _
    // Predicated region
    $region62: #{pretssel_decoder_frontend.1} parent=1 // pred_check
      _
    $region63: #{pretssel_decoder_frontend.1} parent=1 // pred_check_branch
      %2355 = sbr.rel (0) target = $region65
    $region64: #{pretssel_decoder_frontend.1} parent=1 // pred_region
      _
    $region65: #{pretssel_decoder_frontend.1} parent=1 // pred_fallthru
      _
    // Predicated region
    $region66: #{pretssel_decoder_frontend.1} parent=1 // pred_check
      _
    $region67: #{pretssel_decoder_frontend.1} parent=1 // pred_check_branch
      %2357 = sbr.rel (0) target = $region69
    $region68: #{pretssel_decoder_frontend.1} parent=1 // pred_region
      _
    $region69: #{pretssel_decoder_frontend.1} parent=1 // pred_fallthru
      _
    %2358 = vsyncpa [#allocation3], 1

</llo_original>
